<compile_context>
chip_gen: v6e
topology: v6e:2x2x1
jax: 0.10.0
libtpu: 0.0.40
codegen_flags: <defaults>
</compile_context>

<pallas_src>
import functools

import numpy as np
import jax
import jax.numpy as jnp
from jax.experimental import pallas as pl
from jax.experimental.pallas import tpu as pltpu

# ----- sizes implied by IDLoss.extract_feats -----
CROP_H0, CROP_H1 = 35, 223      # -> 188 rows
CROP_W0, CROP_W1 = 32, 220      # -> 188 cols
RESIZE = 256                    # F.interpolate target when H > 256
POOL_OUT = 112                  # AdaptiveAvgPool2d((112, 112))
POOL_PAD = 128                  # lane-padded pooled width (extra cols are zero)
HIDDEN = 128
EMBED = 512                     # IR-SE50 embedding dim


# ---------------------------------------------------------------------------
# Host-side constant construction
# ---------------------------------------------------------------------------
def _pool_matrix(in_full, crop_start, crop_stop, out_size):
    """Row-stochastic matrix: crop [crop_start:crop_stop] of a length-`in_full`
    axis, then torch AdaptiveAvgPool1d(out_size) bin boundaries."""
    crop = crop_stop - crop_start
    P = np.zeros((out_size, in_full), dtype=np.float32)
    for i in range(out_size):
        s = (i * crop) // out_size
        e = -((-(i + 1) * crop) // out_size)          # ceil((i+1)*crop/out)
        P[i, crop_start + s:crop_start + e] = 1.0 / (e - s)
    return P


def _build_pool_operators(H, W):
    """Per-axis linear operators for (optional area-resize) -> crop -> pool."""
    if H > 256:
        # F.interpolate(size=(256,256), mode='area') == adaptive_avg_pool2d((256,256)),
        # so the whole chain is linear per axis; compose it into one (112, dim) matrix.
        # TODO(synk): very large inputs (e.g. 1024x1024) may need a raised
        # vmem_limit_bytes or row-tiled image streaming; not needed for <=256 inputs.
        rh = _pool_matrix(H, 0, H, RESIZE)                               # (256, H)
        rw = _pool_matrix(W, 0, W, RESIZE)                               # (256, W)
        ph = _pool_matrix(RESIZE, CROP_H0, CROP_H1, POOL_OUT) @ rh       # (112, H)
        pw = _pool_matrix(RESIZE, CROP_W0, CROP_W1, POOL_OUT) @ rw       # (112, W)
    else:
        assert H >= CROP_H1 and W >= CROP_W1, "input too small for 35:223 / 32:220 crop"
        ph = _pool_matrix(H, CROP_H0, CROP_H1, POOL_OUT)                 # (112, H)
        pw = _pool_matrix(W, CROP_W0, CROP_W1, POOL_OUT)                 # (112, W)
    # W-pool is applied from the right: transpose and lane-pad 112 -> 128 with zeros
    # (the padding columns only ever multiply the zero-effect rows >= 112 of W1).
    pwt = np.zeros((W, POOL_PAD), dtype=np.float32)
    pwt[:, :POOL_OUT] = pw.T
    # bf16 is lossless for the pure crop+pool weights ({1.0, 0.5}); the composed
    # resize+pool weights round at ~2^-8 relative, which is fine for a loss.
    return jnp.asarray(ph, jnp.bfloat16), jnp.asarray(pwt, jnp.bfloat16)


def init_params():
    k1, k2 = jax.random.split(jax.random.PRNGKey(42))
    return {
        # Rows >= POOL_OUT of W1 only ever multiply the zero lane-padding of the
        # pooled features, so the padding does not change the embedding.
        "W1": (jax.random.normal(k1, (POOL_PAD, HIDDEN), jnp.float32) * 0.02
               ).astype(jnp.bfloat16),
        "b1": jnp.full((1, HIDDEN), 0.01, jnp.float32),
        "W2": (jax.random.normal(k2, (HIDDEN, EMBED), jnp.float32) * 0.02
               ).astype(jnp.bfloat16),
    }


def _multi_tensorcore():
    """True for chips where a 'parallel' grid axis shards across >1 TensorCore
    (v7x, and v4/v5p megacore). v5e / v6e are single-TC -> merge the grid."""
    try:
        kind = jax.devices()[0].device_kind.lower()
    except Exception:
        return False
    return ("v7" in kind) or ("7x" in kind) or ("v4" in kind) or ("v5p" in kind)


# ---------------------------------------------------------------------------
# Fused Pallas kernel: crop+pool -> synthetic facenet -> l2-normalized feature
# ---------------------------------------------------------------------------
def _fused_feats_kernel(ph_ref, pwt_ref, w1_ref, b1_ref, w2_ref, x_ref, o_ref):
    nb = x_ref.shape[0]               # images in this block (1 on multi-TC, N merged)
    H = ph_ref.shape[1]
    C = x_ref.shape[1] // H

    ph = ph_ref[...]                  # (112, H)        bf16
    pwt = pwt_ref[...]                # (W, 128)        bf16
    w1 = w1_ref[...]                  # (128, HIDDEN)   bf16
    b1 = b1_ref[...]                  # (1, HIDDEN)     f32
    w2 = w2_ref[...]                  # (HIDDEN, EMBED) bf16

    feats = []
    for n in range(nb):               # static unroll (nb <= 2)
        # crop + AdaptiveAvgPool along W (lane axis) for all channels at once.
        xw = jnp.dot(x_ref[n], pwt, preferred_element_type=jnp.float32)  # (C*H, 128)
        xw = xw.astype(jnp.bfloat16)
        h_sum = jnp.zeros((1, HIDDEN), jnp.float32)
        for c in range(C):            # static unroll (C = 3): per-channel H-pool
            pooled = jnp.dot(ph, xw[c * H:(c + 1) * H, :],
                             preferred_element_type=jnp.float32)          # (112, 128)
            # TODO(synk): pretrained IR-SE50 backbone unavailable; synthetic facenet
            # (row-wise linear + ReLU -> mean -> linear to 512 -> l2-normalize).
            hc = jnp.dot(pooled.astype(jnp.bfloat16), w1,
                         preferred_element_type=jnp.float32)              # (112, HIDDEN)
            hc = jnp.maximum(hc + b1, 0.0)
            h_sum = h_sum + jnp.sum(hc, axis=0, keepdims=True)
        m = h_sum * (1.0 / (C * POOL_OUT))                                # (1, HIDDEN)
        e = jnp.dot(m.astype(jnp.bfloat16), w2,
                    preferred_element_type=jnp.float32)                   # (1, EMBED)
        inv = jax.lax.rsqrt(jnp.sum(e * e, axis=-1, keepdims=True) + 1e-12)
        feats.append(e * inv)
    # Single lane-dense store of all embeddings produced by this step.
    o_ref[...] = jnp.concatenate(feats, axis=0)[None]                     # (1, nb, 512)


def extract_feats_batched(images, params):
    """images: (N, C, H, W) float -> (N, EMBED) l2-normalized embeddings."""
    N, C, H, W = images.shape
    ph, pwt = _build_pool_operators(H, W)          # (112, H) bf16, (W, 128) bf16

    # Chip-aware grid: one image/step on multi-TC chips (sharded across cores),
    # all images in one step on single-TC v5e / v6e (no per-step overhead).
    nb = 1 if (_multi_tensorcore() and N > 1) else N
    steps = N // nb

    # Cast to bf16 in the wrapper so the per-image DMA moves half the bytes.
    x = images.astype(jnp.bfloat16).reshape(N, C * H, W)

    out = pl.pallas_call(
        _fused_feats_kernel,
        out_shape=jax.ShapeDtypeStruct((steps, nb, EMBED), jnp.float32),
        grid=(steps,),
        in_specs=[
            pl.BlockSpec((POOL_OUT, H), lambda i: (0, 0)),       # per-channel H-pool
            pl.BlockSpec((W, POOL_PAD), lambda i: (0, 0)),       # padded W-pool^T
            pl.BlockSpec((POOL_PAD, HIDDEN), lambda i: (0, 0)),  # W1 (bf16)
            pl.BlockSpec((1, HIDDEN), lambda i: (0, 0)),         # b1 (f32)
            pl.BlockSpec((HIDDEN, EMBED), lambda i: (0, 0)),     # W2 (bf16)
            pl.BlockSpec((nb, C * H, W), lambda i: (i, 0, 0)),   # nb images / step
        ],
        out_specs=pl.BlockSpec((1, nb, EMBED), lambda i: (i, 0, 0)),
        compiler_params=pltpu.CompilerParams(dimension_semantics=("parallel",)),
    )(ph, pwt, params["W1"], params["b1"], params["W2"], x)
    return out.reshape(N, EMBED)


def id_loss(synth_image, target_image, params):
    # IDLoss.extract_feats returns the embedding of batch element 0 only, so we
    # slice element 0 of each input and run synth+target through ONE fused
    # pallas_call; the final 512-d dot stays in plain JAX (negligible).
    x2 = jnp.stack([synth_image[0], target_image[0]], axis=0)   # (2, C, H, W)
    feats = extract_feats_batched(x2, params)                   # (2, EMBED)
    x_feats = feats[0]
    y_feats = jax.lax.stop_gradient(feats[1])                   # .detach(): fwd no-op
    return 1.0 - jnp.dot(y_feats, x_feats)


if __name__ == "__main__":
    key = jax.random.PRNGKey(0)
    ks, kt = jax.random.split(key)
    # 224 covers the fixed crop (rows 35:223, cols 32:220) and is <= 256 (no
    # area-resize): the smallest shape with the module's exact semantics.
    synth_image = jax.random.normal(ks, (2, 3, 224, 224), jnp.float32)
    target_image = jax.random.normal(kt, (2, 3, 224, 224), jnp.float32)
    params = init_params()

    loss_fn = jax.jit(functools.partial(id_loss, params=params))
    loss = loss_fn(synth_image, target_image)
    jax.block_until_ready(loss)
    assert loss.shape == () and loss.dtype == jnp.float32
    assert bool(jnp.isfinite(loss))
    print("KERNEL_OK")
</pallas_src>

<mosaic_0001>
module attributes {stable_mosaic.version = 11 : i64} {
  func.func @_fused_feats_kernel(%arg0: i32, %arg1: memref<112x224xbf16, #tpu.memory_space<vmem>>, %arg2: memref<224x128xbf16, #tpu.memory_space<vmem>>, %arg3: memref<128x128xbf16, #tpu.memory_space<vmem>>, %arg4: memref<1x128xf32, #tpu.memory_space<vmem>>, %arg5: memref<128x512xbf16, #tpu.memory_space<vmem>>, %arg6: memref<2x672x224xbf16, #tpu.memory_space<vmem>>, %arg7: memref<1x2x512xf32, #tpu.memory_space<vmem>>) attributes {dimension_semantics = [#tpu.dimension_semantics<parallel>], iteration_bounds = array<i64: 1>, scalar_prefetch = 0 : i64, scratch_operands = 0 : i64, tpu.core_type = #tpu.core_type<tc>, window_params = [{pipeline_mode = #tpu.pipeline_mode<synchronous>, transform_indices = @transform_0, window_bounds = array<i64: 112, 224>}, {pipeline_mode = #tpu.pipeline_mode<synchronous>, transform_indices = @transform_1, window_bounds = array<i64: 224, 128>}, {pipeline_mode = #tpu.pipeline_mode<synchronous>, transform_indices = @transform_2, window_bounds = array<i64: 128, 128>}, {pipeline_mode = #tpu.pipeline_mode<synchronous>, transform_indices = @transform_3, window_bounds = array<i64: 1, 128>}, {pipeline_mode = #tpu.pipeline_mode<synchronous>, transform_indices = @transform_4, window_bounds = array<i64: 128, 512>}, {transform_indices = @transform_5, window_bounds = array<i64: 2, 672, 224>}, {transform_indices = @transform_6, window_bounds = array<i64: 1, 2, 512>}]} {
    %c0 = arith.constant 0 : index
    %c0_0 = arith.constant 0 : index
    %0 = vector.load %arg1[%c0, %c0_0] : memref<112x224xbf16, #tpu.memory_space<vmem>>, vector<112x224xbf16>
    %c0_1 = arith.constant 0 : index
    %c0_2 = arith.constant 0 : index
    %1 = vector.load %arg2[%c0_1, %c0_2] : memref<224x128xbf16, #tpu.memory_space<vmem>>, vector<224x128xbf16>
    %c0_3 = arith.constant 0 : index
    %c0_4 = arith.constant 0 : index
    %2 = vector.load %arg3[%c0_3, %c0_4] : memref<128x128xbf16, #tpu.memory_space<vmem>>, vector<128x128xbf16>
    %c0_5 = arith.constant 0 : index
    %c0_6 = arith.constant 0 : index
    %3 = vector.load %arg4[%c0_5, %c0_6] : memref<1x128xf32, #tpu.memory_space<vmem>>, vector<1x128xf32>
    %c0_7 = arith.constant 0 : index
    %c0_8 = arith.constant 0 : index
    %4 = vector.load %arg5[%c0_7, %c0_8] : memref<128x512xbf16, #tpu.memory_space<vmem>>, vector<128x512xbf16>
    %c0_9 = arith.constant 0 : index
    %c0_10 = arith.constant 0 : index
    %c0_11 = arith.constant 0 : index
    %5 = vector.load %arg6[%c0_9, %c0_10, %c0_11] : memref<2x672x224xbf16, #tpu.memory_space<vmem>>, vector<1x672x224xbf16>
    %6 = vector.shape_cast %5 : vector<1x672x224xbf16> to vector<672x224xbf16>
    %cst = arith.constant dense<0.000000e+00> : vector<672x128xf32>
    %7 = tpu.matmul %6, %1, %cst {dimension_numbers = #tpu.dot_dimension_numbers<[1], [0], [0], [1], [0, 0, 1, 1], [], []>} : vector<672x224xbf16>, vector<224x128xbf16>, vector<672x128xf32> -> vector<672x128xf32>
    %8 = arith.truncf %7 : vector<672x128xf32> to vector<672x128xbf16>
    %cst_12 = arith.constant 0.000000e+00 : f32
    %9 = vector.broadcast %cst_12 : f32 to vector<1x128xf32>
    %10 = vector.extract_strided_slice %8 {offsets = [0, 0], sizes = [224, 128], strides = [1, 1]} : vector<672x128xbf16> to vector<224x128xbf16>
    %cst_13 = arith.constant dense<0.000000e+00> : vector<112x128xf32>
    %11 = tpu.matmul %0, %10, %cst_13 {dimension_numbers = #tpu.dot_dimension_numbers<[1], [0], [0], [1], [0, 0, 1, 1], [], []>} : vector<112x224xbf16>, vector<224x128xbf16>, vector<112x128xf32> -> vector<112x128xf32>
    %12 = arith.truncf %11 : vector<112x128xf32> to vector<112x128xbf16>
    %cst_14 = arith.constant dense<0.000000e+00> : vector<112x128xf32>
    %13 = tpu.matmul %12, %2, %cst_14 {dimension_numbers = #tpu.dot_dimension_numbers<[1], [0], [0], [1], [0, 0, 1, 1], [], []>} : vector<112x128xbf16>, vector<128x128xbf16>, vector<112x128xf32> -> vector<112x128xf32>
    %14 = vector.broadcast %3 : vector<1x128xf32> to vector<112x128xf32>
    %15 = arith.addf %13, %14 : vector<112x128xf32>
    %cst_15 = arith.constant 0.000000e+00 : f32
    %16 = vector.broadcast %cst_15 : f32 to vector<112x128xf32>
    %17 = arith.maximumf %15, %16 : vector<112x128xf32>
    %cst_16 = arith.constant dense<0.000000e+00> : vector<128xf32>
    %18 = vector.multi_reduction <add>, %17, %cst_16 [0] : vector<112x128xf32> to vector<128xf32>
    %19 = vector.shape_cast %18 : vector<128xf32> to vector<1x128xf32>
    %20 = arith.addf %9, %19 : vector<1x128xf32>
    %21 = vector.extract_strided_slice %8 {offsets = [224, 0], sizes = [224, 128], strides = [1, 1]} : vector<672x128xbf16> to vector<224x128xbf16>
    %cst_17 = arith.constant dense<0.000000e+00> : vector<112x128xf32>
    %22 = tpu.matmul %0, %21, %cst_17 {dimension_numbers = #tpu.dot_dimension_numbers<[1], [0], [0], [1], [0, 0, 1, 1], [], []>} : vector<112x224xbf16>, vector<224x128xbf16>, vector<112x128xf32> -> vector<112x128xf32>
    %23 = arith.truncf %22 : vector<112x128xf32> to vector<112x128xbf16>
    %cst_18 = arith.constant dense<0.000000e+00> : vector<112x128xf32>
    %24 = tpu.matmul %23, %2, %cst_18 {dimension_numbers = #tpu.dot_dimension_numbers<[1], [0], [0], [1], [0, 0, 1, 1], [], []>} : vector<112x128xbf16>, vector<128x128xbf16>, vector<112x128xf32> -> vector<112x128xf32>
    %25 = vector.broadcast %3 : vector<1x128xf32> to vector<112x128xf32>
    %26 = arith.addf %24, %25 : vector<112x128xf32>
    %cst_19 = arith.constant 0.000000e+00 : f32
    %27 = vector.broadcast %cst_19 : f32 to vector<112x128xf32>
    %28 = arith.maximumf %26, %27 : vector<112x128xf32>
    %cst_20 = arith.constant dense<0.000000e+00> : vector<128xf32>
    %29 = vector.multi_reduction <add>, %28, %cst_20 [0] : vector<112x128xf32> to vector<128xf32>
    %30 = vector.shape_cast %29 : vector<128xf32> to vector<1x128xf32>
    %31 = arith.addf %20, %30 : vector<1x128xf32>
    %32 = vector.extract_strided_slice %8 {offsets = [448, 0], sizes = [224, 128], strides = [1, 1]} : vector<672x128xbf16> to vector<224x128xbf16>
    %cst_21 = arith.constant dense<0.000000e+00> : vector<112x128xf32>
    %33 = tpu.matmul %0, %32, %cst_21 {dimension_numbers = #tpu.dot_dimension_numbers<[1], [0], [0], [1], [0, 0, 1, 1], [], []>} : vector<112x224xbf16>, vector<224x128xbf16>, vector<112x128xf32> -> vector<112x128xf32>
    %34 = arith.truncf %33 : vector<112x128xf32> to vector<112x128xbf16>
    %cst_22 = arith.constant dense<0.000000e+00> : vector<112x128xf32>
    %35 = tpu.matmul %34, %2, %cst_22 {dimension_numbers = #tpu.dot_dimension_numbers<[1], [0], [0], [1], [0, 0, 1, 1], [], []>} : vector<112x128xbf16>, vector<128x128xbf16>, vector<112x128xf32> -> vector<112x128xf32>
    %36 = vector.broadcast %3 : vector<1x128xf32> to vector<112x128xf32>
    %37 = arith.addf %35, %36 : vector<112x128xf32>
    %cst_23 = arith.constant 0.000000e+00 : f32
    %38 = vector.broadcast %cst_23 : f32 to vector<112x128xf32>
    %39 = arith.maximumf %37, %38 : vector<112x128xf32>
    %cst_24 = arith.constant dense<0.000000e+00> : vector<128xf32>
    %40 = vector.multi_reduction <add>, %39, %cst_24 [0] : vector<112x128xf32> to vector<128xf32>
    %41 = vector.shape_cast %40 : vector<128xf32> to vector<1x128xf32>
    %42 = arith.addf %31, %41 : vector<1x128xf32>
    %cst_25 = arith.constant 0.00297619053 : f32
    %43 = vector.broadcast %cst_25 : f32 to vector<1x128xf32>
    %44 = arith.mulf %42, %43 : vector<1x128xf32>
    %45 = arith.truncf %44 : vector<1x128xf32> to vector<1x128xbf16>
    %cst_26 = arith.constant dense<0.000000e+00> : vector<1x512xf32>
    %46 = tpu.matmul %45, %4, %cst_26 {dimension_numbers = #tpu.dot_dimension_numbers<[1], [0], [0], [1], [0, 0, 1, 1], [], []>} : vector<1x128xbf16>, vector<128x512xbf16>, vector<1x512xf32> -> vector<1x512xf32>
    %47 = arith.mulf %46, %46 : vector<1x512xf32>
    %cst_27 = arith.constant dense<0.000000e+00> : vector<1xf32>
    %48 = vector.multi_reduction <add>, %47, %cst_27 [1] : vector<1x512xf32> to vector<1xf32>
    %49 = vector.shape_cast %48 : vector<1xf32> to vector<1x1xf32>
    %cst_28 = arith.constant 9.99999996E-13 : f32
    %50 = vector.broadcast %cst_28 : f32 to vector<1x1xf32>
    %51 = arith.addf %49, %50 : vector<1x1xf32>
    %52 = math.rsqrt %51 : vector<1x1xf32>
    %53 = vector.broadcast %52 : vector<1x1xf32> to vector<1x512xf32>
    %54 = arith.mulf %46, %53 : vector<1x512xf32>
    %c1 = arith.constant 1 : index
    %c0_29 = arith.constant 0 : index
    %c0_30 = arith.constant 0 : index
    %55 = vector.load %arg6[%c1, %c0_29, %c0_30] : memref<2x672x224xbf16, #tpu.memory_space<vmem>>, vector<1x672x224xbf16>
    %56 = vector.shape_cast %55 : vector<1x672x224xbf16> to vector<672x224xbf16>
    %cst_31 = arith.constant dense<0.000000e+00> : vector<672x128xf32>
    %57 = tpu.matmul %56, %1, %cst_31 {dimension_numbers = #tpu.dot_dimension_numbers<[1], [0], [0], [1], [0, 0, 1, 1], [], []>} : vector<672x224xbf16>, vector<224x128xbf16>, vector<672x128xf32> -> vector<672x128xf32>
    %58 = arith.truncf %57 : vector<672x128xf32> to vector<672x128xbf16>
    %cst_32 = arith.constant 0.000000e+00 : f32
    %59 = vector.broadcast %cst_32 : f32 to vector<1x128xf32>
    %60 = vector.extract_strided_slice %58 {offsets = [0, 0], sizes = [224, 128], strides = [1, 1]} : vector<672x128xbf16> to vector<224x128xbf16>
    %cst_33 = arith.constant dense<0.000000e+00> : vector<112x128xf32>
    %61 = tpu.matmul %0, %60, %cst_33 {dimension_numbers = #tpu.dot_dimension_numbers<[1], [0], [0], [1], [0, 0, 1, 1], [], []>} : vector<112x224xbf16>, vector<224x128xbf16>, vector<112x128xf32> -> vector<112x128xf32>
    %62 = arith.truncf %61 : vector<112x128xf32> to vector<112x128xbf16>
    %cst_34 = arith.constant dense<0.000000e+00> : vector<112x128xf32>
    %63 = tpu.matmul %62, %2, %cst_34 {dimension_numbers = #tpu.dot_dimension_numbers<[1], [0], [0], [1], [0, 0, 1, 1], [], []>} : vector<112x128xbf16>, vector<128x128xbf16>, vector<112x128xf32> -> vector<112x128xf32>
    %64 = vector.broadcast %3 : vector<1x128xf32> to vector<112x128xf32>
    %65 = arith.addf %63, %64 : vector<112x128xf32>
    %cst_35 = arith.constant 0.000000e+00 : f32
    %66 = vector.broadcast %cst_35 : f32 to vector<112x128xf32>
    %67 = arith.maximumf %65, %66 : vector<112x128xf32>
    %cst_36 = arith.constant dense<0.000000e+00> : vector<128xf32>
    %68 = vector.multi_reduction <add>, %67, %cst_36 [0] : vector<112x128xf32> to vector<128xf32>
    %69 = vector.shape_cast %68 : vector<128xf32> to vector<1x128xf32>
    %70 = arith.addf %59, %69 : vector<1x128xf32>
    %71 = vector.extract_strided_slice %58 {offsets = [224, 0], sizes = [224, 128], strides = [1, 1]} : vector<672x128xbf16> to vector<224x128xbf16>
    %cst_37 = arith.constant dense<0.000000e+00> : vector<112x128xf32>
    %72 = tpu.matmul %0, %71, %cst_37 {dimension_numbers = #tpu.dot_dimension_numbers<[1], [0], [0], [1], [0, 0, 1, 1], [], []>} : vector<112x224xbf16>, vector<224x128xbf16>, vector<112x128xf32> -> vector<112x128xf32>
    %73 = arith.truncf %72 : vector<112x128xf32> to vector<112x128xbf16>
    %cst_38 = arith.constant dense<0.000000e+00> : vector<112x128xf32>
    %74 = tpu.matmul %73, %2, %cst_38 {dimension_numbers = #tpu.dot_dimension_numbers<[1], [0], [0], [1], [0, 0, 1, 1], [], []>} : vector<112x128xbf16>, vector<128x128xbf16>, vector<112x128xf32> -> vector<112x128xf32>
    %75 = vector.broadcast %3 : vector<1x128xf32> to vector<112x128xf32>
    %76 = arith.addf %74, %75 : vector<112x128xf32>
    %cst_39 = arith.constant 0.000000e+00 : f32
    %77 = vector.broadcast %cst_39 : f32 to vector<112x128xf32>
    %78 = arith.maximumf %76, %77 : vector<112x128xf32>
    %cst_40 = arith.constant dense<0.000000e+00> : vector<128xf32>
    %79 = vector.multi_reduction <add>, %78, %cst_40 [0] : vector<112x128xf32> to vector<128xf32>
    %80 = vector.shape_cast %79 : vector<128xf32> to vector<1x128xf32>
    %81 = arith.addf %70, %80 : vector<1x128xf32>
    %82 = vector.extract_strided_slice %58 {offsets = [448, 0], sizes = [224, 128], strides = [1, 1]} : vector<672x128xbf16> to vector<224x128xbf16>
    %cst_41 = arith.constant dense<0.000000e+00> : vector<112x128xf32>
    %83 = tpu.matmul %0, %82, %cst_41 {dimension_numbers = #tpu.dot_dimension_numbers<[1], [0], [0], [1], [0, 0, 1, 1], [], []>} : vector<112x224xbf16>, vector<224x128xbf16>, vector<112x128xf32> -> vector<112x128xf32>
    %84 = arith.truncf %83 : vector<112x128xf32> to vector<112x128xbf16>
    %cst_42 = arith.constant dense<0.000000e+00> : vector<112x128xf32>
    %85 = tpu.matmul %84, %2, %cst_42 {dimension_numbers = #tpu.dot_dimension_numbers<[1], [0], [0], [1], [0, 0, 1, 1], [], []>} : vector<112x128xbf16>, vector<128x128xbf16>, vector<112x128xf32> -> vector<112x128xf32>
    %86 = vector.broadcast %3 : vector<1x128xf32> to vector<112x128xf32>
    %87 = arith.addf %85, %86 : vector<112x128xf32>
    %cst_43 = arith.constant 0.000000e+00 : f32
    %88 = vector.broadcast %cst_43 : f32 to vector<112x128xf32>
    %89 = arith.maximumf %87, %88 : vector<112x128xf32>
    %cst_44 = arith.constant dense<0.000000e+00> : vector<128xf32>
    %90 = vector.multi_reduction <add>, %89, %cst_44 [0] : vector<112x128xf32> to vector<128xf32>
    %91 = vector.shape_cast %90 : vector<128xf32> to vector<1x128xf32>
    %92 = arith.addf %81, %91 : vector<1x128xf32>
    %cst_45 = arith.constant 0.00297619053 : f32
    %93 = vector.broadcast %cst_45 : f32 to vector<1x128xf32>
    %94 = arith.mulf %92, %93 : vector<1x128xf32>
    %95 = arith.truncf %94 : vector<1x128xf32> to vector<1x128xbf16>
    %cst_46 = arith.constant dense<0.000000e+00> : vector<1x512xf32>
    %96 = tpu.matmul %95, %4, %cst_46 {dimension_numbers = #tpu.dot_dimension_numbers<[1], [0], [0], [1], [0, 0, 1, 1], [], []>} : vector<1x128xbf16>, vector<128x512xbf16>, vector<1x512xf32> -> vector<1x512xf32>
    %97 = arith.mulf %96, %96 : vector<1x512xf32>
    %cst_47 = arith.constant dense<0.000000e+00> : vector<1xf32>
    %98 = vector.multi_reduction <add>, %97, %cst_47 [1] : vector<1x512xf32> to vector<1xf32>
    %99 = vector.shape_cast %98 : vector<1xf32> to vector<1x1xf32>
    %cst_48 = arith.constant 9.99999996E-13 : f32
    %100 = vector.broadcast %cst_48 : f32 to vector<1x1xf32>
    %101 = arith.addf %99, %100 : vector<1x1xf32>
    %102 = math.rsqrt %101 : vector<1x1xf32>
    %103 = vector.broadcast %102 : vector<1x1xf32> to vector<1x512xf32>
    %104 = arith.mulf %96, %103 : vector<1x512xf32>
    %105 = tpu.concatenate %54, %104 in 0 : vector<1x512xf32>, vector<1x512xf32> -> vector<2x512xf32>
    %106 = vector.shape_cast %105 : vector<2x512xf32> to vector<1x2x512xf32>
    %c0_49 = arith.constant 0 : index
    %c0_50 = arith.constant 0 : index
    %c0_51 = arith.constant 0 : index
    %107 = vector.load %arg7[%c0_49, %c0_50, %c0_51] : memref<1x2x512xf32, #tpu.memory_space<vmem>>, vector<1x2x512xf32>
    tpu.vector_store %arg7[%c0_49, %c0_50, %c0_51], %106 {strides = array<i32>} : memref<1x2x512xf32, #tpu.memory_space<vmem>>, vector<1x2x512xf32>,
    return
  }
  func.func @transform_0(%arg0: i32) -> (i32, i32) {
    %c0_i32 = arith.constant 0 : i32
    %c0_i32_0 = arith.constant 0 : i32
    %c0_i32_1 = arith.constant 0 : i32
    return %c0_i32, %c0_i32_0 : i32, i32
  }
  func.func @transform_1(%arg0: i32) -> (i32, i32) {
    %c0_i32 = arith.constant 0 : i32
    %c0_i32_0 = arith.constant 0 : i32
    %c0_i32_1 = arith.constant 0 : i32
    return %c0_i32, %c0_i32_0 : i32, i32
  }
  func.func @transform_2(%arg0: i32) -> (i32, i32) {
    %c0_i32 = arith.constant 0 : i32
    %c0_i32_0 = arith.constant 0 : i32
    %c0_i32_1 = arith.constant 0 : i32
    return %c0_i32, %c0_i32_0 : i32, i32
  }
  func.func @transform_3(%arg0: i32) -> (i32, i32) {
    %c0_i32 = arith.constant 0 : i32
    %c0_i32_0 = arith.constant 0 : i32
    %c0_i32_1 = arith.constant 0 : i32
    return %c0_i32, %c0_i32_0 : i32, i32
  }
  func.func @transform_4(%arg0: i32) -> (i32, i32) {
    %c0_i32 = arith.constant 0 : i32
    %c0_i32_0 = arith.constant 0 : i32
    %c0_i32_1 = arith.constant 0 : i32
    return %c0_i32, %c0_i32_0 : i32, i32
  }
  func.func @transform_5(%arg0: i32) -> (i32, i32, i32) {
    %c0_i32 = arith.constant 0 : i32
    %c0_i32_0 = arith.constant 0 : i32
    %c0_i32_1 = arith.constant 0 : i32
    return %arg0, %c0_i32, %c0_i32_0 : i32, i32, i32
  }
  func.func @transform_6(%arg0: i32) -> (i32, i32, i32) {
    %c0_i32 = arith.constant 0 : i32
    %c0_i32_0 = arith.constant 0 : i32
    %c0_i32_1 = arith.constant 0 : i32
    return %arg0, %c0_i32, %c0_i32_0 : i32, i32, i32
  }
}

</mosaic_0001>

<llo_original>
// kernel: id_loss.1
$region0: #{id_loss.1}
  #allocation0 [shape = 'u32[]', space=smem, size = 0x4, offset = 0x4, fixed_abs, tag = 'smem constant byte address 0x4 - core index']
  #allocation1 [shape = 'u32[144,128]{1,0:T(1,128)}', space=vmem, size = 0x12000, scoped, tag = 'internal scratch']
  %s0 = inlined_call_operand.vmem [shape: bf16[112,224], index: 0, kind: input, shape index: {}]
  %s1 = inlined_call_operand.vmem [shape: bf16[224,128], index: 1, kind: input, shape index: {}]
  %s2 = inlined_call_operand.vmem [shape: bf16[128,128], index: 2, kind: input, shape index: {}]
  %s3 = inlined_call_operand.vmem [shape: f32[1,128], index: 3, kind: input, shape index: {}]
  %s4 = inlined_call_operand.vmem [shape: bf16[128,512], index: 4, kind: input, shape index: {}]
  %s5 = inlined_call_operand.vmem [shape: bf16[2,672,224], index: 5, kind: input, shape index: {}]
  %s6 = inlined_call_operand.vmem [shape: f32[1,2,512], index: 6, kind: output, shape index: {}]
  %s7 = sld [smem:[#allocation0]]
  $region34: #{id_loss.1} parent=0
    _
  %s9 = ssub.s32 1, %s7
  %s10 = scalar_select 0, %s9, %s7
  // Predicated region
  $region2: #{id_loss.1} parent=0 // pred_check
    _
  $region3: #{id_loss.1} parent=0 // pred_check_branch
    %12 = sbr.rel (0) target = $region5
  $region4: #{id_loss.1} parent=0 // pred_region
    _
  $region5: #{id_loss.1} parent=0 // pred_fallthru
    _
  // Predicated region
  $region6: #{id_loss.1} parent=0 // pred_check
    _
  $region7: #{id_loss.1} parent=0 // pred_check_branch
    %14 = sbr.rel (0) target = $region9
  $region8: #{id_loss.1} parent=0 // pred_region
    _
  $region9: #{id_loss.1} parent=0 // pred_fallthru
    _
  // Predicated region
  $region10: #{id_loss.1} parent=0 // pred_check
    _
  $region11: #{id_loss.1} parent=0 // pred_check_branch
    %16 = sbr.rel (0) target = $region13
  $region12: #{id_loss.1} parent=0 // pred_region
    _
  $region13: #{id_loss.1} parent=0 // pred_fallthru
    _
  // Predicated region
  $region14: #{id_loss.1} parent=0 // pred_check
    _
  $region15: #{id_loss.1} parent=0 // pred_check_branch
    %18 = sbr.rel (0) target = $region17
  $region16: #{id_loss.1} parent=0 // pred_region
    _
  $region17: #{id_loss.1} parent=0 // pred_fallthru
    _
  // Predicated region
  $region18: #{id_loss.1} parent=0 // pred_check
    _
  $region19: #{id_loss.1} parent=0 // pred_check_branch
    %20 = sbr.rel (0) target = $region21
  $region20: #{id_loss.1} parent=0 // pred_region
    _
  $region21: #{id_loss.1} parent=0 // pred_fallthru
    _
  // Predicated region
  $region22: #{id_loss.1} parent=0 // pred_check
    _
  $region23: #{id_loss.1} parent=0 // pred_check_branch
    %22 = sbr.rel (0) target = $region25
  $region24: #{id_loss.1} parent=0 // pred_region
    _
  $region25: #{id_loss.1} parent=0 // pred_fallthru
    _
  %v24 = vld [vmem:[%s0] sm:$0xff]
  %v25 = vld [vmem:[%s0 + $0x8] sm:$0xff]
  %v26 = vld [vmem:[%s0 + $0x10] sm:$0xff]
  %v27 = vld [vmem:[%s0 + $0x18] sm:$0xff]
  %v28 = vld [vmem:[%s0 + $0x20] sm:$0xff]
  %v29 = vld [vmem:[%s0 + $0x28] sm:$0xff]
  %v30 = vld [vmem:[%s0 + $0x30] sm:$0xff]
  %v31 = vld [vmem:[%s0 + $0x38] sm:$0xff]
  %v32 = vld [vmem:[%s0 + $0x40] sm:$0xff]
  %v33 = vld [vmem:[%s0 + $0x48] sm:$0xff]
  %v34 = vld [vmem:[%s0 + $0x50] sm:$0xff]
  %v35 = vld [vmem:[%s0 + $0x58] sm:$0xff]
  %v36 = vld [vmem:[%s0 + $0x60] sm:$0xff]
  %v37 = vld [vmem:[%s0 + $0x68] sm:$0xff]
  %v38 = vld [vmem:[%s1] sm:$0xf]
  %v39 = vld [vmem:[%s1 + $0x4] sm:$0xf]
  %v40 = vld [vmem:[%s1 + $0x8] sm:$0xf]
  %v41 = vld [vmem:[%s1 + $0xc] sm:$0xf]
  %v42 = vld [vmem:[%s1 + $0x10] sm:$0xf]
  %v43 = vld [vmem:[%s1 + $0x14] sm:$0xf]
  %v44 = vld [vmem:[%s1 + $0x18] sm:$0xf]
  %v45 = vld [vmem:[%s1 + $0x1c] sm:$0xf]
  %v46 = vld [vmem:[%s1 + $0x20] sm:$0xf]
  %v47 = vld [vmem:[%s1 + $0x24] sm:$0xf]
  %v48 = vld [vmem:[%s1 + $0x28] sm:$0xf]
  %v49 = vld [vmem:[%s1 + $0x2c] sm:$0xf]
  %v50 = vld [vmem:[%s1 + $0x30] sm:$0xf]
  %v51 = vld [vmem:[%s1 + $0x34] sm:$0xf]
  %v52 = vld [vmem:[%s1 + $0x38] sm:$0xf]
  %v53 = vld [vmem:[%s1 + $0x3c] sm:$0xf]
  %v54 = vld [vmem:[%s1 + $0x40] sm:$0xf]
  %v55 = vld [vmem:[%s1 + $0x44] sm:$0xf]
  %v56 = vld [vmem:[%s1 + $0x48] sm:$0xf]
  %v57 = vld [vmem:[%s1 + $0x4c] sm:$0xf]
  %v58 = vld [vmem:[%s1 + $0x50] sm:$0xf]
  %v59 = vld [vmem:[%s1 + $0x54] sm:$0xf]
  %v60 = vld [vmem:[%s1 + $0x58] sm:$0xf]
  %v61 = vld [vmem:[%s1 + $0x5c] sm:$0xf]
  %v62 = vld [vmem:[%s1 + $0x60] sm:$0xf]
  %v63 = vld [vmem:[%s1 + $0x64] sm:$0xf]
  %v64 = vld [vmem:[%s1 + $0x68] sm:$0xf]
  %v65 = vld [vmem:[%s1 + $0x6c] sm:$0xf]
  %v66 = vld [vmem:[%s2] sm:$0xf]
  %v67 = vld [vmem:[%s2 + $0x4] sm:$0xf]
  %v68 = vld [vmem:[%s2 + $0x8] sm:$0xf]
  %v69 = vld [vmem:[%s2 + $0xc] sm:$0xf]
  %v70 = vld [vmem:[%s2 + $0x10] sm:$0xf]
  %v71 = vld [vmem:[%s2 + $0x14] sm:$0xf]
  %v72 = vld [vmem:[%s2 + $0x18] sm:$0xf]
  %v73 = vld [vmem:[%s2 + $0x1c] sm:$0xf]
  %v74 = vld [vmem:[%s2 + $0x20] sm:$0xf]
  %v75 = vld [vmem:[%s2 + $0x24] sm:$0xf]
  %v76 = vld [vmem:[%s2 + $0x28] sm:$0xf]
  %v77 = vld [vmem:[%s2 + $0x2c] sm:$0xf]
  %v78 = vld [vmem:[%s2 + $0x30] sm:$0xf]
  %v79 = vld [vmem:[%s2 + $0x34] sm:$0xf]
  %v80 = vld [vmem:[%s2 + $0x38] sm:$0xf]
  %v81 = vld [vmem:[%s2 + $0x3c] sm:$0xf]
  %v82 = vld [vmem:[%s3] sm:$0x1]
  %v83 = vld [vmem:[%s4] sm:$0xff]
  %v84 = vld [vmem:[%s4 + $0x8] sm:$0xff]
  %v85 = vld [vmem:[%s4 + $0x10] sm:$0xff]
  %v86 = vld [vmem:[%s4 + $0x18] sm:$0xff]
  %v87 = vld [vmem:[%s4 + $0x20] sm:$0xff]
  %v88 = vld [vmem:[%s4 + $0x28] sm:$0xff]
  %v89 = vld [vmem:[%s4 + $0x30] sm:$0xff]
  %v90 = vld [vmem:[%s4 + $0x38] sm:$0xff]
  %v91 = vld [vmem:[%s4 + $0x40] sm:$0xff]
  %v92 = vld [vmem:[%s4 + $0x48] sm:$0xff]
  %v93 = vld [vmem:[%s4 + $0x50] sm:$0xff]
  %v94 = vld [vmem:[%s4 + $0x58] sm:$0xff]
  %v95 = vld [vmem:[%s4 + $0x60] sm:$0xff]
  %v96 = vld [vmem:[%s4 + $0x68] sm:$0xff]
  %v97 = vld [vmem:[%s4 + $0x70] sm:$0xff]
  %v98 = vld [vmem:[%s4 + $0x78] sm:$0xff]
  %v99 = vld [vmem:[%s4 + $0x80] sm:$0xff]
  %v100 = vld [vmem:[%s4 + $0x88] sm:$0xff]
  %v101 = vld [vmem:[%s4 + $0x90] sm:$0xff]
  %v102 = vld [vmem:[%s4 + $0x98] sm:$0xff]
  %v103 = vld [vmem:[%s4 + $0xa0] sm:$0xff]
  %v104 = vld [vmem:[%s4 + $0xa8] sm:$0xff]
  %v105 = vld [vmem:[%s4 + $0xb0] sm:$0xff]
  %v106 = vld [vmem:[%s4 + $0xb8] sm:$0xff]
  %v107 = vld [vmem:[%s4 + $0xc0] sm:$0xff]
  %v108 = vld [vmem:[%s4 + $0xc8] sm:$0xff]
  %v109 = vld [vmem:[%s4 + $0xd0] sm:$0xff]
  %v110 = vld [vmem:[%s4 + $0xd8] sm:$0xff]
  %v111 = vld [vmem:[%s4 + $0xe0] sm:$0xff]
  %v112 = vld [vmem:[%s4 + $0xe8] sm:$0xff]
  %v113 = vld [vmem:[%s4 + $0xf0] sm:$0xff]
  %v114 = vld [vmem:[%s4 + $0xf8] sm:$0xff]
  %v115 = vld [vmem:[%s5] sm:$0xff]
  %v116 = vld [vmem:[%s5 + $0x8] sm:$0xff]
  %v117 = vld [vmem:[%s5 + $0x10] sm:$0xff]
  %v118 = vld [vmem:[%s5 + $0x18] sm:$0xff]
  %v119 = vld [vmem:[%s5 + $0x20] sm:$0xff]
  %v120 = vld [vmem:[%s5 + $0x28] sm:$0xff]
  %v121 = vld [vmem:[%s5 + $0x30] sm:$0xff]
  %v122 = vld [vmem:[%s5 + $0x38] sm:$0xff]
  %v123 = vld [vmem:[%s5 + $0x40] sm:$0xff]
  %v124 = vld [vmem:[%s5 + $0x48] sm:$0xff]
  %v125 = vld [vmem:[%s5 + $0x50] sm:$0xff]
  %v126 = vld [vmem:[%s5 + $0x58] sm:$0xff]
  %v127 = vld [vmem:[%s5 + $0x60] sm:$0xff]
  %v128 = vld [vmem:[%s5 + $0x68] sm:$0xff]
  %v129 = vld [vmem:[%s5 + $0x70] sm:$0xff]
  %v130 = vld [vmem:[%s5 + $0x78] sm:$0xff]
  %v131 = vld [vmem:[%s5 + $0x80] sm:$0xff]
  %v132 = vld [vmem:[%s5 + $0x88] sm:$0xff]
  %v133 = vld [vmem:[%s5 + $0x90] sm:$0xff]
  %v134 = vld [vmem:[%s5 + $0x98] sm:$0xff]
  %v135 = vld [vmem:[%s5 + $0xa0] sm:$0xff]
  %v136 = vld [vmem:[%s5 + $0xa8] sm:$0xff]
  %v137 = vld [vmem:[%s5 + $0xb0] sm:$0xff]
  %v138 = vld [vmem:[%s5 + $0xb8] sm:$0xff]
  %v139 = vld [vmem:[%s5 + $0xc0] sm:$0xff]
  %v140 = vld [vmem:[%s5 + $0xc8] sm:$0xff]
  %v141 = vld [vmem:[%s5 + $0xd0] sm:$0xff]
  %v142 = vld [vmem:[%s5 + $0xd8] sm:$0xff]
  %v143 = vld [vmem:[%s5 + $0xe0] sm:$0xff]
  %v144 = vld [vmem:[%s5 + $0xe8] sm:$0xff]
  %v145 = vld [vmem:[%s5 + $0xf0] sm:$0xff]
  %v146 = vld [vmem:[%s5 + $0xf8] sm:$0xff]
  %v147 = vld [vmem:[%s5 + $0x100] sm:$0xff]
  %v148 = vld [vmem:[%s5 + $0x108] sm:$0xff]
  %v149 = vld [vmem:[%s5 + $0x110] sm:$0xff]
  %v150 = vld [vmem:[%s5 + $0x118] sm:$0xff]
  %v151 = vld [vmem:[%s5 + $0x120] sm:$0xff]
  %v152 = vld [vmem:[%s5 + $0x128] sm:$0xff]
  %v153 = vld [vmem:[%s5 + $0x130] sm:$0xff]
  %v154 = vld [vmem:[%s5 + $0x138] sm:$0xff]
  %v155 = vld [vmem:[%s5 + $0x140] sm:$0xff]
  %v156 = vld [vmem:[%s5 + $0x148] sm:$0xff]
  %v157 = vld [vmem:[%s5 + $0x150] sm:$0xff]
  %v158 = vld [vmem:[%s5 + $0x158] sm:$0xff]
  %v159 = vld [vmem:[%s5 + $0x160] sm:$0xff]
  %v160 = vld [vmem:[%s5 + $0x168] sm:$0xff]
  %v161 = vld [vmem:[%s5 + $0x170] sm:$0xff]
  %v162 = vld [vmem:[%s5 + $0x178] sm:$0xff]
  %v163 = vld [vmem:[%s5 + $0x180] sm:$0xff]
  %v164 = vld [vmem:[%s5 + $0x188] sm:$0xff]
  %v165 = vld [vmem:[%s5 + $0x190] sm:$0xff]
  %v166 = vld [vmem:[%s5 + $0x198] sm:$0xff]
  %v167 = vld [vmem:[%s5 + $0x1a0] sm:$0xff]
  %v168 = vld [vmem:[%s5 + $0x1a8] sm:$0xff]
  %v169 = vld [vmem:[%s5 + $0x1b0] sm:$0xff]
  %v170 = vld [vmem:[%s5 + $0x1b8] sm:$0xff]
  %v171 = vld [vmem:[%s5 + $0x1c0] sm:$0xff]
  %v172 = vld [vmem:[%s5 + $0x1c8] sm:$0xff]
  %v173 = vld [vmem:[%s5 + $0x1d0] sm:$0xff]
  %v174 = vld [vmem:[%s5 + $0x1d8] sm:$0xff]
  %v175 = vld [vmem:[%s5 + $0x1e0] sm:$0xff]
  %v176 = vld [vmem:[%s5 + $0x1e8] sm:$0xff]
  %v177 = vld [vmem:[%s5 + $0x1f0] sm:$0xff]
  %v178 = vld [vmem:[%s5 + $0x1f8] sm:$0xff]
  %v179 = vld [vmem:[%s5 + $0x200] sm:$0xff]
  %v180 = vld [vmem:[%s5 + $0x208] sm:$0xff]
  %v181 = vld [vmem:[%s5 + $0x210] sm:$0xff]
  %v182 = vld [vmem:[%s5 + $0x218] sm:$0xff]
  %v183 = vld [vmem:[%s5 + $0x220] sm:$0xff]
  %v184 = vld [vmem:[%s5 + $0x228] sm:$0xff]
  %v185 = vld [vmem:[%s5 + $0x230] sm:$0xff]
  %v186 = vld [vmem:[%s5 + $0x238] sm:$0xff]
  %v187 = vld [vmem:[%s5 + $0x240] sm:$0xff]
  %v188 = vld [vmem:[%s5 + $0x248] sm:$0xff]
  %v189 = vld [vmem:[%s5 + $0x250] sm:$0xff]
  %v190 = vld [vmem:[%s5 + $0x258] sm:$0xff]
  %v191 = vld [vmem:[%s5 + $0x260] sm:$0xff]
  %v192 = vld [vmem:[%s5 + $0x268] sm:$0xff]
  %v193 = vld [vmem:[%s5 + $0x270] sm:$0xff]
  %v194 = vld [vmem:[%s5 + $0x278] sm:$0xff]
  %v195 = vld [vmem:[%s5 + $0x280] sm:$0xff]
  %v196 = vld [vmem:[%s5 + $0x288] sm:$0xff]
  %v197 = vld [vmem:[%s5 + $0x290] sm:$0xff]
  %v198 = vld [vmem:[%s5 + $0x298] sm:$0xff]
  %v283 = vunpack.c.l.b16 %v115
  %v284 = vunpack.c.h.b16 %v115
  %v285 = vunpack.c.l.b16 %v116
  %v286 = vunpack.c.h.b16 %v116
  %v287 = vunpack.c.l.b16 %v117
  %v288 = vunpack.c.h.b16 %v117
  %v289 = vunpack.c.l.b16 %v118
  %v290 = vunpack.c.h.b16 %v118
  %v291 = vunpack.c.l.b16 %v119
  %v292 = vunpack.c.h.b16 %v119
  %v293 = vunpack.c.l.b16 %v120
  %v294 = vunpack.c.h.b16 %v120
  %v295 = vunpack.c.l.b16 %v121
  %v296 = vunpack.c.h.b16 %v121
  %v297 = vunpack.c.l.b16 %v122
  %v298 = vunpack.c.h.b16 %v122
  %v299 = vunpack.c.l.b16 %v123
  %v300 = vunpack.c.h.b16 %v123
  %v301 = vunpack.c.l.b16 %v124
  %v302 = vunpack.c.h.b16 %v124
  %v303 = vunpack.c.l.b16 %v125
  %v304 = vunpack.c.h.b16 %v125
  %v305 = vunpack.c.l.b16 %v126
  %v306 = vunpack.c.h.b16 %v126
  %v307 = vunpack.c.l.b16 %v127
  %v308 = vunpack.c.h.b16 %v127
  %v309 = vunpack.c.l.b16 %v128
  %v310 = vunpack.c.h.b16 %v128
  %v311 = vunpack.c.l.b16 %v129
  %v312 = vunpack.c.h.b16 %v129
  %v313 = vunpack.c.l.b16 %v130
  %v314 = vunpack.c.h.b16 %v130
  %v315 = vunpack.c.l.b16 %v131
  %v316 = vunpack.c.h.b16 %v131
  %v317 = vunpack.c.l.b16 %v132
  %v318 = vunpack.c.h.b16 %v132
  %v319 = vunpack.c.l.b16 %v133
  %v320 = vunpack.c.h.b16 %v133
  %v321 = vunpack.c.l.b16 %v134
  %v322 = vunpack.c.h.b16 %v134
  %v323 = vunpack.c.l.b16 %v135
  %v324 = vunpack.c.h.b16 %v135
  %v325 = vunpack.c.l.b16 %v136
  %v326 = vunpack.c.h.b16 %v136
  %v327 = vunpack.c.l.b16 %v137
  %v328 = vunpack.c.h.b16 %v137
  %v329 = vunpack.c.l.b16 %v138
  %v330 = vunpack.c.h.b16 %v138
  %v331 = vunpack.c.l.b16 %v139
  %v332 = vunpack.c.h.b16 %v139
  %v333 = vunpack.c.l.b16 %v140
  %v334 = vunpack.c.h.b16 %v140
  %v335 = vunpack.c.l.b16 %v141
  %v336 = vunpack.c.h.b16 %v141
  %v337 = vunpack.c.l.b16 %v142
  %v338 = vunpack.c.h.b16 %v142
  %v339 = vunpack.c.l.b16 %v143
  %v340 = vunpack.c.h.b16 %v143
  %v341 = vunpack.c.l.b16 %v144
  %v342 = vunpack.c.h.b16 %v144
  %v343 = vunpack.c.l.b16 %v145
  %v344 = vunpack.c.h.b16 %v145
  %v345 = vunpack.c.l.b16 %v146
  %v346 = vunpack.c.h.b16 %v146
  %v347 = vunpack.c.l.b16 %v147
  %v348 = vunpack.c.h.b16 %v147
  %v349 = vunpack.c.l.b16 %v148
  %v350 = vunpack.c.h.b16 %v148
  %v351 = vunpack.c.l.b16 %v149
  %v352 = vunpack.c.h.b16 %v149
  %v353 = vunpack.c.l.b16 %v150
  %v354 = vunpack.c.h.b16 %v150
  %v355 = vunpack.c.l.b16 %v151
  %v356 = vunpack.c.h.b16 %v151
  %v357 = vunpack.c.l.b16 %v152
  %v358 = vunpack.c.h.b16 %v152
  %v359 = vunpack.c.l.b16 %v153
  %v360 = vunpack.c.h.b16 %v153
  %v361 = vunpack.c.l.b16 %v154
  %v362 = vunpack.c.h.b16 %v154
  %v363 = vunpack.c.l.b16 %v155
  %v364 = vunpack.c.h.b16 %v155
  %v365 = vunpack.c.l.b16 %v156
  %v366 = vunpack.c.h.b16 %v156
  %v367 = vunpack.c.l.b16 %v157
  %v368 = vunpack.c.h.b16 %v157
  %v369 = vunpack.c.l.b16 %v158
  %v370 = vunpack.c.h.b16 %v158
  %v371 = vunpack.c.l.b16 %v159
  %v372 = vunpack.c.h.b16 %v159
  %v373 = vunpack.c.l.b16 %v160
  %v374 = vunpack.c.h.b16 %v160
  %v375 = vunpack.c.l.b16 %v161
  %v376 = vunpack.c.h.b16 %v161
  %v377 = vunpack.c.l.b16 %v162
  %v378 = vunpack.c.h.b16 %v162
  %v379 = vunpack.c.l.b16 %v163
  %v380 = vunpack.c.h.b16 %v163
  %v381 = vunpack.c.l.b16 %v164
  %v382 = vunpack.c.h.b16 %v164
  %v383 = vunpack.c.l.b16 %v165
  %v384 = vunpack.c.h.b16 %v165
  %v385 = vunpack.c.l.b16 %v166
  %v386 = vunpack.c.h.b16 %v166
  %v387 = vunpack.c.l.b16 %v167
  %v388 = vunpack.c.h.b16 %v167
  %v389 = vunpack.c.l.b16 %v168
  %v390 = vunpack.c.h.b16 %v168
  %v391 = vunpack.c.l.b16 %v169
  %v392 = vunpack.c.h.b16 %v169
  %v393 = vunpack.c.l.b16 %v170
  %v394 = vunpack.c.h.b16 %v170
  %v395 = vunpack.c.l.b16 %v171
  %v396 = vunpack.c.h.b16 %v171
  %v397 = vunpack.c.l.b16 %v172
  %v398 = vunpack.c.h.b16 %v172
  %v399 = vunpack.c.l.b16 %v173
  %v400 = vunpack.c.h.b16 %v173
  %v401 = vunpack.c.l.b16 %v174
  %v402 = vunpack.c.h.b16 %v174
  %v403 = vunpack.c.l.b16 %v175
  %v404 = vunpack.c.h.b16 %v175
  %v405 = vunpack.c.l.b16 %v176
  %v406 = vunpack.c.h.b16 %v176
  %v407 = vunpack.c.l.b16 %v177
  %v408 = vunpack.c.h.b16 %v177
  %v409 = vunpack.c.l.b16 %v178
  %v410 = vunpack.c.h.b16 %v178
  %v411 = vunpack.c.l.b16 %v179
  %v412 = vunpack.c.h.b16 %v179
  %v413 = vunpack.c.l.b16 %v180
  %v414 = vunpack.c.h.b16 %v180
  %v415 = vunpack.c.l.b16 %v181
  %v416 = vunpack.c.h.b16 %v181
  %v417 = vunpack.c.l.b16 %v182
  %v418 = vunpack.c.h.b16 %v182
  %v419 = vunpack.c.l.b16 %v183
  %v420 = vunpack.c.h.b16 %v183
  %v421 = vunpack.c.l.b16 %v184
  %v422 = vunpack.c.h.b16 %v184
  %v423 = vunpack.c.l.b16 %v185
  %v424 = vunpack.c.h.b16 %v185
  %v425 = vunpack.c.l.b16 %v186
  %v426 = vunpack.c.h.b16 %v186
  %v427 = vunpack.c.l.b16 %v187
  %v428 = vunpack.c.h.b16 %v187
  %v429 = vunpack.c.l.b16 %v188
  %v430 = vunpack.c.h.b16 %v188
  %v431 = vunpack.c.l.b16 %v189
  %v432 = vunpack.c.h.b16 %v189
  %v433 = vunpack.c.l.b16 %v190
  %v434 = vunpack.c.h.b16 %v190
  %v435 = vunpack.c.l.b16 %v191
  %v436 = vunpack.c.h.b16 %v191
  %v437 = vunpack.c.l.b16 %v192
  %v438 = vunpack.c.h.b16 %v192
  %v439 = vunpack.c.l.b16 %v193
  %v440 = vunpack.c.h.b16 %v193
  %v441 = vunpack.c.l.b16 %v194
  %v442 = vunpack.c.h.b16 %v194
  %v443 = vunpack.c.l.b16 %v195
  %v444 = vunpack.c.h.b16 %v195
  %v445 = vunpack.c.l.b16 %v196
  %v446 = vunpack.c.h.b16 %v196
  %v447 = vunpack.c.l.b16 %v197
  %v448 = vunpack.c.h.b16 %v197
  %v449 = vunpack.c.l.b16 %v198
  %v450 = vunpack.c.h.b16 %v198
  %v451 = vpack.c.b16 %v285, %v283
  %v452 = vpack.c.b16 %v286, %v284
  %v453 = vpack.c.b16 %v289, %v287
  %v454 = vpack.c.b16 %v290, %v288
  %v455 = vpack.c.b16 %v293, %v291
  %v456 = vpack.c.b16 %v294, %v292
  %v457 = vpack.c.b16 %v297, %v295
  %v458 = vpack.c.b16 %v298, %v296
  %v459 = vpack.c.b16 %v301, %v299
  %v460 = vpack.c.b16 %v302, %v300
  %v461 = vpack.c.b16 %v305, %v303
  %v462 = vpack.c.b16 %v306, %v304
  %v463 = vpack.c.b16 %v309, %v307
  %v464 = vpack.c.b16 %v310, %v308
  %v465 = vpack.c.b16 %v313, %v311
  %v466 = vpack.c.b16 %v314, %v312
  %v467 = vpack.c.b16 %v317, %v315
  %v468 = vpack.c.b16 %v318, %v316
  %v469 = vpack.c.b16 %v321, %v319
  %v470 = vpack.c.b16 %v322, %v320
  %v471 = vpack.c.b16 %v325, %v323
  %v472 = vpack.c.b16 %v326, %v324
  %v473 = vpack.c.b16 %v329, %v327
  %v474 = vpack.c.b16 %v330, %v328
  %v475 = vpack.c.b16 %v333, %v331
  %v476 = vpack.c.b16 %v334, %v332
  %v477 = vpack.c.b16 %v337, %v335
  %v478 = vpack.c.b16 %v338, %v336
  %v479 = vpack.c.b16 %v341, %v339
  %v480 = vpack.c.b16 %v342, %v340
  %v481 = vpack.c.b16 %v345, %v343
  %v482 = vpack.c.b16 %v346, %v344
  %v483 = vpack.c.b16 %v349, %v347
  %v484 = vpack.c.b16 %v350, %v348
  %v485 = vpack.c.b16 %v353, %v351
  %v486 = vpack.c.b16 %v354, %v352
  %v487 = vpack.c.b16 %v357, %v355
  %v488 = vpack.c.b16 %v358, %v356
  %v489 = vpack.c.b16 %v361, %v359
  %v490 = vpack.c.b16 %v362, %v360
  %v491 = vpack.c.b16 %v365, %v363
  %v492 = vpack.c.b16 %v366, %v364
  %v493 = vpack.c.b16 %v369, %v367
  %v494 = vpack.c.b16 %v370, %v368
  %v495 = vpack.c.b16 %v373, %v371
  %v496 = vpack.c.b16 %v374, %v372
  %v497 = vpack.c.b16 %v377, %v375
  %v498 = vpack.c.b16 %v378, %v376
  %v499 = vpack.c.b16 %v381, %v379
  %v500 = vpack.c.b16 %v382, %v380
  %v501 = vpack.c.b16 %v385, %v383
  %v502 = vpack.c.b16 %v386, %v384
  %v503 = vpack.c.b16 %v389, %v387
  %v504 = vpack.c.b16 %v390, %v388
  %v505 = vpack.c.b16 %v393, %v391
  %v506 = vpack.c.b16 %v394, %v392
  %v507 = vpack.c.b16 %v397, %v395
  %v508 = vpack.c.b16 %v398, %v396
  %v509 = vpack.c.b16 %v401, %v399
  %v510 = vpack.c.b16 %v402, %v400
  %v511 = vpack.c.b16 %v405, %v403
  %v512 = vpack.c.b16 %v406, %v404
  %v513 = vpack.c.b16 %v409, %v407
  %v514 = vpack.c.b16 %v410, %v408
  %v515 = vpack.c.b16 %v413, %v411
  %v516 = vpack.c.b16 %v414, %v412
  %v517 = vpack.c.b16 %v417, %v415
  %v518 = vpack.c.b16 %v418, %v416
  %v519 = vpack.c.b16 %v421, %v419
  %v520 = vpack.c.b16 %v422, %v420
  %v521 = vpack.c.b16 %v425, %v423
  %v522 = vpack.c.b16 %v426, %v424
  %v523 = vpack.c.b16 %v429, %v427
  %v524 = vpack.c.b16 %v430, %v428
  %v525 = vpack.c.b16 %v433, %v431
  %v526 = vpack.c.b16 %v434, %v432
  %v527 = vpack.c.b16 %v437, %v435
  %v528 = vpack.c.b16 %v438, %v436
  %v529 = vpack.c.b16 %v441, %v439
  %v530 = vpack.c.b16 %v442, %v440
  %v531 = vpack.c.b16 %v445, %v443
  %v532 = vpack.c.b16 %v446, %v444
  %v533 = vpack.c.b16 %v449, %v447
  %v534 = vpack.c.b16 %v450, %v448
  %v605 = vunpack.c.l.b16 %v38
  %v606 = vunpack.c.l.b16 %v39
  %v607 = vunpack.c.l.b16 %v40
  %v608 = vunpack.c.l.b16 %v41
  %v609 = vunpack.c.l.b16 %v42
  %v610 = vunpack.c.l.b16 %v43
  %v611 = vunpack.c.l.b16 %v44
  %v612 = vunpack.c.l.b16 %v45
  %v613 = vunpack.c.l.b16 %v46
  %v614 = vunpack.c.l.b16 %v47
  %v615 = vunpack.c.l.b16 %v48
  %v616 = vunpack.c.l.b16 %v49
  %v617 = vunpack.c.l.b16 %v50
  %v618 = vunpack.c.l.b16 %v51
  %v619 = vunpack.c.l.b16 %v52
  %v620 = vunpack.c.l.b16 %v53
  %v621 = vunpack.c.l.b16 %v54
  %v622 = vunpack.c.l.b16 %v55
  %v623 = vunpack.c.l.b16 %v56
  %v624 = vunpack.c.l.b16 %v57
  %v625 = vunpack.c.l.b16 %v58
  %v626 = vunpack.c.l.b16 %v59
  %v627 = vunpack.c.l.b16 %v60
  %v628 = vunpack.c.l.b16 %v61
  %v629 = vunpack.c.l.b16 %v62
  %v630 = vunpack.c.l.b16 %v63
  %v631 = vunpack.c.l.b16 %v64
  %v632 = vunpack.c.l.b16 %v65
  %v633 = vpack.c.b16 %v606, %v605
  %v634 = vpack.c.b16 %v608, %v607
  %v635 = vpack.c.b16 %v610, %v609
  %v636 = vpack.c.b16 %v612, %v611
  %v637 = vpack.c.b16 %v614, %v613
  %v638 = vpack.c.b16 %v616, %v615
  %v639 = vpack.c.b16 %v618, %v617
  %v640 = vpack.c.b16 %v620, %v619
  %v641 = vpack.c.b16 %v622, %v621
  %v642 = vpack.c.b16 %v624, %v623
  %v643 = vpack.c.b16 %v626, %v625
  %v644 = vpack.c.b16 %v628, %v627
  %v645 = vpack.c.b16 %v630, %v629
  %v646 = vpack.c.b16 %v632, %v631
  %vm661 = vcmask 785408
  %v663 = vsel %vm661, %v452, 0
  %v666 = vsel %vm661, %v454, 0
  %v669 = vsel %vm661, %v456, 0
  %v672 = vsel %vm661, %v458, 0
  %v675 = vsel %vm661, %v460, 0
  %v678 = vsel %vm661, %v462, 0
  %v681 = vsel %vm661, %v464, 0
  %v684 = vsel %vm661, %v466, 0
  %v687 = vsel %vm661, %v468, 0
  %v690 = vsel %vm661, %v470, 0
  %v693 = vsel %vm661, %v472, 0
  %v696 = vsel %vm661, %v474, 0
  %v699 = vsel %vm661, %v476, 0
  %v702 = vsel %vm661, %v478, 0
  %v705 = vsel %vm661, %v480, 0
  %v708 = vsel %vm661, %v482, 0
  %v711 = vsel %vm661, %v484, 0
  %v714 = vsel %vm661, %v486, 0
  %v717 = vsel %vm661, %v488, 0
  %v720 = vsel %vm661, %v490, 0
  %v723 = vsel %vm661, %v492, 0
  %v726 = vsel %vm661, %v494, 0
  %v729 = vsel %vm661, %v496, 0
  %v732 = vsel %vm661, %v498, 0
  %v735 = vsel %vm661, %v500, 0
  %v738 = vsel %vm661, %v502, 0
  %v741 = vsel %vm661, %v504, 0
  %v744 = vsel %vm661, %v506, 0
  %v747 = vsel %vm661, %v508, 0
  %v750 = vsel %vm661, %v510, 0
  %v753 = vsel %vm661, %v512, 0
  %v756 = vsel %vm661, %v514, 0
  %v759 = vsel %vm661, %v516, 0
  %v762 = vsel %vm661, %v518, 0
  %v765 = vsel %vm661, %v520, 0
  %v768 = vsel %vm661, %v522, 0
  %v771 = vsel %vm661, %v524, 0
  %v774 = vsel %vm661, %v526, 0
  %v777 = vsel %vm661, %v528, 0
  %v780 = vsel %vm661, %v530, 0
  %v783 = vsel %vm661, %v532, 0
  %v786 = vsel %vm661, %v534, 0
  %788 = vmatprep.subr.bf16.mxu0 0
  %789 = vmatpush1.bf16.msra.mxu0 %v640
  %790 = vmatprep.subr.bf16.mxu0 0
  %791 = vmatpush1.bf16.msra.mxu0 %v639
  %792 = vmatprep.subr.bf16.mxu0 0
  %793 = vmatpush1.bf16.msra.mxu0 %v638
  %794 = vmatprep.subr.bf16.mxu0 0
  %795 = vmatpush1.bf16.msra.mxu0 %v637
  %796 = vmatprep.subr.bf16.mxu0 0
  %797 = vmatpush1.bf16.msra.mxu0 %v636
  %798 = vmatprep.subr.bf16.mxu0 0
  %799 = vmatpush1.bf16.msra.mxu0 %v635
  %800 = vmatprep.subr.bf16.mxu0 0
  %801 = vmatpush1.bf16.msra.mxu0 %v634
  %802 = vmatprep.subr.bf16.mxu0 0
  %803 = vmatpush1.bf16.msra.mxu0 %v633
  %804 = vmatprep.subr.bf16.mxu0 0
  %805 = vmatpush2.bf16.msra.mxu0 0
  %806 = vmatprep.subr.bf16.mxu0 0
  %807 = vmatpush2.bf16.msra.mxu0 0
  %808 = vmatprep.subr.bf16.mxu0 0
  %809 = vmatpush2.bf16.msra.mxu0 %v646
  %810 = vmatprep.subr.bf16.mxu0 0
  %811 = vmatpush2.bf16.msra.mxu0 %v645
  %812 = vmatprep.subr.bf16.mxu0 0
  %813 = vmatpush2.bf16.msra.mxu0 %v644
  %814 = vmatprep.subr.bf16.mxu0 0
  %815 = vmatpush2.bf16.msra.mxu0 %v643
  %816 = vmatprep.subr.bf16.mxu0 0
  %817 = vmatpush2.bf16.msra.mxu0 %v642
  %818 = vmatprep.subr.bf16.mxu0 0
  %819 = vmatpush2.bf16.msra.mxu0 %v641
  %820 = vmatprep.mubr.bf16.mxu0 %v663
  %821 = vmatmul.mubr.bf16.gmra.mxu0 %v451
  %v822 = vpop.f32.mrf.mxu0
  %v823 = vadd.f32 0.0, %v822
  %v824 = vpop.f32.mrf.mxu0
  %v825 = vpop.f32.mrf.mxu0
  %v826 = vadd.f32 0.0, %v825
  %v827 = vpop.f32.mrf.mxu0
  %828 = vmatprep.mubr.bf16.mxu0 %v666
  %829 = vmatmul.mubr.bf16.gmra.mxu0 %v453
  %v830 = vpop.f32.mrf.mxu0
  %v831 = vadd.f32 0.0, %v830
  %v832 = vpop.f32.mrf.mxu0
  %v833 = vpop.f32.mrf.mxu0
  %v834 = vadd.f32 0.0, %v833
  %v835 = vpop.f32.mrf.mxu0
  %836 = vmatprep.mubr.bf16.mxu0 %v669
  %837 = vmatmul.mubr.bf16.gmra.mxu0 %v455
  %v838 = vpop.f32.mrf.mxu0
  %v839 = vadd.f32 0.0, %v838
  %v840 = vpop.f32.mrf.mxu0
  %v841 = vpop.f32.mrf.mxu0
  %v842 = vadd.f32 0.0, %v841
  %v843 = vpop.f32.mrf.mxu0
  %844 = vmatprep.mubr.bf16.mxu0 %v672
  %845 = vmatmul.mubr.bf16.gmra.mxu0 %v457
  %v846 = vpop.f32.mrf.mxu0
  %v847 = vadd.f32 0.0, %v846
  %v848 = vpop.f32.mrf.mxu0
  %v849 = vpop.f32.mrf.mxu0
  %v850 = vadd.f32 0.0, %v849
  %v851 = vpop.f32.mrf.mxu0
  %852 = vmatprep.mubr.bf16.mxu0 %v675
  %853 = vmatmul.mubr.bf16.gmra.mxu0 %v459
  %v854 = vpop.f32.mrf.mxu0
  %v855 = vadd.f32 0.0, %v854
  %v856 = vpop.f32.mrf.mxu0
  %v857 = vpop.f32.mrf.mxu0
  %v858 = vadd.f32 0.0, %v857
  %v859 = vpop.f32.mrf.mxu0
  %860 = vmatprep.mubr.bf16.mxu0 %v678
  %861 = vmatmul.mubr.bf16.gmra.mxu0 %v461
  %v862 = vpop.f32.mrf.mxu0
  %v863 = vadd.f32 0.0, %v862
  %v864 = vpop.f32.mrf.mxu0
  %v865 = vpop.f32.mrf.mxu0
  %v866 = vadd.f32 0.0, %v865
  %v867 = vpop.f32.mrf.mxu0
  %868 = vmatprep.mubr.bf16.mxu0 %v681
  %869 = vmatmul.mubr.bf16.gmra.mxu0 %v463
  %v870 = vpop.f32.mrf.mxu0
  %v871 = vadd.f32 0.0, %v870
  %v872 = vpop.f32.mrf.mxu0
  %v873 = vpop.f32.mrf.mxu0
  %v874 = vadd.f32 0.0, %v873
  %v875 = vpop.f32.mrf.mxu0
  %876 = vmatprep.mubr.bf16.mxu0 %v684
  %877 = vmatmul.mubr.bf16.gmra.mxu0 %v465
  %v878 = vpop.f32.mrf.mxu0
  %v879 = vadd.f32 0.0, %v878
  %v880 = vpop.f32.mrf.mxu0
  %v881 = vpop.f32.mrf.mxu0
  %v882 = vadd.f32 0.0, %v881
  %v883 = vpop.f32.mrf.mxu0
  %884 = vmatprep.mubr.bf16.mxu0 %v687
  %885 = vmatmul.mubr.bf16.gmra.mxu0 %v467
  %v886 = vpop.f32.mrf.mxu0
  %v887 = vadd.f32 0.0, %v886
  %v888 = vpop.f32.mrf.mxu0
  %v889 = vpop.f32.mrf.mxu0
  %v890 = vadd.f32 0.0, %v889
  %v891 = vpop.f32.mrf.mxu0
  %892 = vmatprep.mubr.bf16.mxu0 %v690
  %893 = vmatmul.mubr.bf16.gmra.mxu0 %v469
  %v894 = vpop.f32.mrf.mxu0
  %v895 = vadd.f32 0.0, %v894
  %v896 = vpop.f32.mrf.mxu0
  %v897 = vpop.f32.mrf.mxu0
  %v898 = vadd.f32 0.0, %v897
  %v899 = vpop.f32.mrf.mxu0
  %900 = vmatprep.mubr.bf16.mxu0 %v693
  %901 = vmatmul.mubr.bf16.gmra.mxu0 %v471
  %v902 = vpop.f32.mrf.mxu0
  %v903 = vadd.f32 0.0, %v902
  %v904 = vpop.f32.mrf.mxu0
  %v905 = vpop.f32.mrf.mxu0
  %v906 = vadd.f32 0.0, %v905
  %v907 = vpop.f32.mrf.mxu0
  %908 = vmatprep.mubr.bf16.mxu0 %v696
  %909 = vmatmul.mubr.bf16.gmra.mxu0 %v473
  %v910 = vpop.f32.mrf.mxu0
  %v911 = vadd.f32 0.0, %v910
  %v912 = vpop.f32.mrf.mxu0
  %v913 = vpop.f32.mrf.mxu0
  %v914 = vadd.f32 0.0, %v913
  %v915 = vpop.f32.mrf.mxu0
  %916 = vmatprep.mubr.bf16.mxu0 %v699
  %917 = vmatmul.mubr.bf16.gmra.mxu0 %v475
  %v918 = vpop.f32.mrf.mxu0
  %v919 = vadd.f32 0.0, %v918
  %v920 = vpop.f32.mrf.mxu0
  %v921 = vpop.f32.mrf.mxu0
  %v922 = vadd.f32 0.0, %v921
  %v923 = vpop.f32.mrf.mxu0
  %924 = vmatprep.mubr.bf16.mxu0 %v702
  %925 = vmatmul.mubr.bf16.gmra.mxu0 %v477
  %v926 = vpop.f32.mrf.mxu0
  %v927 = vadd.f32 0.0, %v926
  %v928 = vpop.f32.mrf.mxu0
  %v929 = vpop.f32.mrf.mxu0
  %v930 = vadd.f32 0.0, %v929
  %v931 = vpop.f32.mrf.mxu0
  %932 = vmatprep.mubr.bf16.mxu0 %v705
  %933 = vmatmul.mubr.bf16.gmra.mxu0 %v479
  %v934 = vpop.f32.mrf.mxu0
  %v935 = vadd.f32 0.0, %v934
  %v936 = vpop.f32.mrf.mxu0
  %v937 = vpop.f32.mrf.mxu0
  %v938 = vadd.f32 0.0, %v937
  %v939 = vpop.f32.mrf.mxu0
  %940 = vmatprep.mubr.bf16.mxu0 %v708
  %941 = vmatmul.mubr.bf16.gmra.mxu0 %v481
  %v942 = vpop.f32.mrf.mxu0
  %v943 = vadd.f32 0.0, %v942
  %v944 = vpop.f32.mrf.mxu0
  %v945 = vpop.f32.mrf.mxu0
  %v946 = vadd.f32 0.0, %v945
  %v947 = vpop.f32.mrf.mxu0
  %948 = vmatprep.mubr.bf16.mxu0 %v711
  %949 = vmatmul.mubr.bf16.gmra.mxu0 %v483
  %v950 = vpop.f32.mrf.mxu0
  %v951 = vadd.f32 0.0, %v950
  %v952 = vpop.f32.mrf.mxu0
  %v953 = vpop.f32.mrf.mxu0
  %v954 = vadd.f32 0.0, %v953
  %v955 = vpop.f32.mrf.mxu0
  %956 = vmatprep.mubr.bf16.mxu0 %v714
  %957 = vmatmul.mubr.bf16.gmra.mxu0 %v485
  %v958 = vpop.f32.mrf.mxu0
  %v959 = vadd.f32 0.0, %v958
  %v960 = vpop.f32.mrf.mxu0
  %v961 = vpop.f32.mrf.mxu0
  %v962 = vadd.f32 0.0, %v961
  %v963 = vpop.f32.mrf.mxu0
  %964 = vmatprep.mubr.bf16.mxu0 %v717
  %965 = vmatmul.mubr.bf16.gmra.mxu0 %v487
  %v966 = vpop.f32.mrf.mxu0
  %v967 = vadd.f32 0.0, %v966
  %v968 = vpop.f32.mrf.mxu0
  %v969 = vpop.f32.mrf.mxu0
  %v970 = vadd.f32 0.0, %v969
  %v971 = vpop.f32.mrf.mxu0
  %972 = vmatprep.mubr.bf16.mxu0 %v720
  %973 = vmatmul.mubr.bf16.gmra.mxu0 %v489
  %v974 = vpop.f32.mrf.mxu0
  %v975 = vadd.f32 0.0, %v974
  %v976 = vpop.f32.mrf.mxu0
  %v977 = vpop.f32.mrf.mxu0
  %v978 = vadd.f32 0.0, %v977
  %v979 = vpop.f32.mrf.mxu0
  %980 = vmatprep.mubr.bf16.mxu0 %v723
  %981 = vmatmul.mubr.bf16.gmra.mxu0 %v491
  %v982 = vpop.f32.mrf.mxu0
  %v983 = vadd.f32 0.0, %v982
  %v984 = vpop.f32.mrf.mxu0
  %v985 = vpop.f32.mrf.mxu0
  %v986 = vadd.f32 0.0, %v985
  %v987 = vpop.f32.mrf.mxu0
  %988 = vmatprep.mubr.bf16.mxu0 %v726
  %989 = vmatmul.mubr.bf16.gmra.mxu0 %v493
  %v990 = vpop.f32.mrf.mxu0
  %v991 = vadd.f32 0.0, %v990
  %v992 = vpop.f32.mrf.mxu0
  %v993 = vpop.f32.mrf.mxu0
  %v994 = vadd.f32 0.0, %v993
  %v995 = vpop.f32.mrf.mxu0
  %996 = vmatprep.mubr.bf16.mxu0 %v729
  %997 = vmatmul.mubr.bf16.gmra.mxu0 %v495
  %v998 = vpop.f32.mrf.mxu0
  %v999 = vadd.f32 0.0, %v998
  %v1000 = vpop.f32.mrf.mxu0
  %v1001 = vpop.f32.mrf.mxu0
  %v1002 = vadd.f32 0.0, %v1001
  %v1003 = vpop.f32.mrf.mxu0
  %1004 = vmatprep.mubr.bf16.mxu0 %v732
  %1005 = vmatmul.mubr.bf16.gmra.mxu0 %v497
  %v1006 = vpop.f32.mrf.mxu0
  %v1007 = vadd.f32 0.0, %v1006
  %v1008 = vpop.f32.mrf.mxu0
  %v1009 = vpop.f32.mrf.mxu0
  %v1010 = vadd.f32 0.0, %v1009
  %v1011 = vpop.f32.mrf.mxu0
  %1012 = vmatprep.mubr.bf16.mxu0 %v735
  %1013 = vmatmul.mubr.bf16.gmra.mxu0 %v499
  %v1014 = vpop.f32.mrf.mxu0
  %v1015 = vadd.f32 0.0, %v1014
  %v1016 = vpop.f32.mrf.mxu0
  %v1017 = vpop.f32.mrf.mxu0
  %v1018 = vadd.f32 0.0, %v1017
  %v1019 = vpop.f32.mrf.mxu0
  %1020 = vmatprep.mubr.bf16.mxu0 %v738
  %1021 = vmatmul.mubr.bf16.gmra.mxu0 %v501
  %v1022 = vpop.f32.mrf.mxu0
  %v1023 = vadd.f32 0.0, %v1022
  %v1024 = vpop.f32.mrf.mxu0
  %v1025 = vpop.f32.mrf.mxu0
  %v1026 = vadd.f32 0.0, %v1025
  %v1027 = vpop.f32.mrf.mxu0
  %1028 = vmatprep.mubr.bf16.mxu0 %v741
  %1029 = vmatmul.mubr.bf16.gmra.mxu0 %v503
  %v1030 = vpop.f32.mrf.mxu0
  %v1031 = vadd.f32 0.0, %v1030
  %v1032 = vpop.f32.mrf.mxu0
  %v1033 = vpop.f32.mrf.mxu0
  %v1034 = vadd.f32 0.0, %v1033
  %v1035 = vpop.f32.mrf.mxu0
  %1036 = vmatprep.mubr.bf16.mxu0 %v744
  %1037 = vmatmul.mubr.bf16.gmra.mxu0 %v505
  %v1038 = vpop.f32.mrf.mxu0
  %v1039 = vadd.f32 0.0, %v1038
  %v1040 = vpop.f32.mrf.mxu0
  %v1041 = vpop.f32.mrf.mxu0
  %v1042 = vadd.f32 0.0, %v1041
  %v1043 = vpop.f32.mrf.mxu0
  %1044 = vmatprep.mubr.bf16.mxu0 %v747
  %1045 = vmatmul.mubr.bf16.gmra.mxu0 %v507
  %v1046 = vpop.f32.mrf.mxu0
  %v1047 = vadd.f32 0.0, %v1046
  %v1048 = vpop.f32.mrf.mxu0
  %v1049 = vpop.f32.mrf.mxu0
  %v1050 = vadd.f32 0.0, %v1049
  %v1051 = vpop.f32.mrf.mxu0
  %1052 = vmatprep.mubr.bf16.mxu0 %v750
  %1053 = vmatmul.mubr.bf16.gmra.mxu0 %v509
  %v1054 = vpop.f32.mrf.mxu0
  %v1055 = vadd.f32 0.0, %v1054
  %v1056 = vpop.f32.mrf.mxu0
  %v1057 = vpop.f32.mrf.mxu0
  %v1058 = vadd.f32 0.0, %v1057
  %v1059 = vpop.f32.mrf.mxu0
  %1060 = vmatprep.mubr.bf16.mxu0 %v753
  %1061 = vmatmul.mubr.bf16.gmra.mxu0 %v511
  %v1062 = vpop.f32.mrf.mxu0
  %v1063 = vadd.f32 0.0, %v1062
  %v1064 = vpop.f32.mrf.mxu0
  %v1065 = vpop.f32.mrf.mxu0
  %v1066 = vadd.f32 0.0, %v1065
  %v1067 = vpop.f32.mrf.mxu0
  %1068 = vmatprep.mubr.bf16.mxu0 %v756
  %1069 = vmatmul.mubr.bf16.gmra.mxu0 %v513
  %v1070 = vpop.f32.mrf.mxu0
  %v1071 = vadd.f32 0.0, %v1070
  %v1072 = vpop.f32.mrf.mxu0
  %v1073 = vpop.f32.mrf.mxu0
  %v1074 = vadd.f32 0.0, %v1073
  %v1075 = vpop.f32.mrf.mxu0
  %1076 = vmatprep.mubr.bf16.mxu0 %v759
  %1077 = vmatmul.mubr.bf16.gmra.mxu0 %v515
  %v1078 = vpop.f32.mrf.mxu0
  %v1079 = vadd.f32 0.0, %v1078
  %v1080 = vpop.f32.mrf.mxu0
  %v1081 = vpop.f32.mrf.mxu0
  %v1082 = vadd.f32 0.0, %v1081
  %v1083 = vpop.f32.mrf.mxu0
  %1084 = vmatprep.mubr.bf16.mxu0 %v762
  %1085 = vmatmul.mubr.bf16.gmra.mxu0 %v517
  %v1086 = vpop.f32.mrf.mxu0
  %v1087 = vadd.f32 0.0, %v1086
  %v1088 = vpop.f32.mrf.mxu0
  %v1089 = vpop.f32.mrf.mxu0
  %v1090 = vadd.f32 0.0, %v1089
  %v1091 = vpop.f32.mrf.mxu0
  %1092 = vmatprep.mubr.bf16.mxu0 %v765
  %1093 = vmatmul.mubr.bf16.gmra.mxu0 %v519
  %v1094 = vpop.f32.mrf.mxu0
  %v1095 = vadd.f32 0.0, %v1094
  %v1096 = vpop.f32.mrf.mxu0
  %v1097 = vpop.f32.mrf.mxu0
  %v1098 = vadd.f32 0.0, %v1097
  %v1099 = vpop.f32.mrf.mxu0
  %1100 = vmatprep.mubr.bf16.mxu0 %v768
  %1101 = vmatmul.mubr.bf16.gmra.mxu0 %v521
  %v1102 = vpop.f32.mrf.mxu0
  %v1103 = vadd.f32 0.0, %v1102
  %v1104 = vpop.f32.mrf.mxu0
  %v1105 = vpop.f32.mrf.mxu0
  %v1106 = vadd.f32 0.0, %v1105
  %v1107 = vpop.f32.mrf.mxu0
  %1108 = vmatprep.mubr.bf16.mxu0 %v771
  %1109 = vmatmul.mubr.bf16.gmra.mxu0 %v523
  %v1110 = vpop.f32.mrf.mxu0
  %v1111 = vadd.f32 0.0, %v1110
  %v1112 = vpop.f32.mrf.mxu0
  %v1113 = vpop.f32.mrf.mxu0
  %v1114 = vadd.f32 0.0, %v1113
  %v1115 = vpop.f32.mrf.mxu0
  %1116 = vmatprep.mubr.bf16.mxu0 %v774
  %1117 = vmatmul.mubr.bf16.gmra.mxu0 %v525
  %v1118 = vpop.f32.mrf.mxu0
  %v1119 = vadd.f32 0.0, %v1118
  %v1120 = vpop.f32.mrf.mxu0
  %v1121 = vpop.f32.mrf.mxu0
  %v1122 = vadd.f32 0.0, %v1121
  %v1123 = vpop.f32.mrf.mxu0
  %1124 = vmatprep.mubr.bf16.mxu0 %v777
  %1125 = vmatmul.mubr.bf16.gmra.mxu0 %v527
  %v1126 = vpop.f32.mrf.mxu0
  %v1127 = vadd.f32 0.0, %v1126
  %v1128 = vpop.f32.mrf.mxu0
  %v1129 = vpop.f32.mrf.mxu0
  %v1130 = vadd.f32 0.0, %v1129
  %v1131 = vpop.f32.mrf.mxu0
  %1132 = vmatprep.mubr.bf16.mxu0 %v780
  %1133 = vmatmul.mubr.bf16.gmra.mxu0 %v529
  %v1134 = vpop.f32.mrf.mxu0
  %v1135 = vadd.f32 0.0, %v1134
  %v1136 = vpop.f32.mrf.mxu0
  %v1137 = vpop.f32.mrf.mxu0
  %v1138 = vadd.f32 0.0, %v1137
  %v1139 = vpop.f32.mrf.mxu0
  %1140 = vmatprep.mubr.bf16.mxu0 %v783
  %1141 = vmatmul.mubr.bf16.gmra.mxu0 %v531
  %v1142 = vpop.f32.mrf.mxu0
  %v1143 = vadd.f32 0.0, %v1142
  %v1144 = vpop.f32.mrf.mxu0
  %v1145 = vpop.f32.mrf.mxu0
  %v1146 = vadd.f32 0.0, %v1145
  %v1147 = vpop.f32.mrf.mxu0
  %1148 = vmatprep.mubr.bf16.mxu0 %v786
  %1149 = vmatmul.mubr.bf16.gmra.mxu0 %v533
  %v1150 = vpop.f32.mrf.mxu0
  %v1151 = vadd.f32 0.0, %v1150
  %v1152 = vpop.f32.mrf.mxu0
  %v1153 = vpop.f32.mrf.mxu0
  %v1154 = vadd.f32 0.0, %v1153
  %v1155 = vpop.f32.mrf.mxu0
  %1156 = vdwg.mxu0
  %v1157 = vpack.c.bf16 %v826, %v823
  %v1158 = vpack.c.bf16 %v834, %v831
  %v1159 = vpack.c.bf16 %v842, %v839
  %v1160 = vpack.c.bf16 %v850, %v847
  %v1161 = vpack.c.bf16 %v858, %v855
  %v1162 = vpack.c.bf16 %v866, %v863
  %v1163 = vpack.c.bf16 %v874, %v871
  %v1164 = vpack.c.bf16 %v882, %v879
  %v1165 = vpack.c.bf16 %v890, %v887
  %v1166 = vpack.c.bf16 %v898, %v895
  %v1167 = vpack.c.bf16 %v906, %v903
  %v1168 = vpack.c.bf16 %v914, %v911
  %v1169 = vpack.c.bf16 %v922, %v919
  %v1170 = vpack.c.bf16 %v930, %v927
  %v1171 = vpack.c.bf16 %v938, %v935
  %v1172 = vpack.c.bf16 %v946, %v943
  %v1173 = vpack.c.bf16 %v954, %v951
  %v1174 = vpack.c.bf16 %v962, %v959
  %v1175 = vpack.c.bf16 %v970, %v967
  %v1176 = vpack.c.bf16 %v978, %v975
  %v1177 = vpack.c.bf16 %v986, %v983
  %v1178 = vpack.c.bf16 %v994, %v991
  %v1179 = vpack.c.bf16 %v1002, %v999
  %v1180 = vpack.c.bf16 %v1010, %v1007
  %v1181 = vpack.c.bf16 %v1018, %v1015
  %v1182 = vpack.c.bf16 %v1026, %v1023
  %v1183 = vpack.c.bf16 %v1034, %v1031
  %v1184 = vpack.c.bf16 %v1042, %v1039
  %v1185 = vpack.c.bf16 %v1050, %v1047
  %v1186 = vpack.c.bf16 %v1058, %v1055
  %v1187 = vpack.c.bf16 %v1066, %v1063
  %v1188 = vpack.c.bf16 %v1074, %v1071
  %v1189 = vpack.c.bf16 %v1082, %v1079
  %v1190 = vpack.c.bf16 %v1090, %v1087
  %v1191 = vpack.c.bf16 %v1098, %v1095
  %v1192 = vpack.c.bf16 %v1106, %v1103
  %v1193 = vpack.c.bf16 %v1114, %v1111
  %v1194 = vpack.c.bf16 %v1122, %v1119
  %v1195 = vpack.c.bf16 %v1130, %v1127
  %v1196 = vpack.c.bf16 %v1138, %v1135
  %v1197 = vpack.c.bf16 %v1146, %v1143
  %v1198 = vpack.c.bf16 %v1154, %v1151
  %v1213 = vunpack.c.l.b16 %v24
  %v1214 = vunpack.c.h.b16 %v24
  %v1215 = vunpack.c.l.b16 %v25
  %v1216 = vunpack.c.h.b16 %v25
  %v1217 = vunpack.c.l.b16 %v26
  %v1218 = vunpack.c.h.b16 %v26
  %v1219 = vunpack.c.l.b16 %v27
  %v1220 = vunpack.c.h.b16 %v27
  %v1221 = vunpack.c.l.b16 %v28
  %v1222 = vunpack.c.h.b16 %v28
  %v1223 = vunpack.c.l.b16 %v29
  %v1224 = vunpack.c.h.b16 %v29
  %v1225 = vunpack.c.l.b16 %v30
  %v1226 = vunpack.c.h.b16 %v30
  %v1227 = vunpack.c.l.b16 %v31
  %v1228 = vunpack.c.h.b16 %v31
  %v1229 = vunpack.c.l.b16 %v32
  %v1230 = vunpack.c.h.b16 %v32
  %v1231 = vunpack.c.l.b16 %v33
  %v1232 = vunpack.c.h.b16 %v33
  %v1233 = vunpack.c.l.b16 %v34
  %v1234 = vunpack.c.h.b16 %v34
  %v1235 = vunpack.c.l.b16 %v35
  %v1236 = vunpack.c.h.b16 %v35
  %v1237 = vunpack.c.l.b16 %v36
  %v1238 = vunpack.c.h.b16 %v36
  %v1239 = vunpack.c.l.b16 %v37
  %v1240 = vunpack.c.h.b16 %v37
  %v1241 = vpack.c.b16 %v1215, %v1213
  %v1242 = vpack.c.b16 %v1216, %v1214
  %v1243 = vpack.c.b16 %v1219, %v1217
  %v1244 = vpack.c.b16 %v1220, %v1218
  %v1245 = vpack.c.b16 %v1223, %v1221
  %v1246 = vpack.c.b16 %v1224, %v1222
  %v1247 = vpack.c.b16 %v1227, %v1225
  %v1248 = vpack.c.b16 %v1228, %v1226
  %v1249 = vpack.c.b16 %v1231, %v1229
  %v1250 = vpack.c.b16 %v1232, %v1230
  %v1251 = vpack.c.b16 %v1235, %v1233
  %v1252 = vpack.c.b16 %v1236, %v1234
  %v1253 = vpack.c.b16 %v1239, %v1237
  %v1254 = vpack.c.b16 %v1240, %v1238
  %v1263 = vsel %vm661, %v1242, 0
  %v1266 = vsel %vm661, %v1244, 0
  %v1269 = vsel %vm661, %v1246, 0
  %v1272 = vsel %vm661, %v1248, 0
  %v1275 = vsel %vm661, %v1250, 0
  %v1278 = vsel %vm661, %v1252, 0
  %v1281 = vsel %vm661, %v1254, 0
  %1283 = vmatprep.subr.bf16.mxu0 0
  %1284 = vmatpush1.bf16.msra.mxu0 %v1164
  %1285 = vmatprep.subr.bf16.mxu0 0
  %1286 = vmatpush1.bf16.msra.mxu0 %v1163
  %1287 = vmatprep.subr.bf16.mxu0 0
  %1288 = vmatpush1.bf16.msra.mxu0 %v1162
  %1289 = vmatprep.subr.bf16.mxu0 0
  %1290 = vmatpush1.bf16.msra.mxu0 %v1161
  %1291 = vmatprep.subr.bf16.mxu0 0
  %1292 = vmatpush1.bf16.msra.mxu0 %v1160
  %1293 = vmatprep.subr.bf16.mxu0 0
  %1294 = vmatpush1.bf16.msra.mxu0 %v1159
  %1295 = vmatprep.subr.bf16.mxu0 0
  %1296 = vmatpush1.bf16.msra.mxu0 %v1158
  %1297 = vmatprep.subr.bf16.mxu0 0
  %1298 = vmatpush1.bf16.msra.mxu0 %v1157
  %1299 = vmatprep.subr.bf16.mxu0 0
  %1300 = vmatpush2.bf16.msra.mxu0 0
  %1301 = vmatprep.subr.bf16.mxu0 0
  %1302 = vmatpush2.bf16.msra.mxu0 0
  %1303 = vmatprep.subr.bf16.mxu0 0
  %1304 = vmatpush2.bf16.msra.mxu0 %v1170
  %1305 = vmatprep.subr.bf16.mxu0 0
  %1306 = vmatpush2.bf16.msra.mxu0 %v1169
  %1307 = vmatprep.subr.bf16.mxu0 0
  %1308 = vmatpush2.bf16.msra.mxu0 %v1168
  %1309 = vmatprep.subr.bf16.mxu0 0
  %1310 = vmatpush2.bf16.msra.mxu0 %v1167
  %1311 = vmatprep.subr.bf16.mxu0 0
  %1312 = vmatpush2.bf16.msra.mxu0 %v1166
  %1313 = vmatprep.subr.bf16.mxu0 0
  %1314 = vmatpush2.bf16.msra.mxu0 %v1165
  %1315 = vmatprep.mubr.bf16.mxu0 %v1263
  %1316 = vmatmul.mubr.bf16.gmra.mxu0 %v1241
  %v1317 = vpop.f32.mrf.mxu0
  %v1318 = vadd.f32 0.0, %v1317
  %v1319 = vpop.f32.mrf.mxu0
  %v1320 = vpop.f32.mrf.mxu0
  %v1321 = vadd.f32 0.0, %v1320
  %v1322 = vpop.f32.mrf.mxu0
  %1323 = vmatprep.mubr.bf16.mxu0 %v1266
  %1324 = vmatmul.mubr.bf16.gmra.mxu0 %v1243
  %v1325 = vpop.f32.mrf.mxu0
  %v1326 = vadd.f32 0.0, %v1325
  %v1327 = vpop.f32.mrf.mxu0
  %v1328 = vpop.f32.mrf.mxu0
  %v1329 = vadd.f32 0.0, %v1328
  %v1330 = vpop.f32.mrf.mxu0
  %1331 = vmatprep.mubr.bf16.mxu0 %v1269
  %1332 = vmatmul.mubr.bf16.gmra.mxu0 %v1245
  %v1333 = vpop.f32.mrf.mxu0
  %v1334 = vadd.f32 0.0, %v1333
  %v1335 = vpop.f32.mrf.mxu0
  %v1336 = vpop.f32.mrf.mxu0
  %v1337 = vadd.f32 0.0, %v1336
  %v1338 = vpop.f32.mrf.mxu0
  %1339 = vmatprep.mubr.bf16.mxu0 %v1272
  %1340 = vmatmul.mubr.bf16.gmra.mxu0 %v1247
  %v1341 = vpop.f32.mrf.mxu0
  %v1342 = vadd.f32 0.0, %v1341
  %v1343 = vpop.f32.mrf.mxu0
  %v1344 = vpop.f32.mrf.mxu0
  %v1345 = vadd.f32 0.0, %v1344
  %v1346 = vpop.f32.mrf.mxu0
  %1347 = vmatprep.mubr.bf16.mxu0 %v1275
  %1348 = vmatmul.mubr.bf16.gmra.mxu0 %v1249
  %v1349 = vpop.f32.mrf.mxu0
  %v1350 = vadd.f32 0.0, %v1349
  %v1351 = vpop.f32.mrf.mxu0
  %v1352 = vpop.f32.mrf.mxu0
  %v1353 = vadd.f32 0.0, %v1352
  %v1354 = vpop.f32.mrf.mxu0
  %1355 = vmatprep.mubr.bf16.mxu0 %v1278
  %1356 = vmatmul.mubr.bf16.gmra.mxu0 %v1251
  %v1357 = vpop.f32.mrf.mxu0
  %v1358 = vadd.f32 0.0, %v1357
  %v1359 = vpop.f32.mrf.mxu0
  %v1360 = vpop.f32.mrf.mxu0
  %v1361 = vadd.f32 0.0, %v1360
  %v1362 = vpop.f32.mrf.mxu0
  %1363 = vmatprep.mubr.bf16.mxu0 %v1281
  %1364 = vmatmul.mubr.bf16.gmra.mxu0 %v1253
  %v1365 = vpop.f32.mrf.mxu0
  %v1366 = vadd.f32 0.0, %v1365
  %v1367 = vpop.f32.mrf.mxu0
  %v1368 = vpop.f32.mrf.mxu0
  %v1369 = vadd.f32 0.0, %v1368
  %v1370 = vpop.f32.mrf.mxu0
  %1371 = vdwg.mxu0
  %v1372 = vpack.c.bf16 %v1321, %v1318
  %v1373 = vpack.c.bf16 %v1329, %v1326
  %v1374 = vpack.c.bf16 %v1337, %v1334
  %v1375 = vpack.c.bf16 %v1345, %v1342
  %v1376 = vpack.c.bf16 %v1353, %v1350
  %v1377 = vpack.c.bf16 %v1361, %v1358
  %v1378 = vpack.c.bf16 %v1369, %v1366
  %v1380 = vlaneseq
  %v1381 = vshrl.u32 %v1380, 7
  %v1382 = vsub.s32 0, %v1381
  %v1383 = vrot.slane %v82, %v1382
  %v1401 = vunpack.c.l.b16 %v66
  %v1402 = vunpack.c.l.b16 %v67
  %v1403 = vunpack.c.l.b16 %v68
  %v1404 = vunpack.c.l.b16 %v69
  %v1405 = vunpack.c.l.b16 %v70
  %v1406 = vunpack.c.l.b16 %v71
  %v1407 = vunpack.c.l.b16 %v72
  %v1408 = vunpack.c.l.b16 %v73
  %v1409 = vunpack.c.l.b16 %v74
  %v1410 = vunpack.c.l.b16 %v75
  %v1411 = vunpack.c.l.b16 %v76
  %v1412 = vunpack.c.l.b16 %v77
  %v1413 = vunpack.c.l.b16 %v78
  %v1414 = vunpack.c.l.b16 %v79
  %v1415 = vunpack.c.l.b16 %v80
  %v1416 = vunpack.c.l.b16 %v81
  %v1417 = vpack.c.b16 %v1402, %v1401
  %v1418 = vpack.c.b16 %v1404, %v1403
  %v1419 = vpack.c.b16 %v1406, %v1405
  %v1420 = vpack.c.b16 %v1408, %v1407
  %v1421 = vpack.c.b16 %v1410, %v1409
  %v1422 = vpack.c.b16 %v1412, %v1411
  %v1423 = vpack.c.b16 %v1414, %v1413
  %v1424 = vpack.c.b16 %v1416, %v1415
  %1433 = vmatprep.subr.bf16.mxu0 0
  %1434 = vmatpush1.bf16.msra.mxu0 %v1424
  %1435 = vmatprep.subr.bf16.mxu0 0
  %1436 = vmatpush1.bf16.msra.mxu0 %v1423
  %1437 = vmatprep.subr.bf16.mxu0 0
  %1438 = vmatpush1.bf16.msra.mxu0 %v1422
  %1439 = vmatprep.subr.bf16.mxu0 0
  %1440 = vmatpush1.bf16.msra.mxu0 %v1421
  %1441 = vmatprep.subr.bf16.mxu0 0
  %1442 = vmatpush1.bf16.msra.mxu0 %v1420
  %1443 = vmatprep.subr.bf16.mxu0 0
  %1444 = vmatpush1.bf16.msra.mxu0 %v1419
  %1445 = vmatprep.subr.bf16.mxu0 0
  %1446 = vmatpush1.bf16.msra.mxu0 %v1418
  %1447 = vmatprep.subr.bf16.mxu0 0
  %1448 = vmatpush1.bf16.msra.mxu0 %v1417
  %1449 = vmatprep.subr.bf16.mxu0 0
  %1450 = vmatpush2.bf16.msra.mxu0 0
  %1451 = vmatprep.subr.bf16.mxu0 0
  %1452 = vmatpush2.bf16.msra.mxu0 0
  %1453 = vmatprep.subr.bf16.mxu0 0
  %1454 = vmatpush2.bf16.msra.mxu0 0
  %1455 = vmatprep.subr.bf16.mxu0 0
  %1456 = vmatpush2.bf16.msra.mxu0 0
  %1457 = vmatprep.subr.bf16.mxu0 0
  %1458 = vmatpush2.bf16.msra.mxu0 0
  %1459 = vmatprep.subr.bf16.mxu0 0
  %1460 = vmatpush2.bf16.msra.mxu0 0
  %1461 = vmatprep.subr.bf16.mxu0 0
  %1462 = vmatpush2.bf16.msra.mxu0 0
  %1463 = vmatprep.subr.bf16.mxu0 0
  %1464 = vmatpush2.bf16.msra.mxu0 0
  %1465 = vmatprep.mubr.bf16.mxu0 0
  %1466 = vmatmul.mubr.bf16.gmra.mxu0 %v1372
  %v1467 = vpop.f32.mrf.mxu0
  %v1468 = vadd.f32 %v1383, %v1467
  %v1469 = vpop.f32.mrf.mxu0
  %v1470 = vpop.f32.mrf.mxu0
  %v1471 = vadd.f32 %v1383, %v1470
  %v1472 = vpop.f32.mrf.mxu0
  %1473 = vmatprep.mubr.bf16.mxu0 0
  %1474 = vmatmul.mubr.bf16.gmra.mxu0 %v1373
  %v1475 = vpop.f32.mrf.mxu0
  %v1476 = vadd.f32 %v1383, %v1475
  %v1477 = vpop.f32.mrf.mxu0
  %v1478 = vpop.f32.mrf.mxu0
  %v1479 = vadd.f32 %v1383, %v1478
  %v1480 = vpop.f32.mrf.mxu0
  %1481 = vmatprep.mubr.bf16.mxu0 0
  %1482 = vmatmul.mubr.bf16.gmra.mxu0 %v1374
  %v1483 = vpop.f32.mrf.mxu0
  %v1484 = vadd.f32 %v1383, %v1483
  %v1485 = vpop.f32.mrf.mxu0
  %v1486 = vpop.f32.mrf.mxu0
  %v1487 = vadd.f32 %v1383, %v1486
  %v1488 = vpop.f32.mrf.mxu0
  %1489 = vmatprep.mubr.bf16.mxu0 0
  %1490 = vmatmul.mubr.bf16.gmra.mxu0 %v1375
  %v1491 = vpop.f32.mrf.mxu0
  %v1492 = vadd.f32 %v1383, %v1491
  %v1493 = vpop.f32.mrf.mxu0
  %v1494 = vpop.f32.mrf.mxu0
  %v1495 = vadd.f32 %v1383, %v1494
  %v1496 = vpop.f32.mrf.mxu0
  %1497 = vmatprep.mubr.bf16.mxu0 0
  %1498 = vmatmul.mubr.bf16.gmra.mxu0 %v1376
  %v1499 = vpop.f32.mrf.mxu0
  %v1500 = vadd.f32 %v1383, %v1499
  %v1501 = vpop.f32.mrf.mxu0
  %v1502 = vpop.f32.mrf.mxu0
  %v1503 = vadd.f32 %v1383, %v1502
  %v1504 = vpop.f32.mrf.mxu0
  %1505 = vmatprep.mubr.bf16.mxu0 0
  %1506 = vmatmul.mubr.bf16.gmra.mxu0 %v1377
  %v1507 = vpop.f32.mrf.mxu0
  %v1508 = vadd.f32 %v1383, %v1507
  %v1509 = vpop.f32.mrf.mxu0
  %v1510 = vpop.f32.mrf.mxu0
  %v1511 = vadd.f32 %v1383, %v1510
  %v1512 = vpop.f32.mrf.mxu0
  %1513 = vmatprep.mubr.bf16.mxu0 0
  %1514 = vmatmul.mubr.bf16.gmra.mxu0 %v1378
  %v1515 = vpop.f32.mrf.mxu0
  %v1516 = vadd.f32 %v1383, %v1515
  %v1517 = vpop.f32.mrf.mxu0
  %v1518 = vpop.f32.mrf.mxu0
  %v1519 = vadd.f32 %v1383, %v1518
  %v1520 = vpop.f32.mrf.mxu0
  %1521 = vdwg.mxu0
  %v1522 = vmax.f32 %v1468, 0.0
  %v1523 = vmax.f32 %v1471, 0.0
  %v1524 = vmax.f32 %v1476, 0.0
  %v1525 = vmax.f32 %v1479, 0.0
  %v1526 = vmax.f32 %v1484, 0.0
  %v1527 = vmax.f32 %v1487, 0.0
  %v1528 = vmax.f32 %v1492, 0.0
  %v1529 = vmax.f32 %v1495, 0.0
  %v1530 = vmax.f32 %v1500, 0.0
  %v1531 = vmax.f32 %v1503, 0.0
  %v1532 = vmax.f32 %v1508, 0.0
  %v1533 = vmax.f32 %v1511, 0.0
  %v1534 = vmax.f32 %v1516, 0.0
  %v1535 = vmax.f32 %v1519, 0.0
  %v1536 = vadd.f32 %v1522, %v1523
  %v1537 = vadd.f32 %v1536, %v1524
  %v1538 = vadd.f32 %v1537, %v1525
  %v1539 = vadd.f32 %v1538, %v1526
  %v1540 = vadd.f32 %v1539, %v1527
  %v1541 = vadd.f32 %v1540, %v1528
  %v1542 = vadd.f32 %v1541, %v1529
  %v1543 = vadd.f32 %v1542, %v1530
  %v1544 = vadd.f32 %v1543, %v1531
  %v1545 = vadd.f32 %v1544, %v1532
  %v1546 = vadd.f32 %v1545, %v1533
  %v1547 = vadd.f32 %v1546, %v1534
  %v1548 = vadd.f32 %v1547, %v1535
  %v1549 = vrot.slane %v1548, 4
  %v1550 = vadd.f32 %v1548, %v1549
  %v1551 = vrot.slane %v1550, 2
  %v1552 = vadd.f32 %v1550, %v1551
  %v1553 = vrot.slane %v1552, 1
  %v1554 = vadd.f32 %v1552, %v1553
  %v1555 = vadd.f32 %v1554, 0.0
  %1556 = vmatprep.subr.bf16.mxu0 0
  %1557 = vmatpush1.bf16.msra.mxu0 %v1178
  %1558 = vmatprep.subr.bf16.mxu0 0
  %1559 = vmatpush1.bf16.msra.mxu0 %v1177
  %1560 = vmatprep.subr.bf16.mxu0 0
  %1561 = vmatpush1.bf16.msra.mxu0 %v1176
  %1562 = vmatprep.subr.bf16.mxu0 0
  %1563 = vmatpush1.bf16.msra.mxu0 %v1175
  %1564 = vmatprep.subr.bf16.mxu0 0
  %1565 = vmatpush1.bf16.msra.mxu0 %v1174
  %1566 = vmatprep.subr.bf16.mxu0 0
  %1567 = vmatpush1.bf16.msra.mxu0 %v1173
  %1568 = vmatprep.subr.bf16.mxu0 0
  %1569 = vmatpush1.bf16.msra.mxu0 %v1172
  %1570 = vmatprep.subr.bf16.mxu0 0
  %1571 = vmatpush1.bf16.msra.mxu0 %v1171
  %1572 = vmatprep.subr.bf16.mxu0 0
  %1573 = vmatpush2.bf16.msra.mxu0 0
  %1574 = vmatprep.subr.bf16.mxu0 0
  %1575 = vmatpush2.bf16.msra.mxu0 0
  %1576 = vmatprep.subr.bf16.mxu0 0
  %1577 = vmatpush2.bf16.msra.mxu0 %v1184
  %1578 = vmatprep.subr.bf16.mxu0 0
  %1579 = vmatpush2.bf16.msra.mxu0 %v1183
  %1580 = vmatprep.subr.bf16.mxu0 0
  %1581 = vmatpush2.bf16.msra.mxu0 %v1182
  %1582 = vmatprep.subr.bf16.mxu0 0
  %1583 = vmatpush2.bf16.msra.mxu0 %v1181
  %1584 = vmatprep.subr.bf16.mxu0 0
  %1585 = vmatpush2.bf16.msra.mxu0 %v1180
  %1586 = vmatprep.subr.bf16.mxu0 0
  %1587 = vmatpush2.bf16.msra.mxu0 %v1179
  %1588 = vmatprep.mubr.bf16.mxu0 %v1263
  %1589 = vmatmul.mubr.bf16.gmra.mxu0 %v1241
  %v1590 = vpop.f32.mrf.mxu0
  %v1591 = vadd.f32 0.0, %v1590
  %v1592 = vpop.f32.mrf.mxu0
  %v1593 = vpop.f32.mrf.mxu0
  %v1594 = vadd.f32 0.0, %v1593
  %v1595 = vpop.f32.mrf.mxu0
  %1596 = vmatprep.mubr.bf16.mxu0 %v1266
  %1597 = vmatmul.mubr.bf16.gmra.mxu0 %v1243
  %v1598 = vpop.f32.mrf.mxu0
  %v1599 = vadd.f32 0.0, %v1598
  %v1600 = vpop.f32.mrf.mxu0
  %v1601 = vpop.f32.mrf.mxu0
  %v1602 = vadd.f32 0.0, %v1601
  %v1603 = vpop.f32.mrf.mxu0
  %1604 = vmatprep.mubr.bf16.mxu0 %v1269
  %1605 = vmatmul.mubr.bf16.gmra.mxu0 %v1245
  %v1606 = vpop.f32.mrf.mxu0
  %v1607 = vadd.f32 0.0, %v1606
  %v1608 = vpop.f32.mrf.mxu0
  %v1609 = vpop.f32.mrf.mxu0
  %v1610 = vadd.f32 0.0, %v1609
  %v1611 = vpop.f32.mrf.mxu0
  %1612 = vmatprep.mubr.bf16.mxu0 %v1272
  %1613 = vmatmul.mubr.bf16.gmra.mxu0 %v1247
  %v1614 = vpop.f32.mrf.mxu0
  %v1615 = vadd.f32 0.0, %v1614
  %v1616 = vpop.f32.mrf.mxu0
  %v1617 = vpop.f32.mrf.mxu0
  %v1618 = vadd.f32 0.0, %v1617
  %v1619 = vpop.f32.mrf.mxu0
  %1620 = vmatprep.mubr.bf16.mxu0 %v1275
  %1621 = vmatmul.mubr.bf16.gmra.mxu0 %v1249
  %v1622 = vpop.f32.mrf.mxu0
  %v1623 = vadd.f32 0.0, %v1622
  %v1624 = vpop.f32.mrf.mxu0
  %v1625 = vpop.f32.mrf.mxu0
  %v1626 = vadd.f32 0.0, %v1625
  %v1627 = vpop.f32.mrf.mxu0
  %1628 = vmatprep.mubr.bf16.mxu0 %v1278
  %1629 = vmatmul.mubr.bf16.gmra.mxu0 %v1251
  %v1630 = vpop.f32.mrf.mxu0
  %v1631 = vadd.f32 0.0, %v1630
  %v1632 = vpop.f32.mrf.mxu0
  %v1633 = vpop.f32.mrf.mxu0
  %v1634 = vadd.f32 0.0, %v1633
  %v1635 = vpop.f32.mrf.mxu0
  %1636 = vmatprep.mubr.bf16.mxu0 %v1281
  %1637 = vmatmul.mubr.bf16.gmra.mxu0 %v1253
  %v1638 = vpop.f32.mrf.mxu0
  %v1639 = vadd.f32 0.0, %v1638
  %v1640 = vpop.f32.mrf.mxu0
  %v1641 = vpop.f32.mrf.mxu0
  %v1642 = vadd.f32 0.0, %v1641
  %v1643 = vpop.f32.mrf.mxu0
  %1644 = vdwg.mxu0
  %v1645 = vpack.c.bf16 %v1594, %v1591
  %v1646 = vpack.c.bf16 %v1602, %v1599
  %v1647 = vpack.c.bf16 %v1610, %v1607
  %v1648 = vpack.c.bf16 %v1618, %v1615
  %v1649 = vpack.c.bf16 %v1626, %v1623
  %v1650 = vpack.c.bf16 %v1634, %v1631
  %v1651 = vpack.c.bf16 %v1642, %v1639
  %1652 = vmatprep.subr.bf16.mxu0 0
  %1653 = vmatpush1.bf16.msra.mxu0 %v1424
  %1654 = vmatprep.subr.bf16.mxu0 0
  %1655 = vmatpush1.bf16.msra.mxu0 %v1423
  %1656 = vmatprep.subr.bf16.mxu0 0
  %1657 = vmatpush1.bf16.msra.mxu0 %v1422
  %1658 = vmatprep.subr.bf16.mxu0 0
  %1659 = vmatpush1.bf16.msra.mxu0 %v1421
  %1660 = vmatprep.subr.bf16.mxu0 0
  %1661 = vmatpush1.bf16.msra.mxu0 %v1420
  %1662 = vmatprep.subr.bf16.mxu0 0
  %1663 = vmatpush1.bf16.msra.mxu0 %v1419
  %1664 = vmatprep.subr.bf16.mxu0 0
  %1665 = vmatpush1.bf16.msra.mxu0 %v1418
  %1666 = vmatprep.subr.bf16.mxu0 0
  %1667 = vmatpush1.bf16.msra.mxu0 %v1417
  %1668 = vmatprep.subr.bf16.mxu0 0
  %1669 = vmatpush2.bf16.msra.mxu0 0
  %1670 = vmatprep.subr.bf16.mxu0 0
  %1671 = vmatpush2.bf16.msra.mxu0 0
  %1672 = vmatprep.subr.bf16.mxu0 0
  %1673 = vmatpush2.bf16.msra.mxu0 0
  %1674 = vmatprep.subr.bf16.mxu0 0
  %1675 = vmatpush2.bf16.msra.mxu0 0
  %1676 = vmatprep.subr.bf16.mxu0 0
  %1677 = vmatpush2.bf16.msra.mxu0 0
  %1678 = vmatprep.subr.bf16.mxu0 0
  %1679 = vmatpush2.bf16.msra.mxu0 0
  %1680 = vmatprep.subr.bf16.mxu0 0
  %1681 = vmatpush2.bf16.msra.mxu0 0
  %1682 = vmatprep.subr.bf16.mxu0 0
  %1683 = vmatpush2.bf16.msra.mxu0 0
  %1684 = vmatprep.mubr.bf16.mxu0 0
  %1685 = vmatmul.mubr.bf16.gmra.mxu0 %v1645
  %v1686 = vpop.f32.mrf.mxu0
  %v1687 = vadd.f32 %v1383, %v1686
  %v1688 = vpop.f32.mrf.mxu0
  %v1689 = vpop.f32.mrf.mxu0
  %v1690 = vadd.f32 %v1383, %v1689
  %v1691 = vpop.f32.mrf.mxu0
  %1692 = vmatprep.mubr.bf16.mxu0 0
  %1693 = vmatmul.mubr.bf16.gmra.mxu0 %v1646
  %v1694 = vpop.f32.mrf.mxu0
  %v1695 = vadd.f32 %v1383, %v1694
  %v1696 = vpop.f32.mrf.mxu0
  %v1697 = vpop.f32.mrf.mxu0
  %v1698 = vadd.f32 %v1383, %v1697
  %v1699 = vpop.f32.mrf.mxu0
  %1700 = vmatprep.mubr.bf16.mxu0 0
  %1701 = vmatmul.mubr.bf16.gmra.mxu0 %v1647
  %v1702 = vpop.f32.mrf.mxu0
  %v1703 = vadd.f32 %v1383, %v1702
  %v1704 = vpop.f32.mrf.mxu0
  %v1705 = vpop.f32.mrf.mxu0
  %v1706 = vadd.f32 %v1383, %v1705
  %v1707 = vpop.f32.mrf.mxu0
  %1708 = vmatprep.mubr.bf16.mxu0 0
  %1709 = vmatmul.mubr.bf16.gmra.mxu0 %v1648
  %v1710 = vpop.f32.mrf.mxu0
  %v1711 = vadd.f32 %v1383, %v1710
  %v1712 = vpop.f32.mrf.mxu0
  %v1713 = vpop.f32.mrf.mxu0
  %v1714 = vadd.f32 %v1383, %v1713
  %v1715 = vpop.f32.mrf.mxu0
  %1716 = vmatprep.mubr.bf16.mxu0 0
  %1717 = vmatmul.mubr.bf16.gmra.mxu0 %v1649
  %v1718 = vpop.f32.mrf.mxu0
  %v1719 = vadd.f32 %v1383, %v1718
  %v1720 = vpop.f32.mrf.mxu0
  %v1721 = vpop.f32.mrf.mxu0
  %v1722 = vadd.f32 %v1383, %v1721
  %v1723 = vpop.f32.mrf.mxu0
  %1724 = vmatprep.mubr.bf16.mxu0 0
  %1725 = vmatmul.mubr.bf16.gmra.mxu0 %v1650
  %v1726 = vpop.f32.mrf.mxu0
  %v1727 = vadd.f32 %v1383, %v1726
  %v1728 = vpop.f32.mrf.mxu0
  %v1729 = vpop.f32.mrf.mxu0
  %v1730 = vadd.f32 %v1383, %v1729
  %v1731 = vpop.f32.mrf.mxu0
  %1732 = vmatprep.mubr.bf16.mxu0 0
  %1733 = vmatmul.mubr.bf16.gmra.mxu0 %v1651
  %v1734 = vpop.f32.mrf.mxu0
  %v1735 = vadd.f32 %v1383, %v1734
  %v1736 = vpop.f32.mrf.mxu0
  %v1737 = vpop.f32.mrf.mxu0
  %v1738 = vadd.f32 %v1383, %v1737
  %v1739 = vpop.f32.mrf.mxu0
  %1740 = vdwg.mxu0
  %v1741 = vmax.f32 %v1687, 0.0
  %v1742 = vmax.f32 %v1690, 0.0
  %v1743 = vmax.f32 %v1695, 0.0
  %v1744 = vmax.f32 %v1698, 0.0
  %v1745 = vmax.f32 %v1703, 0.0
  %v1746 = vmax.f32 %v1706, 0.0
  %v1747 = vmax.f32 %v1711, 0.0
  %v1748 = vmax.f32 %v1714, 0.0
  %v1749 = vmax.f32 %v1719, 0.0
  %v1750 = vmax.f32 %v1722, 0.0
  %v1751 = vmax.f32 %v1727, 0.0
  %v1752 = vmax.f32 %v1730, 0.0
  %v1753 = vmax.f32 %v1735, 0.0
  %v1754 = vmax.f32 %v1738, 0.0
  %v1755 = vadd.f32 %v1741, %v1742
  %v1756 = vadd.f32 %v1755, %v1743
  %v1757 = vadd.f32 %v1756, %v1744
  %v1758 = vadd.f32 %v1757, %v1745
  %v1759 = vadd.f32 %v1758, %v1746
  %v1760 = vadd.f32 %v1759, %v1747
  %v1761 = vadd.f32 %v1760, %v1748
  %v1762 = vadd.f32 %v1761, %v1749
  %v1763 = vadd.f32 %v1762, %v1750
  %v1764 = vadd.f32 %v1763, %v1751
  %v1765 = vadd.f32 %v1764, %v1752
  %v1766 = vadd.f32 %v1765, %v1753
  %v1767 = vadd.f32 %v1766, %v1754
  %v1768 = vrot.slane %v1767, 4
  %v1769 = vadd.f32 %v1767, %v1768
  %v1770 = vrot.slane %v1769, 2
  %v1771 = vadd.f32 %v1769, %v1770
  %v1772 = vrot.slane %v1771, 1
  %v1773 = vadd.f32 %v1771, %v1772
  %v1774 = vadd.f32 %v1555, %v1773
  %1775 = vmatprep.subr.bf16.mxu0 0
  %1776 = vmatpush1.bf16.msra.mxu0 %v1192
  %1777 = vmatprep.subr.bf16.mxu0 0
  %1778 = vmatpush1.bf16.msra.mxu0 %v1191
  %1779 = vmatprep.subr.bf16.mxu0 0
  %1780 = vmatpush1.bf16.msra.mxu0 %v1190
  %1781 = vmatprep.subr.bf16.mxu0 0
  %1782 = vmatpush1.bf16.msra.mxu0 %v1189
  %1783 = vmatprep.subr.bf16.mxu0 0
  %1784 = vmatpush1.bf16.msra.mxu0 %v1188
  %1785 = vmatprep.subr.bf16.mxu0 0
  %1786 = vmatpush1.bf16.msra.mxu0 %v1187
  %1787 = vmatprep.subr.bf16.mxu0 0
  %1788 = vmatpush1.bf16.msra.mxu0 %v1186
  %1789 = vmatprep.subr.bf16.mxu0 0
  %1790 = vmatpush1.bf16.msra.mxu0 %v1185
  %1791 = vmatprep.subr.bf16.mxu0 0
  %1792 = vmatpush2.bf16.msra.mxu0 0
  %1793 = vmatprep.subr.bf16.mxu0 0
  %1794 = vmatpush2.bf16.msra.mxu0 0
  %1795 = vmatprep.subr.bf16.mxu0 0
  %1796 = vmatpush2.bf16.msra.mxu0 %v1198
  %1797 = vmatprep.subr.bf16.mxu0 0
  %1798 = vmatpush2.bf16.msra.mxu0 %v1197
  %1799 = vmatprep.subr.bf16.mxu0 0
  %1800 = vmatpush2.bf16.msra.mxu0 %v1196
  %1801 = vmatprep.subr.bf16.mxu0 0
  %1802 = vmatpush2.bf16.msra.mxu0 %v1195
  %1803 = vmatprep.subr.bf16.mxu0 0
  %1804 = vmatpush2.bf16.msra.mxu0 %v1194
  %1805 = vmatprep.subr.bf16.mxu0 0
  %1806 = vmatpush2.bf16.msra.mxu0 %v1193
  %1807 = vmatprep.mubr.bf16.mxu0 %v1263
  %1808 = vmatmul.mubr.bf16.gmra.mxu0 %v1241
  %v1809 = vpop.f32.mrf.mxu0
  %v1810 = vadd.f32 0.0, %v1809
  %v1811 = vpop.f32.mrf.mxu0
  %v1812 = vpop.f32.mrf.mxu0
  %v1813 = vadd.f32 0.0, %v1812
  %v1814 = vpop.f32.mrf.mxu0
  %1815 = vmatprep.mubr.bf16.mxu0 %v1266
  %1816 = vmatmul.mubr.bf16.gmra.mxu0 %v1243
  %v1817 = vpop.f32.mrf.mxu0
  %v1818 = vadd.f32 0.0, %v1817
  %v1819 = vpop.f32.mrf.mxu0
  %v1820 = vpop.f32.mrf.mxu0
  %v1821 = vadd.f32 0.0, %v1820
  %v1822 = vpop.f32.mrf.mxu0
  %1823 = vmatprep.mubr.bf16.mxu0 %v1269
  %1824 = vmatmul.mubr.bf16.gmra.mxu0 %v1245
  %v1825 = vpop.f32.mrf.mxu0
  %v1826 = vadd.f32 0.0, %v1825
  %v1827 = vpop.f32.mrf.mxu0
  %v1828 = vpop.f32.mrf.mxu0
  %v1829 = vadd.f32 0.0, %v1828
  %v1830 = vpop.f32.mrf.mxu0
  %1831 = vmatprep.mubr.bf16.mxu0 %v1272
  %1832 = vmatmul.mubr.bf16.gmra.mxu0 %v1247
  %v1833 = vpop.f32.mrf.mxu0
  %v1834 = vadd.f32 0.0, %v1833
  %v1835 = vpop.f32.mrf.mxu0
  %v1836 = vpop.f32.mrf.mxu0
  %v1837 = vadd.f32 0.0, %v1836
  %v1838 = vpop.f32.mrf.mxu0
  %1839 = vmatprep.mubr.bf16.mxu0 %v1275
  %1840 = vmatmul.mubr.bf16.gmra.mxu0 %v1249
  %v1841 = vpop.f32.mrf.mxu0
  %v1842 = vadd.f32 0.0, %v1841
  %v1843 = vpop.f32.mrf.mxu0
  %v1844 = vpop.f32.mrf.mxu0
  %v1845 = vadd.f32 0.0, %v1844
  %v1846 = vpop.f32.mrf.mxu0
  %1847 = vmatprep.mubr.bf16.mxu0 %v1278
  %1848 = vmatmul.mubr.bf16.gmra.mxu0 %v1251
  %v1849 = vpop.f32.mrf.mxu0
  %v1850 = vadd.f32 0.0, %v1849
  %v1851 = vpop.f32.mrf.mxu0
  %v1852 = vpop.f32.mrf.mxu0
  %v1853 = vadd.f32 0.0, %v1852
  %v1854 = vpop.f32.mrf.mxu0
  %1855 = vmatprep.mubr.bf16.mxu0 %v1281
  %1856 = vmatmul.mubr.bf16.gmra.mxu0 %v1253
  %v1857 = vpop.f32.mrf.mxu0
  %v1858 = vadd.f32 0.0, %v1857
  %v1859 = vpop.f32.mrf.mxu0
  %v1860 = vpop.f32.mrf.mxu0
  %v1861 = vadd.f32 0.0, %v1860
  %v1862 = vpop.f32.mrf.mxu0
  %1863 = vdwg.mxu0
  %v1864 = vpack.c.bf16 %v1813, %v1810
  %v1865 = vpack.c.bf16 %v1821, %v1818
  %v1866 = vpack.c.bf16 %v1829, %v1826
  %v1867 = vpack.c.bf16 %v1837, %v1834
  %v1868 = vpack.c.bf16 %v1845, %v1842
  %v1869 = vpack.c.bf16 %v1853, %v1850
  %v1870 = vpack.c.bf16 %v1861, %v1858
  %1871 = vmatprep.subr.bf16.mxu0 0
  %1872 = vmatpush1.bf16.msra.mxu0 %v1424
  %1873 = vmatprep.subr.bf16.mxu0 0
  %1874 = vmatpush1.bf16.msra.mxu0 %v1423
  %1875 = vmatprep.subr.bf16.mxu0 0
  %1876 = vmatpush1.bf16.msra.mxu0 %v1422
  %1877 = vmatprep.subr.bf16.mxu0 0
  %1878 = vmatpush1.bf16.msra.mxu0 %v1421
  %1879 = vmatprep.subr.bf16.mxu0 0
  %1880 = vmatpush1.bf16.msra.mxu0 %v1420
  %1881 = vmatprep.subr.bf16.mxu0 0
  %1882 = vmatpush1.bf16.msra.mxu0 %v1419
  %1883 = vmatprep.subr.bf16.mxu0 0
  %1884 = vmatpush1.bf16.msra.mxu0 %v1418
  %1885 = vmatprep.subr.bf16.mxu0 0
  %1886 = vmatpush1.bf16.msra.mxu0 %v1417
  %1887 = vmatprep.subr.bf16.mxu0 0
  %1888 = vmatpush2.bf16.msra.mxu0 0
  %1889 = vmatprep.subr.bf16.mxu0 0
  %1890 = vmatpush2.bf16.msra.mxu0 0
  %1891 = vmatprep.subr.bf16.mxu0 0
  %1892 = vmatpush2.bf16.msra.mxu0 0
  %1893 = vmatprep.subr.bf16.mxu0 0
  %1894 = vmatpush2.bf16.msra.mxu0 0
  %1895 = vmatprep.subr.bf16.mxu0 0
  %1896 = vmatpush2.bf16.msra.mxu0 0
  %1897 = vmatprep.subr.bf16.mxu0 0
  %1898 = vmatpush2.bf16.msra.mxu0 0
  %1899 = vmatprep.subr.bf16.mxu0 0
  %1900 = vmatpush2.bf16.msra.mxu0 0
  %1901 = vmatprep.subr.bf16.mxu0 0
  %1902 = vmatpush2.bf16.msra.mxu0 0
  %1903 = vmatprep.mubr.bf16.mxu0 0
  %1904 = vmatmul.mubr.bf16.gmra.mxu0 %v1864
  %v1905 = vpop.f32.mrf.mxu0
  %v1906 = vadd.f32 %v1383, %v1905
  %v1907 = vpop.f32.mrf.mxu0
  %v1908 = vpop.f32.mrf.mxu0
  %v1909 = vadd.f32 %v1383, %v1908
  %v1910 = vpop.f32.mrf.mxu0
  %1911 = vmatprep.mubr.bf16.mxu0 0
  %1912 = vmatmul.mubr.bf16.gmra.mxu0 %v1865
  %v1913 = vpop.f32.mrf.mxu0
  %v1914 = vadd.f32 %v1383, %v1913
  %v1915 = vpop.f32.mrf.mxu0
  %v1916 = vpop.f32.mrf.mxu0
  %v1917 = vadd.f32 %v1383, %v1916
  %v1918 = vpop.f32.mrf.mxu0
  %1919 = vmatprep.mubr.bf16.mxu0 0
  %1920 = vmatmul.mubr.bf16.gmra.mxu0 %v1866
  %v1921 = vpop.f32.mrf.mxu0
  %v1922 = vadd.f32 %v1383, %v1921
  %v1923 = vpop.f32.mrf.mxu0
  %v1924 = vpop.f32.mrf.mxu0
  %v1925 = vadd.f32 %v1383, %v1924
  %v1926 = vpop.f32.mrf.mxu0
  %1927 = vmatprep.mubr.bf16.mxu0 0
  %1928 = vmatmul.mubr.bf16.gmra.mxu0 %v1867
  %v1929 = vpop.f32.mrf.mxu0
  %v1930 = vadd.f32 %v1383, %v1929
  %v1931 = vpop.f32.mrf.mxu0
  %v1932 = vpop.f32.mrf.mxu0
  %v1933 = vadd.f32 %v1383, %v1932
  %v1934 = vpop.f32.mrf.mxu0
  %1935 = vmatprep.mubr.bf16.mxu0 0
  %1936 = vmatmul.mubr.bf16.gmra.mxu0 %v1868
  %v1937 = vpop.f32.mrf.mxu0
  %v1938 = vadd.f32 %v1383, %v1937
  %v1939 = vpop.f32.mrf.mxu0
  %v1940 = vpop.f32.mrf.mxu0
  %v1941 = vadd.f32 %v1383, %v1940
  %v1942 = vpop.f32.mrf.mxu0
  %1943 = vmatprep.mubr.bf16.mxu0 0
  %1944 = vmatmul.mubr.bf16.gmra.mxu0 %v1869
  %v1945 = vpop.f32.mrf.mxu0
  %v1946 = vadd.f32 %v1383, %v1945
  %v1947 = vpop.f32.mrf.mxu0
  %v1948 = vpop.f32.mrf.mxu0
  %v1949 = vadd.f32 %v1383, %v1948
  %v1950 = vpop.f32.mrf.mxu0
  %1951 = vmatprep.mubr.bf16.mxu0 0
  %1952 = vmatmul.mubr.bf16.gmra.mxu0 %v1870
  %v1953 = vpop.f32.mrf.mxu0
  %v1954 = vadd.f32 %v1383, %v1953
  %v1955 = vpop.f32.mrf.mxu0
  %v1956 = vpop.f32.mrf.mxu0
  %v1957 = vadd.f32 %v1383, %v1956
  %v1958 = vpop.f32.mrf.mxu0
  %1959 = vdwg.mxu0
  %v1960 = vmax.f32 %v1906, 0.0
  %v1961 = vmax.f32 %v1909, 0.0
  %v1962 = vmax.f32 %v1914, 0.0
  %v1963 = vmax.f32 %v1917, 0.0
  %v1964 = vmax.f32 %v1922, 0.0
  %v1965 = vmax.f32 %v1925, 0.0
  %v1966 = vmax.f32 %v1930, 0.0
  %v1967 = vmax.f32 %v1933, 0.0
  %v1968 = vmax.f32 %v1938, 0.0
  %v1969 = vmax.f32 %v1941, 0.0
  %v1970 = vmax.f32 %v1946, 0.0
  %v1971 = vmax.f32 %v1949, 0.0
  %v1972 = vmax.f32 %v1954, 0.0
  %v1973 = vmax.f32 %v1957, 0.0
  %v1974 = vadd.f32 %v1960, %v1961
  %v1975 = vadd.f32 %v1974, %v1962
  %v1976 = vadd.f32 %v1975, %v1963
  %v1977 = vadd.f32 %v1976, %v1964
  %v1978 = vadd.f32 %v1977, %v1965
  %v1979 = vadd.f32 %v1978, %v1966
  %v1980 = vadd.f32 %v1979, %v1967
  %v1981 = vadd.f32 %v1980, %v1968
  %v1982 = vadd.f32 %v1981, %v1969
  %v1983 = vadd.f32 %v1982, %v1970
  %v1984 = vadd.f32 %v1983, %v1971
  %v1985 = vadd.f32 %v1984, %v1972
  %v1986 = vadd.f32 %v1985, %v1973
  %v1987 = vrot.slane %v1986, 4
  %v1988 = vadd.f32 %v1986, %v1987
  %v1989 = vrot.slane %v1988, 2
  %v1990 = vadd.f32 %v1988, %v1989
  %v1991 = vrot.slane %v1990, 1
  %v1992 = vadd.f32 %v1990, %v1991
  %v1993 = vadd.f32 %v1774, %v1992
  %v1994 = vmul.f32 %v1993, 0.0029761905
  %v1995 = vpack.c.bf16 %v1994, %v1994
  %v2028 = vunpack.c.l.b16 %v83
  %v2029 = vunpack.c.h.b16 %v83
  %v2030 = vunpack.c.l.b16 %v84
  %v2031 = vunpack.c.h.b16 %v84
  %v2032 = vunpack.c.l.b16 %v85
  %v2033 = vunpack.c.h.b16 %v85
  %v2034 = vunpack.c.l.b16 %v86
  %v2035 = vunpack.c.h.b16 %v86
  %v2036 = vunpack.c.l.b16 %v87
  %v2037 = vunpack.c.h.b16 %v87
  %v2038 = vunpack.c.l.b16 %v88
  %v2039 = vunpack.c.h.b16 %v88
  %v2040 = vunpack.c.l.b16 %v89
  %v2041 = vunpack.c.h.b16 %v89
  %v2042 = vunpack.c.l.b16 %v90
  %v2043 = vunpack.c.h.b16 %v90
  %v2044 = vunpack.c.l.b16 %v91
  %v2045 = vunpack.c.h.b16 %v91
  %v2046 = vunpack.c.l.b16 %v92
  %v2047 = vunpack.c.h.b16 %v92
  %v2048 = vunpack.c.l.b16 %v93
  %v2049 = vunpack.c.h.b16 %v93
  %v2050 = vunpack.c.l.b16 %v94
  %v2051 = vunpack.c.h.b16 %v94
  %v2052 = vunpack.c.l.b16 %v95
  %v2053 = vunpack.c.h.b16 %v95
  %v2054 = vunpack.c.l.b16 %v96
  %v2055 = vunpack.c.h.b16 %v96
  %v2056 = vunpack.c.l.b16 %v97
  %v2057 = vunpack.c.h.b16 %v97
  %v2058 = vunpack.c.l.b16 %v98
  %v2059 = vunpack.c.h.b16 %v98
  %v2060 = vunpack.c.l.b16 %v99
  %v2061 = vunpack.c.h.b16 %v99
  %v2062 = vunpack.c.l.b16 %v100
  %v2063 = vunpack.c.h.b16 %v100
  %v2064 = vunpack.c.l.b16 %v101
  %v2065 = vunpack.c.h.b16 %v101
  %v2066 = vunpack.c.l.b16 %v102
  %v2067 = vunpack.c.h.b16 %v102
  %v2068 = vunpack.c.l.b16 %v103
  %v2069 = vunpack.c.h.b16 %v103
  %v2070 = vunpack.c.l.b16 %v104
  %v2071 = vunpack.c.h.b16 %v104
  %v2072 = vunpack.c.l.b16 %v105
  %v2073 = vunpack.c.h.b16 %v105
  %v2074 = vunpack.c.l.b16 %v106
  %v2075 = vunpack.c.h.b16 %v106
  %v2076 = vunpack.c.l.b16 %v107
  %v2077 = vunpack.c.h.b16 %v107
  %v2078 = vunpack.c.l.b16 %v108
  %v2079 = vunpack.c.h.b16 %v108
  %v2080 = vunpack.c.l.b16 %v109
  %v2081 = vunpack.c.h.b16 %v109
  %v2082 = vunpack.c.l.b16 %v110
  %v2083 = vunpack.c.h.b16 %v110
  %v2084 = vunpack.c.l.b16 %v111
  %v2085 = vunpack.c.h.b16 %v111
  %v2086 = vunpack.c.l.b16 %v112
  %v2087 = vunpack.c.h.b16 %v112
  %v2088 = vunpack.c.l.b16 %v113
  %v2089 = vunpack.c.h.b16 %v113
  %v2090 = vunpack.c.l.b16 %v114
  %v2091 = vunpack.c.h.b16 %v114
  %v2092 = vpack.c.b16 %v2032, %v2028
  %v2093 = vpack.c.b16 %v2033, %v2029
  %v2094 = vpack.c.b16 %v2034, %v2030
  %v2095 = vpack.c.b16 %v2035, %v2031
  %v2096 = vpack.c.b16 %v2040, %v2036
  %v2097 = vpack.c.b16 %v2041, %v2037
  %v2098 = vpack.c.b16 %v2042, %v2038
  %v2099 = vpack.c.b16 %v2043, %v2039
  %v2100 = vpack.c.b16 %v2048, %v2044
  %v2101 = vpack.c.b16 %v2049, %v2045
  %v2102 = vpack.c.b16 %v2050, %v2046
  %v2103 = vpack.c.b16 %v2051, %v2047
  %v2104 = vpack.c.b16 %v2056, %v2052
  %v2105 = vpack.c.b16 %v2057, %v2053
  %v2106 = vpack.c.b16 %v2058, %v2054
  %v2107 = vpack.c.b16 %v2059, %v2055
  %v2108 = vpack.c.b16 %v2064, %v2060
  %v2109 = vpack.c.b16 %v2065, %v2061
  %v2110 = vpack.c.b16 %v2066, %v2062
  %v2111 = vpack.c.b16 %v2067, %v2063
  %v2112 = vpack.c.b16 %v2072, %v2068
  %v2113 = vpack.c.b16 %v2073, %v2069
  %v2114 = vpack.c.b16 %v2074, %v2070
  %v2115 = vpack.c.b16 %v2075, %v2071
  %v2116 = vpack.c.b16 %v2080, %v2076
  %v2117 = vpack.c.b16 %v2081, %v2077
  %v2118 = vpack.c.b16 %v2082, %v2078
  %v2119 = vpack.c.b16 %v2083, %v2079
  %v2120 = vpack.c.b16 %v2088, %v2084
  %v2121 = vpack.c.b16 %v2089, %v2085
  %v2122 = vpack.c.b16 %v2090, %v2086
  %v2123 = vpack.c.b16 %v2091, %v2087
  %2156 = vmatprep.subr.bf16.mxu0 %v2121
  %2157 = vmatpush1.bf16.msra.mxu0 %v2120
  %2158 = vmatprep.subr.bf16.mxu0 %v2117
  %2159 = vmatpush1.bf16.msra.mxu0 %v2116
  %2160 = vmatprep.subr.bf16.mxu0 %v2113
  %2161 = vmatpush1.bf16.msra.mxu0 %v2112
  %2162 = vmatprep.subr.bf16.mxu0 %v2109
  %2163 = vmatpush1.bf16.msra.mxu0 %v2108
  %2164 = vmatprep.subr.bf16.mxu0 %v2105
  %2165 = vmatpush1.bf16.msra.mxu0 %v2104
  %2166 = vmatprep.subr.bf16.mxu0 %v2101
  %2167 = vmatpush1.bf16.msra.mxu0 %v2100
  %2168 = vmatprep.subr.bf16.mxu0 %v2097
  %2169 = vmatpush1.bf16.msra.mxu0 %v2096
  %2170 = vmatprep.subr.bf16.mxu0 %v2093
  %2171 = vmatpush1.bf16.msra.mxu0 %v2092
  %2172 = vmatprep.subr.bf16.mxu0 0
  %2173 = vmatpush2.bf16.msra.mxu0 0
  %2174 = vmatprep.subr.bf16.mxu0 0
  %2175 = vmatpush2.bf16.msra.mxu0 0
  %2176 = vmatprep.subr.bf16.mxu0 0
  %2177 = vmatpush2.bf16.msra.mxu0 0
  %2178 = vmatprep.subr.bf16.mxu0 0
  %2179 = vmatpush2.bf16.msra.mxu0 0
  %2180 = vmatprep.subr.bf16.mxu0 0
  %2181 = vmatpush2.bf16.msra.mxu0 0
  %2182 = vmatprep.subr.bf16.mxu0 0
  %2183 = vmatpush2.bf16.msra.mxu0 0
  %2184 = vmatprep.subr.bf16.mxu0 0
  %2185 = vmatpush2.bf16.msra.mxu0 0
  %2186 = vmatprep.subr.bf16.mxu0 0
  %2187 = vmatpush2.bf16.msra.mxu0 0
  %2188 = vmatprep.mubr.bf16.mxu0 0
  %2189 = vmatmul.mubr.bf16.gmra.mxu0 %v1995
  %v2190 = vpop.f32.mrf.mxu0
  %v2191 = vadd.f32 0.0, %v2190
  %v2192 = vpop.f32.mrf.mxu0
  %v2193 = vadd.f32 0.0, %v2192
  %v2194 = vpop.f32.mrf.mxu0
  %v2195 = vpop.f32.mrf.mxu0
  %2196 = vdwg.mxu0
  %2197 = vmatprep.subr.bf16.mxu0 %v2123
  %2198 = vmatpush1.bf16.msra.mxu0 %v2122
  %2199 = vmatprep.subr.bf16.mxu0 %v2119
  %2200 = vmatpush1.bf16.msra.mxu0 %v2118
  %2201 = vmatprep.subr.bf16.mxu0 %v2115
  %2202 = vmatpush1.bf16.msra.mxu0 %v2114
  %2203 = vmatprep.subr.bf16.mxu0 %v2111
  %2204 = vmatpush1.bf16.msra.mxu0 %v2110
  %2205 = vmatprep.subr.bf16.mxu0 %v2107
  %2206 = vmatpush1.bf16.msra.mxu0 %v2106
  %2207 = vmatprep.subr.bf16.mxu0 %v2103
  %2208 = vmatpush1.bf16.msra.mxu0 %v2102
  %2209 = vmatprep.subr.bf16.mxu0 %v2099
  %2210 = vmatpush1.bf16.msra.mxu0 %v2098
  %2211 = vmatprep.subr.bf16.mxu0 %v2095
  %2212 = vmatpush1.bf16.msra.mxu0 %v2094
  %2213 = vmatprep.subr.bf16.mxu0 0
  %2214 = vmatpush2.bf16.msra.mxu0 0
  %2215 = vmatprep.subr.bf16.mxu0 0
  %2216 = vmatpush2.bf16.msra.mxu0 0
  %2217 = vmatprep.subr.bf16.mxu0 0
  %2218 = vmatpush2.bf16.msra.mxu0 0
  %2219 = vmatprep.subr.bf16.mxu0 0
  %2220 = vmatpush2.bf16.msra.mxu0 0
  %2221 = vmatprep.subr.bf16.mxu0 0
  %2222 = vmatpush2.bf16.msra.mxu0 0
  %2223 = vmatprep.subr.bf16.mxu0 0
  %2224 = vmatpush2.bf16.msra.mxu0 0
  %2225 = vmatprep.subr.bf16.mxu0 0
  %2226 = vmatpush2.bf16.msra.mxu0 0
  %2227 = vmatprep.subr.bf16.mxu0 0
  %2228 = vmatpush2.bf16.msra.mxu0 0
  %2229 = vmatprep.mubr.bf16.mxu0 0
  %2230 = vmatmul.mubr.bf16.gmra.mxu0 %v1995
  %v2231 = vpop.f32.mrf.mxu0
  %v2232 = vadd.f32 0.0, %v2231
  %v2233 = vpop.f32.mrf.mxu0
  %v2234 = vadd.f32 0.0, %v2233
  %v2235 = vpop.f32.mrf.mxu0
  %v2236 = vpop.f32.mrf.mxu0
  %2237 = vdwg.mxu0
  %v2238 = vmul.f32 %v2191, %v2191
  %v2239 = vmul.f32 %v2193, %v2193
  %v2240 = vmul.f32 %v2232, %v2232
  %v2241 = vmul.f32 %v2234, %v2234
  %vm2242 = vcmask 1040384
  %v2243 = vsel %vm2242, %v2238, 0.0
  %v2244 = vsel %vm2242, %v2239, 0.0
  %v2245 = vadd.f32 %v2243, %v2244
  %v2246 = vsel %vm2242, %v2240, 0.0
  %v2247 = vadd.f32 %v2245, %v2246
  %v2248 = vsel %vm2242, %v2241, 0.0
  %v2249 = vadd.f32 %v2247, %v2248
  %2250 = vadd.xlane.f32.xlu0 %v2249
  %v2251 = vpop.xlane.xlu0 %2250
  %v2252 = vadd.f32 %v2251, 1e-12
  %v2253 = vrsqrt.pop %v2252
  %v2254 = vmul.f32 %v2191, %v2253
  %v2255 = vmul.f32 %v2193, %v2253
  %v2256 = vmul.f32 %v2232, %v2253
  %v2257 = vmul.f32 %v2234, %v2253
  %s2258 = scalar_lea.vmem %s5, 672
  %v2259 = vld [vmem:[%s2258] sm:$0xff]
  %v2260 = vld [vmem:[%s2258 + $0x8] sm:$0xff]
  %v2261 = vld [vmem:[%s2258 + $0x10] sm:$0xff]
  %v2262 = vld [vmem:[%s2258 + $0x18] sm:$0xff]
  %v2263 = vld [vmem:[%s2258 + $0x20] sm:$0xff]
  %v2264 = vld [vmem:[%s2258 + $0x28] sm:$0xff]
  %v2265 = vld [vmem:[%s2258 + $0x30] sm:$0xff]
  %v2266 = vld [vmem:[%s2258 + $0x38] sm:$0xff]
  %v2267 = vld [vmem:[%s2258 + $0x40] sm:$0xff]
  %v2268 = vld [vmem:[%s2258 + $0x48] sm:$0xff]
  %v2269 = vld [vmem:[%s2258 + $0x50] sm:$0xff]
  %v2270 = vld [vmem:[%s2258 + $0x58] sm:$0xff]
  %v2271 = vld [vmem:[%s2258 + $0x60] sm:$0xff]
  %v2272 = vld [vmem:[%s2258 + $0x68] sm:$0xff]
  %v2273 = vld [vmem:[%s2258 + $0x70] sm:$0xff]
  %v2274 = vld [vmem:[%s2258 + $0x78] sm:$0xff]
  %v2275 = vld [vmem:[%s2258 + $0x80] sm:$0xff]
  %v2276 = vld [vmem:[%s2258 + $0x88] sm:$0xff]
  %v2277 = vld [vmem:[%s2258 + $0x90] sm:$0xff]
  %v2278 = vld [vmem:[%s2258 + $0x98] sm:$0xff]
  %v2279 = vld [vmem:[%s2258 + $0xa0] sm:$0xff]
  %v2280 = vld [vmem:[%s2258 + $0xa8] sm:$0xff]
  %v2281 = vld [vmem:[%s2258 + $0xb0] sm:$0xff]
  %v2282 = vld [vmem:[%s2258 + $0xb8] sm:$0xff]
  %v2283 = vld [vmem:[%s2258 + $0xc0] sm:$0xff]
  %v2284 = vld [vmem:[%s2258 + $0xc8] sm:$0xff]
  %v2285 = vld [vmem:[%s2258 + $0xd0] sm:$0xff]
  %v2286 = vld [vmem:[%s2258 + $0xd8] sm:$0xff]
  %v2287 = vld [vmem:[%s2258 + $0xe0] sm:$0xff]
  %v2288 = vld [vmem:[%s2258 + $0xe8] sm:$0xff]
  %v2289 = vld [vmem:[%s2258 + $0xf0] sm:$0xff]
  %v2290 = vld [vmem:[%s2258 + $0xf8] sm:$0xff]
  %v2291 = vld [vmem:[%s2258 + $0x100] sm:$0xff]
  %v2292 = vld [vmem:[%s2258 + $0x108] sm:$0xff]
  %v2293 = vld [vmem:[%s2258 + $0x110] sm:$0xff]
  %v2294 = vld [vmem:[%s2258 + $0x118] sm:$0xff]
  %v2295 = vld [vmem:[%s2258 + $0x120] sm:$0xff]
  %v2296 = vld [vmem:[%s2258 + $0x128] sm:$0xff]
  %v2297 = vld [vmem:[%s2258 + $0x130] sm:$0xff]
  %v2298 = vld [vmem:[%s2258 + $0x138] sm:$0xff]
  %v2299 = vld [vmem:[%s2258 + $0x140] sm:$0xff]
  %v2300 = vld [vmem:[%s2258 + $0x148] sm:$0xff]
  %v2301 = vld [vmem:[%s2258 + $0x150] sm:$0xff]
  %v2302 = vld [vmem:[%s2258 + $0x158] sm:$0xff]
  %v2303 = vld [vmem:[%s2258 + $0x160] sm:$0xff]
  %v2304 = vld [vmem:[%s2258 + $0x168] sm:$0xff]
  %v2305 = vld [vmem:[%s2258 + $0x170] sm:$0xff]
  %v2306 = vld [vmem:[%s2258 + $0x178] sm:$0xff]
  %v2307 = vld [vmem:[%s2258 + $0x180] sm:$0xff]
  %v2308 = vld [vmem:[%s2258 + $0x188] sm:$0xff]
  %v2309 = vld [vmem:[%s2258 + $0x190] sm:$0xff]
  %v2310 = vld [vmem:[%s2258 + $0x198] sm:$0xff]
  %v2311 = vld [vmem:[%s2258 + $0x1a0] sm:$0xff]
  %v2312 = vld [vmem:[%s2258 + $0x1a8] sm:$0xff]
  %v2313 = vld [vmem:[%s2258 + $0x1b0] sm:$0xff]
  %v2314 = vld [vmem:[%s2258 + $0x1b8] sm:$0xff]
  %v2315 = vld [vmem:[%s2258 + $0x1c0] sm:$0xff]
  %v2316 = vld [vmem:[%s2258 + $0x1c8] sm:$0xff]
  %v2317 = vld [vmem:[%s2258 + $0x1d0] sm:$0xff]
  %v2318 = vld [vmem:[%s2258 + $0x1d8] sm:$0xff]
  %v2319 = vld [vmem:[%s2258 + $0x1e0] sm:$0xff]
  %v2320 = vld [vmem:[%s2258 + $0x1e8] sm:$0xff]
  %v2321 = vld [vmem:[%s2258 + $0x1f0] sm:$0xff]
  %v2322 = vld [vmem:[%s2258 + $0x1f8] sm:$0xff]
  %v2323 = vld [vmem:[%s2258 + $0x200] sm:$0xff]
  %v2324 = vld [vmem:[%s2258 + $0x208] sm:$0xff]
  %v2325 = vld [vmem:[%s2258 + $0x210] sm:$0xff]
  %v2326 = vld [vmem:[%s2258 + $0x218] sm:$0xff]
  %v2327 = vld [vmem:[%s2258 + $0x220] sm:$0xff]
  %v2328 = vld [vmem:[%s2258 + $0x228] sm:$0xff]
  %v2329 = vld [vmem:[%s2258 + $0x230] sm:$0xff]
  %v2330 = vld [vmem:[%s2258 + $0x238] sm:$0xff]
  %v2331 = vld [vmem:[%s2258 + $0x240] sm:$0xff]
  %v2332 = vld [vmem:[%s2258 + $0x248] sm:$0xff]
  %v2333 = vld [vmem:[%s2258 + $0x250] sm:$0xff]
  %v2334 = vld [vmem:[%s2258 + $0x258] sm:$0xff]
  %v2335 = vld [vmem:[%s2258 + $0x260] sm:$0xff]
  %v2336 = vld [vmem:[%s2258 + $0x268] sm:$0xff]
  %v2337 = vld [vmem:[%s2258 + $0x270] sm:$0xff]
  %v2338 = vld [vmem:[%s2258 + $0x278] sm:$0xff]
  %v2339 = vld [vmem:[%s2258 + $0x280] sm:$0xff]
  %v2340 = vld [vmem:[%s2258 + $0x288] sm:$0xff]
  %v2341 = vld [vmem:[%s2258 + $0x290] sm:$0xff]
  %v2342 = vld [vmem:[%s2258 + $0x298] sm:$0xff]
  %v2427 = vunpack.c.l.b16 %v2259
  %v2428 = vunpack.c.h.b16 %v2259
  %v2429 = vunpack.c.l.b16 %v2260
  %v2430 = vunpack.c.h.b16 %v2260
  %v2431 = vunpack.c.l.b16 %v2261
  %v2432 = vunpack.c.h.b16 %v2261
  %v2433 = vunpack.c.l.b16 %v2262
  %v2434 = vunpack.c.h.b16 %v2262
  %v2435 = vunpack.c.l.b16 %v2263
  %v2436 = vunpack.c.h.b16 %v2263
  %v2437 = vunpack.c.l.b16 %v2264
  %v2438 = vunpack.c.h.b16 %v2264
  %v2439 = vunpack.c.l.b16 %v2265
  %v2440 = vunpack.c.h.b16 %v2265
  %v2441 = vunpack.c.l.b16 %v2266
  %v2442 = vunpack.c.h.b16 %v2266
  %v2443 = vunpack.c.l.b16 %v2267
  %v2444 = vunpack.c.h.b16 %v2267
  %v2445 = vunpack.c.l.b16 %v2268
  %v2446 = vunpack.c.h.b16 %v2268
  %v2447 = vunpack.c.l.b16 %v2269
  %v2448 = vunpack.c.h.b16 %v2269
  %v2449 = vunpack.c.l.b16 %v2270
  %v2450 = vunpack.c.h.b16 %v2270
  %v2451 = vunpack.c.l.b16 %v2271
  %v2452 = vunpack.c.h.b16 %v2271
  %v2453 = vunpack.c.l.b16 %v2272
  %v2454 = vunpack.c.h.b16 %v2272
  %v2455 = vunpack.c.l.b16 %v2273
  %v2456 = vunpack.c.h.b16 %v2273
  %v2457 = vunpack.c.l.b16 %v2274
  %v2458 = vunpack.c.h.b16 %v2274
  %v2459 = vunpack.c.l.b16 %v2275
  %v2460 = vunpack.c.h.b16 %v2275
  %v2461 = vunpack.c.l.b16 %v2276
  %v2462 = vunpack.c.h.b16 %v2276
  %v2463 = vunpack.c.l.b16 %v2277
  %v2464 = vunpack.c.h.b16 %v2277
  %v2465 = vunpack.c.l.b16 %v2278
  %v2466 = vunpack.c.h.b16 %v2278
  %v2467 = vunpack.c.l.b16 %v2279
  %v2468 = vunpack.c.h.b16 %v2279
  %v2469 = vunpack.c.l.b16 %v2280
  %v2470 = vunpack.c.h.b16 %v2280
  %v2471 = vunpack.c.l.b16 %v2281
  %v2472 = vunpack.c.h.b16 %v2281
  %v2473 = vunpack.c.l.b16 %v2282
  %v2474 = vunpack.c.h.b16 %v2282
  %v2475 = vunpack.c.l.b16 %v2283
  %v2476 = vunpack.c.h.b16 %v2283
  %v2477 = vunpack.c.l.b16 %v2284
  %v2478 = vunpack.c.h.b16 %v2284
  %v2479 = vunpack.c.l.b16 %v2285
  %v2480 = vunpack.c.h.b16 %v2285
  %v2481 = vunpack.c.l.b16 %v2286
  %v2482 = vunpack.c.h.b16 %v2286
  %v2483 = vunpack.c.l.b16 %v2287
  %v2484 = vunpack.c.h.b16 %v2287
  %v2485 = vunpack.c.l.b16 %v2288
  %v2486 = vunpack.c.h.b16 %v2288
  %v2487 = vunpack.c.l.b16 %v2289
  %v2488 = vunpack.c.h.b16 %v2289
  %v2489 = vunpack.c.l.b16 %v2290
  %v2490 = vunpack.c.h.b16 %v2290
  %v2491 = vunpack.c.l.b16 %v2291
  %v2492 = vunpack.c.h.b16 %v2291
  %v2493 = vunpack.c.l.b16 %v2292
  %v2494 = vunpack.c.h.b16 %v2292
  %v2495 = vunpack.c.l.b16 %v2293
  %v2496 = vunpack.c.h.b16 %v2293
  %v2497 = vunpack.c.l.b16 %v2294
  %v2498 = vunpack.c.h.b16 %v2294
  %v2499 = vunpack.c.l.b16 %v2295
  %v2500 = vunpack.c.h.b16 %v2295
  %v2501 = vunpack.c.l.b16 %v2296
  %v2502 = vunpack.c.h.b16 %v2296
  %v2503 = vunpack.c.l.b16 %v2297
  %v2504 = vunpack.c.h.b16 %v2297
  %v2505 = vunpack.c.l.b16 %v2298
  %v2506 = vunpack.c.h.b16 %v2298
  %v2507 = vunpack.c.l.b16 %v2299
  %v2508 = vunpack.c.h.b16 %v2299
  %v2509 = vunpack.c.l.b16 %v2300
  %v2510 = vunpack.c.h.b16 %v2300
  %v2511 = vunpack.c.l.b16 %v2301
  %v2512 = vunpack.c.h.b16 %v2301
  %v2513 = vunpack.c.l.b16 %v2302
  %v2514 = vunpack.c.h.b16 %v2302
  %v2515 = vunpack.c.l.b16 %v2303
  %v2516 = vunpack.c.h.b16 %v2303
  %v2517 = vunpack.c.l.b16 %v2304
  %v2518 = vunpack.c.h.b16 %v2304
  %v2519 = vunpack.c.l.b16 %v2305
  %v2520 = vunpack.c.h.b16 %v2305
  %v2521 = vunpack.c.l.b16 %v2306
  %v2522 = vunpack.c.h.b16 %v2306
  %v2523 = vunpack.c.l.b16 %v2307
  %v2524 = vunpack.c.h.b16 %v2307
  %v2525 = vunpack.c.l.b16 %v2308
  %v2526 = vunpack.c.h.b16 %v2308
  %v2527 = vunpack.c.l.b16 %v2309
  %v2528 = vunpack.c.h.b16 %v2309
  %v2529 = vunpack.c.l.b16 %v2310
  %v2530 = vunpack.c.h.b16 %v2310
  %v2531 = vunpack.c.l.b16 %v2311
  %v2532 = vunpack.c.h.b16 %v2311
  %v2533 = vunpack.c.l.b16 %v2312
  %v2534 = vunpack.c.h.b16 %v2312
  %v2535 = vunpack.c.l.b16 %v2313
  %v2536 = vunpack.c.h.b16 %v2313
  %v2537 = vunpack.c.l.b16 %v2314
  %v2538 = vunpack.c.h.b16 %v2314
  %v2539 = vunpack.c.l.b16 %v2315
  %v2540 = vunpack.c.h.b16 %v2315
  %v2541 = vunpack.c.l.b16 %v2316
  %v2542 = vunpack.c.h.b16 %v2316
  %v2543 = vunpack.c.l.b16 %v2317
  %v2544 = vunpack.c.h.b16 %v2317
  %v2545 = vunpack.c.l.b16 %v2318
  %v2546 = vunpack.c.h.b16 %v2318
  %v2547 = vunpack.c.l.b16 %v2319
  %v2548 = vunpack.c.h.b16 %v2319
  %v2549 = vunpack.c.l.b16 %v2320
  %v2550 = vunpack.c.h.b16 %v2320
  %v2551 = vunpack.c.l.b16 %v2321
  %v2552 = vunpack.c.h.b16 %v2321
  %v2553 = vunpack.c.l.b16 %v2322
  %v2554 = vunpack.c.h.b16 %v2322
  %v2555 = vunpack.c.l.b16 %v2323
  %v2556 = vunpack.c.h.b16 %v2323
  %v2557 = vunpack.c.l.b16 %v2324
  %v2558 = vunpack.c.h.b16 %v2324
  %v2559 = vunpack.c.l.b16 %v2325
  %v2560 = vunpack.c.h.b16 %v2325
  %v2561 = vunpack.c.l.b16 %v2326
  %v2562 = vunpack.c.h.b16 %v2326
  %v2563 = vunpack.c.l.b16 %v2327
  %v2564 = vunpack.c.h.b16 %v2327
  %v2565 = vunpack.c.l.b16 %v2328
  %v2566 = vunpack.c.h.b16 %v2328
  %v2567 = vunpack.c.l.b16 %v2329
  %v2568 = vunpack.c.h.b16 %v2329
  %v2569 = vunpack.c.l.b16 %v2330
  %v2570 = vunpack.c.h.b16 %v2330
  %v2571 = vunpack.c.l.b16 %v2331
  %v2572 = vunpack.c.h.b16 %v2331
  %v2573 = vunpack.c.l.b16 %v2332
  %v2574 = vunpack.c.h.b16 %v2332
  %v2575 = vunpack.c.l.b16 %v2333
  %v2576 = vunpack.c.h.b16 %v2333
  %v2577 = vunpack.c.l.b16 %v2334
  %v2578 = vunpack.c.h.b16 %v2334
  %v2579 = vunpack.c.l.b16 %v2335
  %v2580 = vunpack.c.h.b16 %v2335
  %v2581 = vunpack.c.l.b16 %v2336
  %v2582 = vunpack.c.h.b16 %v2336
  %v2583 = vunpack.c.l.b16 %v2337
  %v2584 = vunpack.c.h.b16 %v2337
  %v2585 = vunpack.c.l.b16 %v2338
  %v2586 = vunpack.c.h.b16 %v2338
  %v2587 = vunpack.c.l.b16 %v2339
  %v2588 = vunpack.c.h.b16 %v2339
  %v2589 = vunpack.c.l.b16 %v2340
  %v2590 = vunpack.c.h.b16 %v2340
  %v2591 = vunpack.c.l.b16 %v2341
  %v2592 = vunpack.c.h.b16 %v2341
  %v2593 = vunpack.c.l.b16 %v2342
  %v2594 = vunpack.c.h.b16 %v2342
  %v2595 = vpack.c.b16 %v2429, %v2427
  %v2596 = vpack.c.b16 %v2430, %v2428
  %v2597 = vpack.c.b16 %v2433, %v2431
  %v2598 = vpack.c.b16 %v2434, %v2432
  %v2599 = vpack.c.b16 %v2437, %v2435
  %v2600 = vpack.c.b16 %v2438, %v2436
  %v2601 = vpack.c.b16 %v2441, %v2439
  %v2602 = vpack.c.b16 %v2442, %v2440
  %v2603 = vpack.c.b16 %v2445, %v2443
  %v2604 = vpack.c.b16 %v2446, %v2444
  %v2605 = vpack.c.b16 %v2449, %v2447
  %v2606 = vpack.c.b16 %v2450, %v2448
  %v2607 = vpack.c.b16 %v2453, %v2451
  %v2608 = vpack.c.b16 %v2454, %v2452
  %v2609 = vpack.c.b16 %v2457, %v2455
  %v2610 = vpack.c.b16 %v2458, %v2456
  %v2611 = vpack.c.b16 %v2461, %v2459
  %v2612 = vpack.c.b16 %v2462, %v2460
  %v2613 = vpack.c.b16 %v2465, %v2463
  %v2614 = vpack.c.b16 %v2466, %v2464
  %v2615 = vpack.c.b16 %v2469, %v2467
  %v2616 = vpack.c.b16 %v2470, %v2468
  %v2617 = vpack.c.b16 %v2473, %v2471
  %v2618 = vpack.c.b16 %v2474, %v2472
  %v2619 = vpack.c.b16 %v2477, %v2475
  %v2620 = vpack.c.b16 %v2478, %v2476
  %v2621 = vpack.c.b16 %v2481, %v2479
  %v2622 = vpack.c.b16 %v2482, %v2480
  %v2623 = vpack.c.b16 %v2485, %v2483
  %v2624 = vpack.c.b16 %v2486, %v2484
  %v2625 = vpack.c.b16 %v2489, %v2487
  %v2626 = vpack.c.b16 %v2490, %v2488
  %v2627 = vpack.c.b16 %v2493, %v2491
  %v2628 = vpack.c.b16 %v2494, %v2492
  %v2629 = vpack.c.b16 %v2497, %v2495
  %v2630 = vpack.c.b16 %v2498, %v2496
  %v2631 = vpack.c.b16 %v2501, %v2499
  %v2632 = vpack.c.b16 %v2502, %v2500
  %v2633 = vpack.c.b16 %v2505, %v2503
  %v2634 = vpack.c.b16 %v2506, %v2504
  %v2635 = vpack.c.b16 %v2509, %v2507
  %v2636 = vpack.c.b16 %v2510, %v2508
  %v2637 = vpack.c.b16 %v2513, %v2511
  %v2638 = vpack.c.b16 %v2514, %v2512
  %v2639 = vpack.c.b16 %v2517, %v2515
  %v2640 = vpack.c.b16 %v2518, %v2516
  %v2641 = vpack.c.b16 %v2521, %v2519
  %v2642 = vpack.c.b16 %v2522, %v2520
  %v2643 = vpack.c.b16 %v2525, %v2523
  %v2644 = vpack.c.b16 %v2526, %v2524
  %v2645 = vpack.c.b16 %v2529, %v2527
  %v2646 = vpack.c.b16 %v2530, %v2528
  %v2647 = vpack.c.b16 %v2533, %v2531
  %v2648 = vpack.c.b16 %v2534, %v2532
  %v2649 = vpack.c.b16 %v2537, %v2535
  %v2650 = vpack.c.b16 %v2538, %v2536
  %v2651 = vpack.c.b16 %v2541, %v2539
  %v2652 = vpack.c.b16 %v2542, %v2540
  %v2653 = vpack.c.b16 %v2545, %v2543
  %v2654 = vpack.c.b16 %v2546, %v2544
  %v2655 = vpack.c.b16 %v2549, %v2547
  %v2656 = vpack.c.b16 %v2550, %v2548
  %v2657 = vpack.c.b16 %v2553, %v2551
  %v2658 = vpack.c.b16 %v2554, %v2552
  %v2659 = vpack.c.b16 %v2557, %v2555
  %v2660 = vpack.c.b16 %v2558, %v2556
  %v2661 = vpack.c.b16 %v2561, %v2559
  %v2662 = vpack.c.b16 %v2562, %v2560
  %v2663 = vpack.c.b16 %v2565, %v2563
  %v2664 = vpack.c.b16 %v2566, %v2564
  %v2665 = vpack.c.b16 %v2569, %v2567
  %v2666 = vpack.c.b16 %v2570, %v2568
  %v2667 = vpack.c.b16 %v2573, %v2571
  %v2668 = vpack.c.b16 %v2574, %v2572
  %v2669 = vpack.c.b16 %v2577, %v2575
  %v2670 = vpack.c.b16 %v2578, %v2576
  %v2671 = vpack.c.b16 %v2581, %v2579
  %v2672 = vpack.c.b16 %v2582, %v2580
  %v2673 = vpack.c.b16 %v2585, %v2583
  %v2674 = vpack.c.b16 %v2586, %v2584
  %v2675 = vpack.c.b16 %v2589, %v2587
  %v2676 = vpack.c.b16 %v2590, %v2588
  %v2677 = vpack.c.b16 %v2593, %v2591
  %v2678 = vpack.c.b16 %v2594, %v2592
  %v2722 = vsel %vm661, %v2596, 0
  %v2725 = vsel %vm661, %v2598, 0
  %v2728 = vsel %vm661, %v2600, 0
  %v2731 = vsel %vm661, %v2602, 0
  %v2734 = vsel %vm661, %v2604, 0
  %v2737 = vsel %vm661, %v2606, 0
  %v2740 = vsel %vm661, %v2608, 0
  %v2743 = vsel %vm661, %v2610, 0
  %v2746 = vsel %vm661, %v2612, 0
  %v2749 = vsel %vm661, %v2614, 0
  %v2752 = vsel %vm661, %v2616, 0
  %v2755 = vsel %vm661, %v2618, 0
  %v2758 = vsel %vm661, %v2620, 0
  %v2761 = vsel %vm661, %v2622, 0
  %v2764 = vsel %vm661, %v2624, 0
  %v2767 = vsel %vm661, %v2626, 0
  %v2770 = vsel %vm661, %v2628, 0
  %v2773 = vsel %vm661, %v2630, 0
  %v2776 = vsel %vm661, %v2632, 0
  %v2779 = vsel %vm661, %v2634, 0
  %v2782 = vsel %vm661, %v2636, 0
  %v2785 = vsel %vm661, %v2638, 0
  %v2788 = vsel %vm661, %v2640, 0
  %v2791 = vsel %vm661, %v2642, 0
  %v2794 = vsel %vm661, %v2644, 0
  %v2797 = vsel %vm661, %v2646, 0
  %v2800 = vsel %vm661, %v2648, 0
  %v2803 = vsel %vm661, %v2650, 0
  %v2806 = vsel %vm661, %v2652, 0
  %v2809 = vsel %vm661, %v2654, 0
  %v2812 = vsel %vm661, %v2656, 0
  %v2815 = vsel %vm661, %v2658, 0
  %v2818 = vsel %vm661, %v2660, 0
  %v2821 = vsel %vm661, %v2662, 0
  %v2824 = vsel %vm661, %v2664, 0
  %v2827 = vsel %vm661, %v2666, 0
  %v2830 = vsel %vm661, %v2668, 0
  %v2833 = vsel %vm661, %v2670, 0
  %v2836 = vsel %vm661, %v2672, 0
  %v2839 = vsel %vm661, %v2674, 0
  %v2842 = vsel %vm661, %v2676, 0
  %v2845 = vsel %vm661, %v2678, 0
  %2847 = vmatprep.subr.bf16.mxu0 0
  %2848 = vmatpush1.bf16.msra.mxu0 %v640
  %2849 = vmatprep.subr.bf16.mxu0 0
  %2850 = vmatpush1.bf16.msra.mxu0 %v639
  %2851 = vmatprep.subr.bf16.mxu0 0
  %2852 = vmatpush1.bf16.msra.mxu0 %v638
  %2853 = vmatprep.subr.bf16.mxu0 0
  %2854 = vmatpush1.bf16.msra.mxu0 %v637
  %2855 = vmatprep.subr.bf16.mxu0 0
  %2856 = vmatpush1.bf16.msra.mxu0 %v636
  %2857 = vmatprep.subr.bf16.mxu0 0
  %2858 = vmatpush1.bf16.msra.mxu0 %v635
  %2859 = vmatprep.subr.bf16.mxu0 0
  %2860 = vmatpush1.bf16.msra.mxu0 %v634
  %2861 = vmatprep.subr.bf16.mxu0 0
  %2862 = vmatpush1.bf16.msra.mxu0 %v633
  %2863 = vmatprep.subr.bf16.mxu0 0
  %2864 = vmatpush2.bf16.msra.mxu0 0
  %2865 = vmatprep.subr.bf16.mxu0 0
  %2866 = vmatpush2.bf16.msra.mxu0 0
  %2867 = vmatprep.subr.bf16.mxu0 0
  %2868 = vmatpush2.bf16.msra.mxu0 %v646
  %2869 = vmatprep.subr.bf16.mxu0 0
  %2870 = vmatpush2.bf16.msra.mxu0 %v645
  %2871 = vmatprep.subr.bf16.mxu0 0
  %2872 = vmatpush2.bf16.msra.mxu0 %v644
  %2873 = vmatprep.subr.bf16.mxu0 0
  %2874 = vmatpush2.bf16.msra.mxu0 %v643
  %2875 = vmatprep.subr.bf16.mxu0 0
  %2876 = vmatpush2.bf16.msra.mxu0 %v642
  %2877 = vmatprep.subr.bf16.mxu0 0
  %2878 = vmatpush2.bf16.msra.mxu0 %v641
  %2879 = vmatprep.mubr.bf16.mxu0 %v2722
  %2880 = vmatmul.mubr.bf16.gmra.mxu0 %v2595
  %v2881 = vpop.f32.mrf.mxu0
  %v2882 = vadd.f32 0.0, %v2881
  %v2883 = vpop.f32.mrf.mxu0
  %v2884 = vpop.f32.mrf.mxu0
  %v2885 = vadd.f32 0.0, %v2884
  %v2886 = vpop.f32.mrf.mxu0
  %2887 = vmatprep.mubr.bf16.mxu0 %v2725
  %2888 = vmatmul.mubr.bf16.gmra.mxu0 %v2597
  %v2889 = vpop.f32.mrf.mxu0
  %v2890 = vadd.f32 0.0, %v2889
  %v2891 = vpop.f32.mrf.mxu0
  %v2892 = vpop.f32.mrf.mxu0
  %v2893 = vadd.f32 0.0, %v2892
  %v2894 = vpop.f32.mrf.mxu0
  %2895 = vmatprep.mubr.bf16.mxu0 %v2728
  %2896 = vmatmul.mubr.bf16.gmra.mxu0 %v2599
  %v2897 = vpop.f32.mrf.mxu0
  %v2898 = vadd.f32 0.0, %v2897
  %v2899 = vpop.f32.mrf.mxu0
  %v2900 = vpop.f32.mrf.mxu0
  %v2901 = vadd.f32 0.0, %v2900
  %v2902 = vpop.f32.mrf.mxu0
  %2903 = vmatprep.mubr.bf16.mxu0 %v2731
  %2904 = vmatmul.mubr.bf16.gmra.mxu0 %v2601
  %v2905 = vpop.f32.mrf.mxu0
  %v2906 = vadd.f32 0.0, %v2905
  %v2907 = vpop.f32.mrf.mxu0
  %v2908 = vpop.f32.mrf.mxu0
  %v2909 = vadd.f32 0.0, %v2908
  %v2910 = vpop.f32.mrf.mxu0
  %2911 = vmatprep.mubr.bf16.mxu0 %v2734
  %2912 = vmatmul.mubr.bf16.gmra.mxu0 %v2603
  %v2913 = vpop.f32.mrf.mxu0
  %v2914 = vadd.f32 0.0, %v2913
  %v2915 = vpop.f32.mrf.mxu0
  %v2916 = vpop.f32.mrf.mxu0
  %v2917 = vadd.f32 0.0, %v2916
  %v2918 = vpop.f32.mrf.mxu0
  %2919 = vmatprep.mubr.bf16.mxu0 %v2737
  %2920 = vmatmul.mubr.bf16.gmra.mxu0 %v2605
  %v2921 = vpop.f32.mrf.mxu0
  %v2922 = vadd.f32 0.0, %v2921
  %v2923 = vpop.f32.mrf.mxu0
  %v2924 = vpop.f32.mrf.mxu0
  %v2925 = vadd.f32 0.0, %v2924
  %v2926 = vpop.f32.mrf.mxu0
  %2927 = vmatprep.mubr.bf16.mxu0 %v2740
  %2928 = vmatmul.mubr.bf16.gmra.mxu0 %v2607
  %v2929 = vpop.f32.mrf.mxu0
  %v2930 = vadd.f32 0.0, %v2929
  %v2931 = vpop.f32.mrf.mxu0
  %v2932 = vpop.f32.mrf.mxu0
  %v2933 = vadd.f32 0.0, %v2932
  %v2934 = vpop.f32.mrf.mxu0
  %2935 = vmatprep.mubr.bf16.mxu0 %v2743
  %2936 = vmatmul.mubr.bf16.gmra.mxu0 %v2609
  %v2937 = vpop.f32.mrf.mxu0
  %v2938 = vadd.f32 0.0, %v2937
  %v2939 = vpop.f32.mrf.mxu0
  %v2940 = vpop.f32.mrf.mxu0
  %v2941 = vadd.f32 0.0, %v2940
  %v2942 = vpop.f32.mrf.mxu0
  %2943 = vmatprep.mubr.bf16.mxu0 %v2746
  %2944 = vmatmul.mubr.bf16.gmra.mxu0 %v2611
  %v2945 = vpop.f32.mrf.mxu0
  %v2946 = vadd.f32 0.0, %v2945
  %v2947 = vpop.f32.mrf.mxu0
  %v2948 = vpop.f32.mrf.mxu0
  %v2949 = vadd.f32 0.0, %v2948
  %v2950 = vpop.f32.mrf.mxu0
  %2951 = vmatprep.mubr.bf16.mxu0 %v2749
  %2952 = vmatmul.mubr.bf16.gmra.mxu0 %v2613
  %v2953 = vpop.f32.mrf.mxu0
  %v2954 = vadd.f32 0.0, %v2953
  %v2955 = vpop.f32.mrf.mxu0
  %v2956 = vpop.f32.mrf.mxu0
  %v2957 = vadd.f32 0.0, %v2956
  %v2958 = vpop.f32.mrf.mxu0
  %2959 = vmatprep.mubr.bf16.mxu0 %v2752
  %2960 = vmatmul.mubr.bf16.gmra.mxu0 %v2615
  %v2961 = vpop.f32.mrf.mxu0
  %v2962 = vadd.f32 0.0, %v2961
  %v2963 = vpop.f32.mrf.mxu0
  %v2964 = vpop.f32.mrf.mxu0
  %v2965 = vadd.f32 0.0, %v2964
  %v2966 = vpop.f32.mrf.mxu0
  %2967 = vmatprep.mubr.bf16.mxu0 %v2755
  %2968 = vmatmul.mubr.bf16.gmra.mxu0 %v2617
  %v2969 = vpop.f32.mrf.mxu0
  %v2970 = vadd.f32 0.0, %v2969
  %v2971 = vpop.f32.mrf.mxu0
  %v2972 = vpop.f32.mrf.mxu0
  %v2973 = vadd.f32 0.0, %v2972
  %v2974 = vpop.f32.mrf.mxu0
  %2975 = vmatprep.mubr.bf16.mxu0 %v2758
  %2976 = vmatmul.mubr.bf16.gmra.mxu0 %v2619
  %v2977 = vpop.f32.mrf.mxu0
  %v2978 = vadd.f32 0.0, %v2977
  %v2979 = vpop.f32.mrf.mxu0
  %v2980 = vpop.f32.mrf.mxu0
  %v2981 = vadd.f32 0.0, %v2980
  %v2982 = vpop.f32.mrf.mxu0
  %2983 = vmatprep.mubr.bf16.mxu0 %v2761
  %2984 = vmatmul.mubr.bf16.gmra.mxu0 %v2621
  %v2985 = vpop.f32.mrf.mxu0
  %v2986 = vadd.f32 0.0, %v2985
  %v2987 = vpop.f32.mrf.mxu0
  %v2988 = vpop.f32.mrf.mxu0
  %v2989 = vadd.f32 0.0, %v2988
  %v2990 = vpop.f32.mrf.mxu0
  %2991 = vmatprep.mubr.bf16.mxu0 %v2764
  %2992 = vmatmul.mubr.bf16.gmra.mxu0 %v2623
  %v2993 = vpop.f32.mrf.mxu0
  %v2994 = vadd.f32 0.0, %v2993
  %v2995 = vpop.f32.mrf.mxu0
  %v2996 = vpop.f32.mrf.mxu0
  %v2997 = vadd.f32 0.0, %v2996
  %v2998 = vpop.f32.mrf.mxu0
  %2999 = vmatprep.mubr.bf16.mxu0 %v2767
  %3000 = vmatmul.mubr.bf16.gmra.mxu0 %v2625
  %v3001 = vpop.f32.mrf.mxu0
  %v3002 = vadd.f32 0.0, %v3001
  %v3003 = vpop.f32.mrf.mxu0
  %v3004 = vpop.f32.mrf.mxu0
  %v3005 = vadd.f32 0.0, %v3004
  %v3006 = vpop.f32.mrf.mxu0
  %3007 = vmatprep.mubr.bf16.mxu0 %v2770
  %3008 = vmatmul.mubr.bf16.gmra.mxu0 %v2627
  %v3009 = vpop.f32.mrf.mxu0
  %v3010 = vadd.f32 0.0, %v3009
  %v3011 = vpop.f32.mrf.mxu0
  %v3012 = vpop.f32.mrf.mxu0
  %v3013 = vadd.f32 0.0, %v3012
  %v3014 = vpop.f32.mrf.mxu0
  %3015 = vmatprep.mubr.bf16.mxu0 %v2773
  %3016 = vmatmul.mubr.bf16.gmra.mxu0 %v2629
  %v3017 = vpop.f32.mrf.mxu0
  %v3018 = vadd.f32 0.0, %v3017
  %v3019 = vpop.f32.mrf.mxu0
  %v3020 = vpop.f32.mrf.mxu0
  %v3021 = vadd.f32 0.0, %v3020
  %v3022 = vpop.f32.mrf.mxu0
  %3023 = vmatprep.mubr.bf16.mxu0 %v2776
  %3024 = vmatmul.mubr.bf16.gmra.mxu0 %v2631
  %v3025 = vpop.f32.mrf.mxu0
  %v3026 = vadd.f32 0.0, %v3025
  %v3027 = vpop.f32.mrf.mxu0
  %v3028 = vpop.f32.mrf.mxu0
  %v3029 = vadd.f32 0.0, %v3028
  %v3030 = vpop.f32.mrf.mxu0
  %3031 = vmatprep.mubr.bf16.mxu0 %v2779
  %3032 = vmatmul.mubr.bf16.gmra.mxu0 %v2633
  %v3033 = vpop.f32.mrf.mxu0
  %v3034 = vadd.f32 0.0, %v3033
  %v3035 = vpop.f32.mrf.mxu0
  %v3036 = vpop.f32.mrf.mxu0
  %v3037 = vadd.f32 0.0, %v3036
  %v3038 = vpop.f32.mrf.mxu0
  %3039 = vmatprep.mubr.bf16.mxu0 %v2782
  %3040 = vmatmul.mubr.bf16.gmra.mxu0 %v2635
  %v3041 = vpop.f32.mrf.mxu0
  %v3042 = vadd.f32 0.0, %v3041
  %v3043 = vpop.f32.mrf.mxu0
  %v3044 = vpop.f32.mrf.mxu0
  %v3045 = vadd.f32 0.0, %v3044
  %v3046 = vpop.f32.mrf.mxu0
  %3047 = vmatprep.mubr.bf16.mxu0 %v2785
  %3048 = vmatmul.mubr.bf16.gmra.mxu0 %v2637
  %v3049 = vpop.f32.mrf.mxu0
  %v3050 = vadd.f32 0.0, %v3049
  %v3051 = vpop.f32.mrf.mxu0
  %v3052 = vpop.f32.mrf.mxu0
  %v3053 = vadd.f32 0.0, %v3052
  %v3054 = vpop.f32.mrf.mxu0
  %3055 = vmatprep.mubr.bf16.mxu0 %v2788
  %3056 = vmatmul.mubr.bf16.gmra.mxu0 %v2639
  %v3057 = vpop.f32.mrf.mxu0
  %v3058 = vadd.f32 0.0, %v3057
  %v3059 = vpop.f32.mrf.mxu0
  %v3060 = vpop.f32.mrf.mxu0
  %v3061 = vadd.f32 0.0, %v3060
  %v3062 = vpop.f32.mrf.mxu0
  %3063 = vmatprep.mubr.bf16.mxu0 %v2791
  %3064 = vmatmul.mubr.bf16.gmra.mxu0 %v2641
  %v3065 = vpop.f32.mrf.mxu0
  %v3066 = vadd.f32 0.0, %v3065
  %v3067 = vpop.f32.mrf.mxu0
  %v3068 = vpop.f32.mrf.mxu0
  %v3069 = vadd.f32 0.0, %v3068
  %v3070 = vpop.f32.mrf.mxu0
  %3071 = vmatprep.mubr.bf16.mxu0 %v2794
  %3072 = vmatmul.mubr.bf16.gmra.mxu0 %v2643
  %v3073 = vpop.f32.mrf.mxu0
  %v3074 = vadd.f32 0.0, %v3073
  %v3075 = vpop.f32.mrf.mxu0
  %v3076 = vpop.f32.mrf.mxu0
  %v3077 = vadd.f32 0.0, %v3076
  %v3078 = vpop.f32.mrf.mxu0
  %3079 = vmatprep.mubr.bf16.mxu0 %v2797
  %3080 = vmatmul.mubr.bf16.gmra.mxu0 %v2645
  %v3081 = vpop.f32.mrf.mxu0
  %v3082 = vadd.f32 0.0, %v3081
  %v3083 = vpop.f32.mrf.mxu0
  %v3084 = vpop.f32.mrf.mxu0
  %v3085 = vadd.f32 0.0, %v3084
  %v3086 = vpop.f32.mrf.mxu0
  %3087 = vmatprep.mubr.bf16.mxu0 %v2800
  %3088 = vmatmul.mubr.bf16.gmra.mxu0 %v2647
  %v3089 = vpop.f32.mrf.mxu0
  %v3090 = vadd.f32 0.0, %v3089
  %v3091 = vpop.f32.mrf.mxu0
  %v3092 = vpop.f32.mrf.mxu0
  %v3093 = vadd.f32 0.0, %v3092
  %v3094 = vpop.f32.mrf.mxu0
  %3095 = vmatprep.mubr.bf16.mxu0 %v2803
  %3096 = vmatmul.mubr.bf16.gmra.mxu0 %v2649
  %v3097 = vpop.f32.mrf.mxu0
  %v3098 = vadd.f32 0.0, %v3097
  %v3099 = vpop.f32.mrf.mxu0
  %v3100 = vpop.f32.mrf.mxu0
  %v3101 = vadd.f32 0.0, %v3100
  %v3102 = vpop.f32.mrf.mxu0
  %3103 = vmatprep.mubr.bf16.mxu0 %v2806
  %3104 = vmatmul.mubr.bf16.gmra.mxu0 %v2651
  %v3105 = vpop.f32.mrf.mxu0
  %v3106 = vadd.f32 0.0, %v3105
  %v3107 = vpop.f32.mrf.mxu0
  %v3108 = vpop.f32.mrf.mxu0
  %v3109 = vadd.f32 0.0, %v3108
  %v3110 = vpop.f32.mrf.mxu0
  %3111 = vmatprep.mubr.bf16.mxu0 %v2809
  %3112 = vmatmul.mubr.bf16.gmra.mxu0 %v2653
  %v3113 = vpop.f32.mrf.mxu0
  %v3114 = vadd.f32 0.0, %v3113
  %v3115 = vpop.f32.mrf.mxu0
  %v3116 = vpop.f32.mrf.mxu0
  %v3117 = vadd.f32 0.0, %v3116
  %v3118 = vpop.f32.mrf.mxu0
  %3119 = vmatprep.mubr.bf16.mxu0 %v2812
  %3120 = vmatmul.mubr.bf16.gmra.mxu0 %v2655
  %v3121 = vpop.f32.mrf.mxu0
  %v3122 = vadd.f32 0.0, %v3121
  %v3123 = vpop.f32.mrf.mxu0
  %v3124 = vpop.f32.mrf.mxu0
  %v3125 = vadd.f32 0.0, %v3124
  %v3126 = vpop.f32.mrf.mxu0
  %3127 = vmatprep.mubr.bf16.mxu0 %v2815
  %3128 = vmatmul.mubr.bf16.gmra.mxu0 %v2657
  %v3129 = vpop.f32.mrf.mxu0
  %v3130 = vadd.f32 0.0, %v3129
  %v3131 = vpop.f32.mrf.mxu0
  %v3132 = vpop.f32.mrf.mxu0
  %v3133 = vadd.f32 0.0, %v3132
  %v3134 = vpop.f32.mrf.mxu0
  %3135 = vmatprep.mubr.bf16.mxu0 %v2818
  %3136 = vmatmul.mubr.bf16.gmra.mxu0 %v2659
  %v3137 = vpop.f32.mrf.mxu0
  %v3138 = vadd.f32 0.0, %v3137
  %v3139 = vpop.f32.mrf.mxu0
  %v3140 = vpop.f32.mrf.mxu0
  %v3141 = vadd.f32 0.0, %v3140
  %v3142 = vpop.f32.mrf.mxu0
  %3143 = vmatprep.mubr.bf16.mxu0 %v2821
  %3144 = vmatmul.mubr.bf16.gmra.mxu0 %v2661
  %v3145 = vpop.f32.mrf.mxu0
  %v3146 = vadd.f32 0.0, %v3145
  %v3147 = vpop.f32.mrf.mxu0
  %v3148 = vpop.f32.mrf.mxu0
  %v3149 = vadd.f32 0.0, %v3148
  %v3150 = vpop.f32.mrf.mxu0
  %3151 = vmatprep.mubr.bf16.mxu0 %v2824
  %3152 = vmatmul.mubr.bf16.gmra.mxu0 %v2663
  %v3153 = vpop.f32.mrf.mxu0
  %v3154 = vadd.f32 0.0, %v3153
  %v3155 = vpop.f32.mrf.mxu0
  %v3156 = vpop.f32.mrf.mxu0
  %v3157 = vadd.f32 0.0, %v3156
  %v3158 = vpop.f32.mrf.mxu0
  %3159 = vmatprep.mubr.bf16.mxu0 %v2827
  %3160 = vmatmul.mubr.bf16.gmra.mxu0 %v2665
  %v3161 = vpop.f32.mrf.mxu0
  %v3162 = vadd.f32 0.0, %v3161
  %v3163 = vpop.f32.mrf.mxu0
  %v3164 = vpop.f32.mrf.mxu0
  %v3165 = vadd.f32 0.0, %v3164
  %v3166 = vpop.f32.mrf.mxu0
  %3167 = vmatprep.mubr.bf16.mxu0 %v2830
  %3168 = vmatmul.mubr.bf16.gmra.mxu0 %v2667
  %v3169 = vpop.f32.mrf.mxu0
  %v3170 = vadd.f32 0.0, %v3169
  %v3171 = vpop.f32.mrf.mxu0
  %v3172 = vpop.f32.mrf.mxu0
  %v3173 = vadd.f32 0.0, %v3172
  %v3174 = vpop.f32.mrf.mxu0
  %3175 = vmatprep.mubr.bf16.mxu0 %v2833
  %3176 = vmatmul.mubr.bf16.gmra.mxu0 %v2669
  %v3177 = vpop.f32.mrf.mxu0
  %v3178 = vadd.f32 0.0, %v3177
  %v3179 = vpop.f32.mrf.mxu0
  %v3180 = vpop.f32.mrf.mxu0
  %v3181 = vadd.f32 0.0, %v3180
  %v3182 = vpop.f32.mrf.mxu0
  %3183 = vmatprep.mubr.bf16.mxu0 %v2836
  %3184 = vmatmul.mubr.bf16.gmra.mxu0 %v2671
  %v3185 = vpop.f32.mrf.mxu0
  %v3186 = vadd.f32 0.0, %v3185
  %v3187 = vpop.f32.mrf.mxu0
  %v3188 = vpop.f32.mrf.mxu0
  %v3189 = vadd.f32 0.0, %v3188
  %v3190 = vpop.f32.mrf.mxu0
  %3191 = vmatprep.mubr.bf16.mxu0 %v2839
  %3192 = vmatmul.mubr.bf16.gmra.mxu0 %v2673
  %v3193 = vpop.f32.mrf.mxu0
  %v3194 = vadd.f32 0.0, %v3193
  %v3195 = vpop.f32.mrf.mxu0
  %v3196 = vpop.f32.mrf.mxu0
  %v3197 = vadd.f32 0.0, %v3196
  %v3198 = vpop.f32.mrf.mxu0
  %3199 = vmatprep.mubr.bf16.mxu0 %v2842
  %3200 = vmatmul.mubr.bf16.gmra.mxu0 %v2675
  %v3201 = vpop.f32.mrf.mxu0
  %v3202 = vadd.f32 0.0, %v3201
  %v3203 = vpop.f32.mrf.mxu0
  %v3204 = vpop.f32.mrf.mxu0
  %v3205 = vadd.f32 0.0, %v3204
  %v3206 = vpop.f32.mrf.mxu0
  %3207 = vmatprep.mubr.bf16.mxu0 %v2845
  %3208 = vmatmul.mubr.bf16.gmra.mxu0 %v2677
  %v3209 = vpop.f32.mrf.mxu0
  %v3210 = vadd.f32 0.0, %v3209
  %v3211 = vpop.f32.mrf.mxu0
  %v3212 = vpop.f32.mrf.mxu0
  %v3213 = vadd.f32 0.0, %v3212
  %v3214 = vpop.f32.mrf.mxu0
  %3215 = vdwg.mxu0
  %v3216 = vpack.c.bf16 %v2885, %v2882
  %v3217 = vpack.c.bf16 %v2893, %v2890
  %v3218 = vpack.c.bf16 %v2901, %v2898
  %v3219 = vpack.c.bf16 %v2909, %v2906
  %v3220 = vpack.c.bf16 %v2917, %v2914
  %v3221 = vpack.c.bf16 %v2925, %v2922
  %v3222 = vpack.c.bf16 %v2933, %v2930
  %v3223 = vpack.c.bf16 %v2941, %v2938
  %v3224 = vpack.c.bf16 %v2949, %v2946
  %v3225 = vpack.c.bf16 %v2957, %v2954
  %v3226 = vpack.c.bf16 %v2965, %v2962
  %v3227 = vpack.c.bf16 %v2973, %v2970
  %v3228 = vpack.c.bf16 %v2981, %v2978
  %v3229 = vpack.c.bf16 %v2989, %v2986
  %v3230 = vpack.c.bf16 %v2997, %v2994
  %v3231 = vpack.c.bf16 %v3005, %v3002
  %v3232 = vpack.c.bf16 %v3013, %v3010
  %v3233 = vpack.c.bf16 %v3021, %v3018
  %v3234 = vpack.c.bf16 %v3029, %v3026
  %v3235 = vpack.c.bf16 %v3037, %v3034
  %v3236 = vpack.c.bf16 %v3045, %v3042
  %v3237 = vpack.c.bf16 %v3053, %v3050
  %v3238 = vpack.c.bf16 %v3061, %v3058
  %v3239 = vpack.c.bf16 %v3069, %v3066
  %v3240 = vpack.c.bf16 %v3077, %v3074
  %v3241 = vpack.c.bf16 %v3085, %v3082
  %v3242 = vpack.c.bf16 %v3093, %v3090
  %v3243 = vpack.c.bf16 %v3101, %v3098
  %v3244 = vpack.c.bf16 %v3109, %v3106
  %v3245 = vpack.c.bf16 %v3117, %v3114
  %v3246 = vpack.c.bf16 %v3125, %v3122
  %v3247 = vpack.c.bf16 %v3133, %v3130
  %v3248 = vpack.c.bf16 %v3141, %v3138
  %v3249 = vpack.c.bf16 %v3149, %v3146
  %v3250 = vpack.c.bf16 %v3157, %v3154
  %v3251 = vpack.c.bf16 %v3165, %v3162
  %v3252 = vpack.c.bf16 %v3173, %v3170
  %v3253 = vpack.c.bf16 %v3181, %v3178
  %v3254 = vpack.c.bf16 %v3189, %v3186
  %v3255 = vpack.c.bf16 %v3197, %v3194
  %v3256 = vpack.c.bf16 %v3205, %v3202
  %v3257 = vpack.c.bf16 %v3213, %v3210
  %3258 = vmatprep.subr.bf16.mxu0 0
  %3259 = vmatpush1.bf16.msra.mxu0 %v3223
  %3260 = vmatprep.subr.bf16.mxu0 0
  %3261 = vmatpush1.bf16.msra.mxu0 %v3222
  %3262 = vmatprep.subr.bf16.mxu0 0
  %3263 = vmatpush1.bf16.msra.mxu0 %v3221
  %3264 = vmatprep.subr.bf16.mxu0 0
  %3265 = vmatpush1.bf16.msra.mxu0 %v3220
  %3266 = vmatprep.subr.bf16.mxu0 0
  %3267 = vmatpush1.bf16.msra.mxu0 %v3219
  %3268 = vmatprep.subr.bf16.mxu0 0
  %3269 = vmatpush1.bf16.msra.mxu0 %v3218
  %3270 = vmatprep.subr.bf16.mxu0 0
  %3271 = vmatpush1.bf16.msra.mxu0 %v3217
  %3272 = vmatprep.subr.bf16.mxu0 0
  %3273 = vmatpush1.bf16.msra.mxu0 %v3216
  %3274 = vmatprep.subr.bf16.mxu0 0
  %3275 = vmatpush2.bf16.msra.mxu0 0
  %3276 = vmatprep.subr.bf16.mxu0 0
  %3277 = vmatpush2.bf16.msra.mxu0 0
  %3278 = vmatprep.subr.bf16.mxu0 0
  %3279 = vmatpush2.bf16.msra.mxu0 %v3229
  %3280 = vmatprep.subr.bf16.mxu0 0
  %3281 = vmatpush2.bf16.msra.mxu0 %v3228
  %3282 = vmatprep.subr.bf16.mxu0 0
  %3283 = vmatpush2.bf16.msra.mxu0 %v3227
  %3284 = vmatprep.subr.bf16.mxu0 0
  %3285 = vmatpush2.bf16.msra.mxu0 %v3226
  %3286 = vmatprep.subr.bf16.mxu0 0
  %3287 = vmatpush2.bf16.msra.mxu0 %v3225
  %3288 = vmatprep.subr.bf16.mxu0 0
  %3289 = vmatpush2.bf16.msra.mxu0 %v3224
  %3290 = vmatprep.mubr.bf16.mxu0 %v1263
  %3291 = vmatmul.mubr.bf16.gmra.mxu0 %v1241
  %v3292 = vpop.f32.mrf.mxu0
  %v3293 = vadd.f32 0.0, %v3292
  %v3294 = vpop.f32.mrf.mxu0
  %v3295 = vpop.f32.mrf.mxu0
  %v3296 = vadd.f32 0.0, %v3295
  %v3297 = vpop.f32.mrf.mxu0
  %3298 = vmatprep.mubr.bf16.mxu0 %v1266
  %3299 = vmatmul.mubr.bf16.gmra.mxu0 %v1243
  %v3300 = vpop.f32.mrf.mxu0
  %v3301 = vadd.f32 0.0, %v3300
  %v3302 = vpop.f32.mrf.mxu0
  %v3303 = vpop.f32.mrf.mxu0
  %v3304 = vadd.f32 0.0, %v3303
  %v3305 = vpop.f32.mrf.mxu0
  %3306 = vmatprep.mubr.bf16.mxu0 %v1269
  %3307 = vmatmul.mubr.bf16.gmra.mxu0 %v1245
  %v3308 = vpop.f32.mrf.mxu0
  %v3309 = vadd.f32 0.0, %v3308
  %v3310 = vpop.f32.mrf.mxu0
  %v3311 = vpop.f32.mrf.mxu0
  %v3312 = vadd.f32 0.0, %v3311
  %v3313 = vpop.f32.mrf.mxu0
  %3314 = vmatprep.mubr.bf16.mxu0 %v1272
  %3315 = vmatmul.mubr.bf16.gmra.mxu0 %v1247
  %v3316 = vpop.f32.mrf.mxu0
  %v3317 = vadd.f32 0.0, %v3316
  %v3318 = vpop.f32.mrf.mxu0
  %v3319 = vpop.f32.mrf.mxu0
  %v3320 = vadd.f32 0.0, %v3319
  %v3321 = vpop.f32.mrf.mxu0
  %3322 = vmatprep.mubr.bf16.mxu0 %v1275
  %3323 = vmatmul.mubr.bf16.gmra.mxu0 %v1249
  %v3324 = vpop.f32.mrf.mxu0
  %v3325 = vadd.f32 0.0, %v3324
  %v3326 = vpop.f32.mrf.mxu0
  %v3327 = vpop.f32.mrf.mxu0
  %v3328 = vadd.f32 0.0, %v3327
  %v3329 = vpop.f32.mrf.mxu0
  %3330 = vmatprep.mubr.bf16.mxu0 %v1278
  %3331 = vmatmul.mubr.bf16.gmra.mxu0 %v1251
  %v3332 = vpop.f32.mrf.mxu0
  %v3333 = vadd.f32 0.0, %v3332
  %v3334 = vpop.f32.mrf.mxu0
  %v3335 = vpop.f32.mrf.mxu0
  %v3336 = vadd.f32 0.0, %v3335
  %v3337 = vpop.f32.mrf.mxu0
  %3338 = vmatprep.mubr.bf16.mxu0 %v1281
  %3339 = vmatmul.mubr.bf16.gmra.mxu0 %v1253
  %v3340 = vpop.f32.mrf.mxu0
  %v3341 = vadd.f32 0.0, %v3340
  %v3342 = vpop.f32.mrf.mxu0
  %v3343 = vpop.f32.mrf.mxu0
  %v3344 = vadd.f32 0.0, %v3343
  %v3345 = vpop.f32.mrf.mxu0
  %3346 = vdwg.mxu0
  %v3347 = vpack.c.bf16 %v3296, %v3293
  %v3348 = vpack.c.bf16 %v3304, %v3301
  %v3349 = vpack.c.bf16 %v3312, %v3309
  %v3350 = vpack.c.bf16 %v3320, %v3317
  %v3351 = vpack.c.bf16 %v3328, %v3325
  %v3352 = vpack.c.bf16 %v3336, %v3333
  %v3353 = vpack.c.bf16 %v3344, %v3341
  %3354 = vmatprep.subr.bf16.mxu0 0
  %3355 = vmatpush1.bf16.msra.mxu0 %v1424
  %3356 = vmatprep.subr.bf16.mxu0 0
  %3357 = vmatpush1.bf16.msra.mxu0 %v1423
  %3358 = vmatprep.subr.bf16.mxu0 0
  %3359 = vmatpush1.bf16.msra.mxu0 %v1422
  %3360 = vmatprep.subr.bf16.mxu0 0
  %3361 = vmatpush1.bf16.msra.mxu0 %v1421
  %3362 = vmatprep.subr.bf16.mxu0 0
  %3363 = vmatpush1.bf16.msra.mxu0 %v1420
  %3364 = vmatprep.subr.bf16.mxu0 0
  %3365 = vmatpush1.bf16.msra.mxu0 %v1419
  %3366 = vmatprep.subr.bf16.mxu0 0
  %3367 = vmatpush1.bf16.msra.mxu0 %v1418
  %3368 = vmatprep.subr.bf16.mxu0 0
  %3369 = vmatpush1.bf16.msra.mxu0 %v1417
  %3370 = vmatprep.subr.bf16.mxu0 0
  %3371 = vmatpush2.bf16.msra.mxu0 0
  %3372 = vmatprep.subr.bf16.mxu0 0
  %3373 = vmatpush2.bf16.msra.mxu0 0
  %3374 = vmatprep.subr.bf16.mxu0 0
  %3375 = vmatpush2.bf16.msra.mxu0 0
  %3376 = vmatprep.subr.bf16.mxu0 0
  %3377 = vmatpush2.bf16.msra.mxu0 0
  %3378 = vmatprep.subr.bf16.mxu0 0
  %3379 = vmatpush2.bf16.msra.mxu0 0
  %3380 = vmatprep.subr.bf16.mxu0 0
  %3381 = vmatpush2.bf16.msra.mxu0 0
  %3382 = vmatprep.subr.bf16.mxu0 0
  %3383 = vmatpush2.bf16.msra.mxu0 0
  %3384 = vmatprep.subr.bf16.mxu0 0
  %3385 = vmatpush2.bf16.msra.mxu0 0
  %3386 = vmatprep.mubr.bf16.mxu0 0
  %3387 = vmatmul.mubr.bf16.gmra.mxu0 %v3347
  %v3388 = vpop.f32.mrf.mxu0
  %v3389 = vadd.f32 %v1383, %v3388
  %v3390 = vpop.f32.mrf.mxu0
  %v3391 = vpop.f32.mrf.mxu0
  %v3392 = vadd.f32 %v1383, %v3391
  %v3393 = vpop.f32.mrf.mxu0
  %3394 = vmatprep.mubr.bf16.mxu0 0
  %3395 = vmatmul.mubr.bf16.gmra.mxu0 %v3348
  %v3396 = vpop.f32.mrf.mxu0
  %v3397 = vadd.f32 %v1383, %v3396
  %v3398 = vpop.f32.mrf.mxu0
  %v3399 = vpop.f32.mrf.mxu0
  %v3400 = vadd.f32 %v1383, %v3399
  %v3401 = vpop.f32.mrf.mxu0
  %3402 = vmatprep.mubr.bf16.mxu0 0
  %3403 = vmatmul.mubr.bf16.gmra.mxu0 %v3349
  %v3404 = vpop.f32.mrf.mxu0
  %v3405 = vadd.f32 %v1383, %v3404
  %v3406 = vpop.f32.mrf.mxu0
  %v3407 = vpop.f32.mrf.mxu0
  %v3408 = vadd.f32 %v1383, %v3407
  %v3409 = vpop.f32.mrf.mxu0
  %3410 = vmatprep.mubr.bf16.mxu0 0
  %3411 = vmatmul.mubr.bf16.gmra.mxu0 %v3350
  %v3412 = vpop.f32.mrf.mxu0
  %v3413 = vadd.f32 %v1383, %v3412
  %v3414 = vpop.f32.mrf.mxu0
  %v3415 = vpop.f32.mrf.mxu0
  %v3416 = vadd.f32 %v1383, %v3415
  %v3417 = vpop.f32.mrf.mxu0
  %3418 = vmatprep.mubr.bf16.mxu0 0
  %3419 = vmatmul.mubr.bf16.gmra.mxu0 %v3351
  %v3420 = vpop.f32.mrf.mxu0
  %v3421 = vadd.f32 %v1383, %v3420
  %v3422 = vpop.f32.mrf.mxu0
  %v3423 = vpop.f32.mrf.mxu0
  %v3424 = vadd.f32 %v1383, %v3423
  %v3425 = vpop.f32.mrf.mxu0
  %3426 = vmatprep.mubr.bf16.mxu0 0
  %3427 = vmatmul.mubr.bf16.gmra.mxu0 %v3352
  %v3428 = vpop.f32.mrf.mxu0
  %v3429 = vadd.f32 %v1383, %v3428
  %v3430 = vpop.f32.mrf.mxu0
  %v3431 = vpop.f32.mrf.mxu0
  %v3432 = vadd.f32 %v1383, %v3431
  %v3433 = vpop.f32.mrf.mxu0
  %3434 = vmatprep.mubr.bf16.mxu0 0
  %3435 = vmatmul.mubr.bf16.gmra.mxu0 %v3353
  %v3436 = vpop.f32.mrf.mxu0
  %v3437 = vadd.f32 %v1383, %v3436
  %v3438 = vpop.f32.mrf.mxu0
  %v3439 = vpop.f32.mrf.mxu0
  %v3440 = vadd.f32 %v1383, %v3439
  %v3441 = vpop.f32.mrf.mxu0
  %3442 = vdwg.mxu0
  %v3443 = vmax.f32 %v3389, 0.0
  %v3444 = vmax.f32 %v3392, 0.0
  %v3445 = vmax.f32 %v3397, 0.0
  %v3446 = vmax.f32 %v3400, 0.0
  %v3447 = vmax.f32 %v3405, 0.0
  %v3448 = vmax.f32 %v3408, 0.0
  %v3449 = vmax.f32 %v3413, 0.0
  %v3450 = vmax.f32 %v3416, 0.0
  %v3451 = vmax.f32 %v3421, 0.0
  %v3452 = vmax.f32 %v3424, 0.0
  %v3453 = vmax.f32 %v3429, 0.0
  %v3454 = vmax.f32 %v3432, 0.0
  %v3455 = vmax.f32 %v3437, 0.0
  %v3456 = vmax.f32 %v3440, 0.0
  %v3457 = vadd.f32 %v3443, %v3444
  %v3458 = vadd.f32 %v3457, %v3445
  %v3459 = vadd.f32 %v3458, %v3446
  %v3460 = vadd.f32 %v3459, %v3447
  %v3461 = vadd.f32 %v3460, %v3448
  %v3462 = vadd.f32 %v3461, %v3449
  %v3463 = vadd.f32 %v3462, %v3450
  %v3464 = vadd.f32 %v3463, %v3451
  %v3465 = vadd.f32 %v3464, %v3452
  %v3466 = vadd.f32 %v3465, %v3453
  %v3467 = vadd.f32 %v3466, %v3454
  %v3468 = vadd.f32 %v3467, %v3455
  %v3469 = vadd.f32 %v3468, %v3456
  %v3470 = vrot.slane %v3469, 4
  %v3471 = vadd.f32 %v3469, %v3470
  %v3472 = vrot.slane %v3471, 2
  %v3473 = vadd.f32 %v3471, %v3472
  %v3474 = vrot.slane %v3473, 1
  %v3475 = vadd.f32 %v3473, %v3474
  %v3476 = vadd.f32 %v3475, 0.0
  %3477 = vmatprep.subr.bf16.mxu0 0
  %3478 = vmatpush1.bf16.msra.mxu0 %v3237
  %3479 = vmatprep.subr.bf16.mxu0 0
  %3480 = vmatpush1.bf16.msra.mxu0 %v3236
  %3481 = vmatprep.subr.bf16.mxu0 0
  %3482 = vmatpush1.bf16.msra.mxu0 %v3235
  %3483 = vmatprep.subr.bf16.mxu0 0
  %3484 = vmatpush1.bf16.msra.mxu0 %v3234
  %3485 = vmatprep.subr.bf16.mxu0 0
  %3486 = vmatpush1.bf16.msra.mxu0 %v3233
  %3487 = vmatprep.subr.bf16.mxu0 0
  %3488 = vmatpush1.bf16.msra.mxu0 %v3232
  %3489 = vmatprep.subr.bf16.mxu0 0
  %3490 = vmatpush1.bf16.msra.mxu0 %v3231
  %3491 = vmatprep.subr.bf16.mxu0 0
  %3492 = vmatpush1.bf16.msra.mxu0 %v3230
  %3493 = vmatprep.subr.bf16.mxu0 0
  %3494 = vmatpush2.bf16.msra.mxu0 0
  %3495 = vmatprep.subr.bf16.mxu0 0
  %3496 = vmatpush2.bf16.msra.mxu0 0
  %3497 = vmatprep.subr.bf16.mxu0 0
  %3498 = vmatpush2.bf16.msra.mxu0 %v3243
  %3499 = vmatprep.subr.bf16.mxu0 0
  %3500 = vmatpush2.bf16.msra.mxu0 %v3242
  %3501 = vmatprep.subr.bf16.mxu0 0
  %3502 = vmatpush2.bf16.msra.mxu0 %v3241
  %3503 = vmatprep.subr.bf16.mxu0 0
  %3504 = vmatpush2.bf16.msra.mxu0 %v3240
  %3505 = vmatprep.subr.bf16.mxu0 0
  %3506 = vmatpush2.bf16.msra.mxu0 %v3239
  %3507 = vmatprep.subr.bf16.mxu0 0
  %3508 = vmatpush2.bf16.msra.mxu0 %v3238
  %3509 = vmatprep.mubr.bf16.mxu0 %v1263
  %3510 = vmatmul.mubr.bf16.gmra.mxu0 %v1241
  %v3511 = vpop.f32.mrf.mxu0
  %v3512 = vadd.f32 0.0, %v3511
  %v3513 = vpop.f32.mrf.mxu0
  %v3514 = vpop.f32.mrf.mxu0
  %v3515 = vadd.f32 0.0, %v3514
  %v3516 = vpop.f32.mrf.mxu0
  %3517 = vmatprep.mubr.bf16.mxu0 %v1266
  %3518 = vmatmul.mubr.bf16.gmra.mxu0 %v1243
  %v3519 = vpop.f32.mrf.mxu0
  %v3520 = vadd.f32 0.0, %v3519
  %v3521 = vpop.f32.mrf.mxu0
  %v3522 = vpop.f32.mrf.mxu0
  %v3523 = vadd.f32 0.0, %v3522
  %v3524 = vpop.f32.mrf.mxu0
  %3525 = vmatprep.mubr.bf16.mxu0 %v1269
  %3526 = vmatmul.mubr.bf16.gmra.mxu0 %v1245
  %v3527 = vpop.f32.mrf.mxu0
  %v3528 = vadd.f32 0.0, %v3527
  %v3529 = vpop.f32.mrf.mxu0
  %v3530 = vpop.f32.mrf.mxu0
  %v3531 = vadd.f32 0.0, %v3530
  %v3532 = vpop.f32.mrf.mxu0
  %3533 = vmatprep.mubr.bf16.mxu0 %v1272
  %3534 = vmatmul.mubr.bf16.gmra.mxu0 %v1247
  %v3535 = vpop.f32.mrf.mxu0
  %v3536 = vadd.f32 0.0, %v3535
  %v3537 = vpop.f32.mrf.mxu0
  %v3538 = vpop.f32.mrf.mxu0
  %v3539 = vadd.f32 0.0, %v3538
  %v3540 = vpop.f32.mrf.mxu0
  %3541 = vmatprep.mubr.bf16.mxu0 %v1275
  %3542 = vmatmul.mubr.bf16.gmra.mxu0 %v1249
  %v3543 = vpop.f32.mrf.mxu0
  %v3544 = vadd.f32 0.0, %v3543
  %v3545 = vpop.f32.mrf.mxu0
  %v3546 = vpop.f32.mrf.mxu0
  %v3547 = vadd.f32 0.0, %v3546
  %v3548 = vpop.f32.mrf.mxu0
  %3549 = vmatprep.mubr.bf16.mxu0 %v1278
  %3550 = vmatmul.mubr.bf16.gmra.mxu0 %v1251
  %v3551 = vpop.f32.mrf.mxu0
  %v3552 = vadd.f32 0.0, %v3551
  %v3553 = vpop.f32.mrf.mxu0
  %v3554 = vpop.f32.mrf.mxu0
  %v3555 = vadd.f32 0.0, %v3554
  %v3556 = vpop.f32.mrf.mxu0
  %3557 = vmatprep.mubr.bf16.mxu0 %v1281
  %3558 = vmatmul.mubr.bf16.gmra.mxu0 %v1253
  %v3559 = vpop.f32.mrf.mxu0
  %v3560 = vadd.f32 0.0, %v3559
  %v3561 = vpop.f32.mrf.mxu0
  %v3562 = vpop.f32.mrf.mxu0
  %v3563 = vadd.f32 0.0, %v3562
  %v3564 = vpop.f32.mrf.mxu0
  %3565 = vdwg.mxu0
  %v3566 = vpack.c.bf16 %v3515, %v3512
  %v3567 = vpack.c.bf16 %v3523, %v3520
  %v3568 = vpack.c.bf16 %v3531, %v3528
  %v3569 = vpack.c.bf16 %v3539, %v3536
  %v3570 = vpack.c.bf16 %v3547, %v3544
  %v3571 = vpack.c.bf16 %v3555, %v3552
  %v3572 = vpack.c.bf16 %v3563, %v3560
  %3573 = vmatprep.subr.bf16.mxu0 0
  %3574 = vmatpush1.bf16.msra.mxu0 %v1424
  %3575 = vmatprep.subr.bf16.mxu0 0
  %3576 = vmatpush1.bf16.msra.mxu0 %v1423
  %3577 = vmatprep.subr.bf16.mxu0 0
  %3578 = vmatpush1.bf16.msra.mxu0 %v1422
  %3579 = vmatprep.subr.bf16.mxu0 0
  %3580 = vmatpush1.bf16.msra.mxu0 %v1421
  %3581 = vmatprep.subr.bf16.mxu0 0
  %3582 = vmatpush1.bf16.msra.mxu0 %v1420
  %3583 = vmatprep.subr.bf16.mxu0 0
  %3584 = vmatpush1.bf16.msra.mxu0 %v1419
  %3585 = vmatprep.subr.bf16.mxu0 0
  %3586 = vmatpush1.bf16.msra.mxu0 %v1418
  %3587 = vmatprep.subr.bf16.mxu0 0
  %3588 = vmatpush1.bf16.msra.mxu0 %v1417
  %3589 = vmatprep.subr.bf16.mxu0 0
  %3590 = vmatpush2.bf16.msra.mxu0 0
  %3591 = vmatprep.subr.bf16.mxu0 0
  %3592 = vmatpush2.bf16.msra.mxu0 0
  %3593 = vmatprep.subr.bf16.mxu0 0
  %3594 = vmatpush2.bf16.msra.mxu0 0
  %3595 = vmatprep.subr.bf16.mxu0 0
  %3596 = vmatpush2.bf16.msra.mxu0 0
  %3597 = vmatprep.subr.bf16.mxu0 0
  %3598 = vmatpush2.bf16.msra.mxu0 0
  %3599 = vmatprep.subr.bf16.mxu0 0
  %3600 = vmatpush2.bf16.msra.mxu0 0
  %3601 = vmatprep.subr.bf16.mxu0 0
  %3602 = vmatpush2.bf16.msra.mxu0 0
  %3603 = vmatprep.subr.bf16.mxu0 0
  %3604 = vmatpush2.bf16.msra.mxu0 0
  %3605 = vmatprep.mubr.bf16.mxu0 0
  %3606 = vmatmul.mubr.bf16.gmra.mxu0 %v3566
  %v3607 = vpop.f32.mrf.mxu0
  %v3608 = vadd.f32 %v1383, %v3607
  %v3609 = vpop.f32.mrf.mxu0
  %v3610 = vpop.f32.mrf.mxu0
  %v3611 = vadd.f32 %v1383, %v3610
  %v3612 = vpop.f32.mrf.mxu0
  %3613 = vmatprep.mubr.bf16.mxu0 0
  %3614 = vmatmul.mubr.bf16.gmra.mxu0 %v3567
  %v3615 = vpop.f32.mrf.mxu0
  %v3616 = vadd.f32 %v1383, %v3615
  %v3617 = vpop.f32.mrf.mxu0
  %v3618 = vpop.f32.mrf.mxu0
  %v3619 = vadd.f32 %v1383, %v3618
  %v3620 = vpop.f32.mrf.mxu0
  %3621 = vmatprep.mubr.bf16.mxu0 0
  %3622 = vmatmul.mubr.bf16.gmra.mxu0 %v3568
  %v3623 = vpop.f32.mrf.mxu0
  %v3624 = vadd.f32 %v1383, %v3623
  %v3625 = vpop.f32.mrf.mxu0
  %v3626 = vpop.f32.mrf.mxu0
  %v3627 = vadd.f32 %v1383, %v3626
  %v3628 = vpop.f32.mrf.mxu0
  %3629 = vmatprep.mubr.bf16.mxu0 0
  %3630 = vmatmul.mubr.bf16.gmra.mxu0 %v3569
  %v3631 = vpop.f32.mrf.mxu0
  %v3632 = vadd.f32 %v1383, %v3631
  %v3633 = vpop.f32.mrf.mxu0
  %v3634 = vpop.f32.mrf.mxu0
  %v3635 = vadd.f32 %v1383, %v3634
  %v3636 = vpop.f32.mrf.mxu0
  %3637 = vmatprep.mubr.bf16.mxu0 0
  %3638 = vmatmul.mubr.bf16.gmra.mxu0 %v3570
  %v3639 = vpop.f32.mrf.mxu0
  %v3640 = vadd.f32 %v1383, %v3639
  %v3641 = vpop.f32.mrf.mxu0
  %v3642 = vpop.f32.mrf.mxu0
  %v3643 = vadd.f32 %v1383, %v3642
  %v3644 = vpop.f32.mrf.mxu0
  %3645 = vmatprep.mubr.bf16.mxu0 0
  %3646 = vmatmul.mubr.bf16.gmra.mxu0 %v3571
  %v3647 = vpop.f32.mrf.mxu0
  %v3648 = vadd.f32 %v1383, %v3647
  %v3649 = vpop.f32.mrf.mxu0
  %v3650 = vpop.f32.mrf.mxu0
  %v3651 = vadd.f32 %v1383, %v3650
  %v3652 = vpop.f32.mrf.mxu0
  %3653 = vmatprep.mubr.bf16.mxu0 0
  %3654 = vmatmul.mubr.bf16.gmra.mxu0 %v3572
  %v3655 = vpop.f32.mrf.mxu0
  %v3656 = vadd.f32 %v1383, %v3655
  %v3657 = vpop.f32.mrf.mxu0
  %v3658 = vpop.f32.mrf.mxu0
  %v3659 = vadd.f32 %v1383, %v3658
  %v3660 = vpop.f32.mrf.mxu0
  %3661 = vdwg.mxu0
  %v3662 = vmax.f32 %v3608, 0.0
  %v3663 = vmax.f32 %v3611, 0.0
  %v3664 = vmax.f32 %v3616, 0.0
  %v3665 = vmax.f32 %v3619, 0.0
  %v3666 = vmax.f32 %v3624, 0.0
  %v3667 = vmax.f32 %v3627, 0.0
  %v3668 = vmax.f32 %v3632, 0.0
  %v3669 = vmax.f32 %v3635, 0.0
  %v3670 = vmax.f32 %v3640, 0.0
  %v3671 = vmax.f32 %v3643, 0.0
  %v3672 = vmax.f32 %v3648, 0.0
  %v3673 = vmax.f32 %v3651, 0.0
  %v3674 = vmax.f32 %v3656, 0.0
  %v3675 = vmax.f32 %v3659, 0.0
  %v3676 = vadd.f32 %v3662, %v3663
  %v3677 = vadd.f32 %v3676, %v3664
  %v3678 = vadd.f32 %v3677, %v3665
  %v3679 = vadd.f32 %v3678, %v3666
  %v3680 = vadd.f32 %v3679, %v3667
  %v3681 = vadd.f32 %v3680, %v3668
  %v3682 = vadd.f32 %v3681, %v3669
  %v3683 = vadd.f32 %v3682, %v3670
  %v3684 = vadd.f32 %v3683, %v3671
  %v3685 = vadd.f32 %v3684, %v3672
  %v3686 = vadd.f32 %v3685, %v3673
  %v3687 = vadd.f32 %v3686, %v3674
  %v3688 = vadd.f32 %v3687, %v3675
  %v3689 = vrot.slane %v3688, 4
  %v3690 = vadd.f32 %v3688, %v3689
  %v3691 = vrot.slane %v3690, 2
  %v3692 = vadd.f32 %v3690, %v3691
  %v3693 = vrot.slane %v3692, 1
  %v3694 = vadd.f32 %v3692, %v3693
  %v3695 = vadd.f32 %v3476, %v3694
  %3696 = vmatprep.subr.bf16.mxu0 0
  %3697 = vmatpush1.bf16.msra.mxu0 %v3251
  %3698 = vmatprep.subr.bf16.mxu0 0
  %3699 = vmatpush1.bf16.msra.mxu0 %v3250
  %3700 = vmatprep.subr.bf16.mxu0 0
  %3701 = vmatpush1.bf16.msra.mxu0 %v3249
  %3702 = vmatprep.subr.bf16.mxu0 0
  %3703 = vmatpush1.bf16.msra.mxu0 %v3248
  %3704 = vmatprep.subr.bf16.mxu0 0
  %3705 = vmatpush1.bf16.msra.mxu0 %v3247
  %3706 = vmatprep.subr.bf16.mxu0 0
  %3707 = vmatpush1.bf16.msra.mxu0 %v3246
  %3708 = vmatprep.subr.bf16.mxu0 0
  %3709 = vmatpush1.bf16.msra.mxu0 %v3245
  %3710 = vmatprep.subr.bf16.mxu0 0
  %3711 = vmatpush1.bf16.msra.mxu0 %v3244
  %3712 = vmatprep.subr.bf16.mxu0 0
  %3713 = vmatpush2.bf16.msra.mxu0 0
  %3714 = vmatprep.subr.bf16.mxu0 0
  %3715 = vmatpush2.bf16.msra.mxu0 0
  %3716 = vmatprep.subr.bf16.mxu0 0
  %3717 = vmatpush2.bf16.msra.mxu0 %v3257
  %3718 = vmatprep.subr.bf16.mxu0 0
  %3719 = vmatpush2.bf16.msra.mxu0 %v3256
  %3720 = vmatprep.subr.bf16.mxu0 0
  %3721 = vmatpush2.bf16.msra.mxu0 %v3255
  %3722 = vmatprep.subr.bf16.mxu0 0
  %3723 = vmatpush2.bf16.msra.mxu0 %v3254
  %3724 = vmatprep.subr.bf16.mxu0 0
  %3725 = vmatpush2.bf16.msra.mxu0 %v3253
  %3726 = vmatprep.subr.bf16.mxu0 0
  %3727 = vmatpush2.bf16.msra.mxu0 %v3252
  %3728 = vmatprep.mubr.bf16.mxu0 %v1263
  %3729 = vmatmul.mubr.bf16.gmra.mxu0 %v1241
  %v3730 = vpop.f32.mrf.mxu0
  %v3731 = vadd.f32 0.0, %v3730
  %v3732 = vpop.f32.mrf.mxu0
  %v3733 = vpop.f32.mrf.mxu0
  %v3734 = vadd.f32 0.0, %v3733
  %v3735 = vpop.f32.mrf.mxu0
  %3736 = vmatprep.mubr.bf16.mxu0 %v1266
  %3737 = vmatmul.mubr.bf16.gmra.mxu0 %v1243
  %v3738 = vpop.f32.mrf.mxu0
  %v3739 = vadd.f32 0.0, %v3738
  %v3740 = vpop.f32.mrf.mxu0
  %v3741 = vpop.f32.mrf.mxu0
  %v3742 = vadd.f32 0.0, %v3741
  %v3743 = vpop.f32.mrf.mxu0
  %3744 = vmatprep.mubr.bf16.mxu0 %v1269
  %3745 = vmatmul.mubr.bf16.gmra.mxu0 %v1245
  %v3746 = vpop.f32.mrf.mxu0
  %v3747 = vadd.f32 0.0, %v3746
  %v3748 = vpop.f32.mrf.mxu0
  %v3749 = vpop.f32.mrf.mxu0
  %v3750 = vadd.f32 0.0, %v3749
  %v3751 = vpop.f32.mrf.mxu0
  %3752 = vmatprep.mubr.bf16.mxu0 %v1272
  %3753 = vmatmul.mubr.bf16.gmra.mxu0 %v1247
  %v3754 = vpop.f32.mrf.mxu0
  %v3755 = vadd.f32 0.0, %v3754
  %v3756 = vpop.f32.mrf.mxu0
  %v3757 = vpop.f32.mrf.mxu0
  %v3758 = vadd.f32 0.0, %v3757
  %v3759 = vpop.f32.mrf.mxu0
  %3760 = vmatprep.mubr.bf16.mxu0 %v1275
  %3761 = vmatmul.mubr.bf16.gmra.mxu0 %v1249
  %v3762 = vpop.f32.mrf.mxu0
  %v3763 = vadd.f32 0.0, %v3762
  %v3764 = vpop.f32.mrf.mxu0
  %v3765 = vpop.f32.mrf.mxu0
  %v3766 = vadd.f32 0.0, %v3765
  %v3767 = vpop.f32.mrf.mxu0
  %3768 = vmatprep.mubr.bf16.mxu0 %v1278
  %3769 = vmatmul.mubr.bf16.gmra.mxu0 %v1251
  %v3770 = vpop.f32.mrf.mxu0
  %v3771 = vadd.f32 0.0, %v3770
  %v3772 = vpop.f32.mrf.mxu0
  %v3773 = vpop.f32.mrf.mxu0
  %v3774 = vadd.f32 0.0, %v3773
  %v3775 = vpop.f32.mrf.mxu0
  %3776 = vmatprep.mubr.bf16.mxu0 %v1281
  %3777 = vmatmul.mubr.bf16.gmra.mxu0 %v1253
  %v3778 = vpop.f32.mrf.mxu0
  %v3779 = vadd.f32 0.0, %v3778
  %v3780 = vpop.f32.mrf.mxu0
  %v3781 = vpop.f32.mrf.mxu0
  %v3782 = vadd.f32 0.0, %v3781
  %v3783 = vpop.f32.mrf.mxu0
  %3784 = vdwg.mxu0
  %v3785 = vpack.c.bf16 %v3734, %v3731
  %v3786 = vpack.c.bf16 %v3742, %v3739
  %v3787 = vpack.c.bf16 %v3750, %v3747
  %v3788 = vpack.c.bf16 %v3758, %v3755
  %v3789 = vpack.c.bf16 %v3766, %v3763
  %v3790 = vpack.c.bf16 %v3774, %v3771
  %v3791 = vpack.c.bf16 %v3782, %v3779
  %3792 = vmatprep.subr.bf16.mxu0 0
  %3793 = vmatpush1.bf16.msra.mxu0 %v1424
  %3794 = vmatprep.subr.bf16.mxu0 0
  %3795 = vmatpush1.bf16.msra.mxu0 %v1423
  %3796 = vmatprep.subr.bf16.mxu0 0
  %3797 = vmatpush1.bf16.msra.mxu0 %v1422
  %3798 = vmatprep.subr.bf16.mxu0 0
  %3799 = vmatpush1.bf16.msra.mxu0 %v1421
  %3800 = vmatprep.subr.bf16.mxu0 0
  %3801 = vmatpush1.bf16.msra.mxu0 %v1420
  %3802 = vmatprep.subr.bf16.mxu0 0
  %3803 = vmatpush1.bf16.msra.mxu0 %v1419
  %3804 = vmatprep.subr.bf16.mxu0 0
  %3805 = vmatpush1.bf16.msra.mxu0 %v1418
  %3806 = vmatprep.subr.bf16.mxu0 0
  %3807 = vmatpush1.bf16.msra.mxu0 %v1417
  %3808 = vmatprep.subr.bf16.mxu0 0
  %3809 = vmatpush2.bf16.msra.mxu0 0
  %3810 = vmatprep.subr.bf16.mxu0 0
  %3811 = vmatpush2.bf16.msra.mxu0 0
  %3812 = vmatprep.subr.bf16.mxu0 0
  %3813 = vmatpush2.bf16.msra.mxu0 0
  %3814 = vmatprep.subr.bf16.mxu0 0
  %3815 = vmatpush2.bf16.msra.mxu0 0
  %3816 = vmatprep.subr.bf16.mxu0 0
  %3817 = vmatpush2.bf16.msra.mxu0 0
  %3818 = vmatprep.subr.bf16.mxu0 0
  %3819 = vmatpush2.bf16.msra.mxu0 0
  %3820 = vmatprep.subr.bf16.mxu0 0
  %3821 = vmatpush2.bf16.msra.mxu0 0
  %3822 = vmatprep.subr.bf16.mxu0 0
  %3823 = vmatpush2.bf16.msra.mxu0 0
  %3824 = vmatprep.mubr.bf16.mxu0 0
  %3825 = vmatmul.mubr.bf16.gmra.mxu0 %v3785
  %v3826 = vpop.f32.mrf.mxu0
  %v3827 = vadd.f32 %v1383, %v3826
  %v3828 = vpop.f32.mrf.mxu0
  %v3829 = vpop.f32.mrf.mxu0
  %v3830 = vadd.f32 %v1383, %v3829
  %v3831 = vpop.f32.mrf.mxu0
  %3832 = vmatprep.mubr.bf16.mxu0 0
  %3833 = vmatmul.mubr.bf16.gmra.mxu0 %v3786
  %v3834 = vpop.f32.mrf.mxu0
  %v3835 = vadd.f32 %v1383, %v3834
  %v3836 = vpop.f32.mrf.mxu0
  %v3837 = vpop.f32.mrf.mxu0
  %v3838 = vadd.f32 %v1383, %v3837
  %v3839 = vpop.f32.mrf.mxu0
  %3840 = vmatprep.mubr.bf16.mxu0 0
  %3841 = vmatmul.mubr.bf16.gmra.mxu0 %v3787
  %v3842 = vpop.f32.mrf.mxu0
  %v3843 = vadd.f32 %v1383, %v3842
  %v3844 = vpop.f32.mrf.mxu0
  %v3845 = vpop.f32.mrf.mxu0
  %v3846 = vadd.f32 %v1383, %v3845
  %v3847 = vpop.f32.mrf.mxu0
  %3848 = vmatprep.mubr.bf16.mxu0 0
  %3849 = vmatmul.mubr.bf16.gmra.mxu0 %v3788
  %v3850 = vpop.f32.mrf.mxu0
  %v3851 = vadd.f32 %v1383, %v3850
  %v3852 = vpop.f32.mrf.mxu0
  %v3853 = vpop.f32.mrf.mxu0
  %v3854 = vadd.f32 %v1383, %v3853
  %v3855 = vpop.f32.mrf.mxu0
  %3856 = vmatprep.mubr.bf16.mxu0 0
  %3857 = vmatmul.mubr.bf16.gmra.mxu0 %v3789
  %v3858 = vpop.f32.mrf.mxu0
  %v3859 = vadd.f32 %v1383, %v3858
  %v3860 = vpop.f32.mrf.mxu0
  %v3861 = vpop.f32.mrf.mxu0
  %v3862 = vadd.f32 %v1383, %v3861
  %v3863 = vpop.f32.mrf.mxu0
  %3864 = vmatprep.mubr.bf16.mxu0 0
  %3865 = vmatmul.mubr.bf16.gmra.mxu0 %v3790
  %v3866 = vpop.f32.mrf.mxu0
  %v3867 = vadd.f32 %v1383, %v3866
  %v3868 = vpop.f32.mrf.mxu0
  %v3869 = vpop.f32.mrf.mxu0
  %v3870 = vadd.f32 %v1383, %v3869
  %v3871 = vpop.f32.mrf.mxu0
  %3872 = vmatprep.mubr.bf16.mxu0 0
  %3873 = vmatmul.mubr.bf16.gmra.mxu0 %v3791
  %v3874 = vpop.f32.mrf.mxu0
  %v3875 = vadd.f32 %v1383, %v3874
  %v3876 = vpop.f32.mrf.mxu0
  %v3877 = vpop.f32.mrf.mxu0
  %v3878 = vadd.f32 %v1383, %v3877
  %v3879 = vpop.f32.mrf.mxu0
  %3880 = vdwg.mxu0
  %v3881 = vmax.f32 %v3827, 0.0
  %v3882 = vmax.f32 %v3830, 0.0
  %v3883 = vmax.f32 %v3835, 0.0
  %v3884 = vmax.f32 %v3838, 0.0
  %v3885 = vmax.f32 %v3843, 0.0
  %v3886 = vmax.f32 %v3846, 0.0
  %v3887 = vmax.f32 %v3851, 0.0
  %v3888 = vmax.f32 %v3854, 0.0
  %v3889 = vmax.f32 %v3859, 0.0
  %v3890 = vmax.f32 %v3862, 0.0
  %v3891 = vmax.f32 %v3867, 0.0
  %v3892 = vmax.f32 %v3870, 0.0
  %v3893 = vmax.f32 %v3875, 0.0
  %v3894 = vmax.f32 %v3878, 0.0
  %v3895 = vadd.f32 %v3881, %v3882
  %v3896 = vadd.f32 %v3895, %v3883
  %v3897 = vadd.f32 %v3896, %v3884
  %v3898 = vadd.f32 %v3897, %v3885
  %v3899 = vadd.f32 %v3898, %v3886
  %v3900 = vadd.f32 %v3899, %v3887
  %v3901 = vadd.f32 %v3900, %v3888
  %v3902 = vadd.f32 %v3901, %v3889
  %v3903 = vadd.f32 %v3902, %v3890
  %v3904 = vadd.f32 %v3903, %v3891
  %v3905 = vadd.f32 %v3904, %v3892
  %v3906 = vadd.f32 %v3905, %v3893
  %v3907 = vadd.f32 %v3906, %v3894
  %v3908 = vrot.slane %v3907, 4
  %v3909 = vadd.f32 %v3907, %v3908
  %v3910 = vrot.slane %v3909, 2
  %v3911 = vadd.f32 %v3909, %v3910
  %v3912 = vrot.slane %v3911, 1
  %v3913 = vadd.f32 %v3911, %v3912
  %v3914 = vadd.f32 %v3695, %v3913
  %v3915 = vmul.f32 %v3914, 0.0029761905
  %v3916 = vpack.c.bf16 %v3915, %v3915
  %3917 = vmatprep.subr.bf16.mxu0 %v2121
  %3918 = vmatpush1.bf16.msra.mxu0 %v2120
  %3919 = vmatprep.subr.bf16.mxu0 %v2117
  %3920 = vmatpush1.bf16.msra.mxu0 %v2116
  %3921 = vmatprep.subr.bf16.mxu0 %v2113
  %3922 = vmatpush1.bf16.msra.mxu0 %v2112
  %3923 = vmatprep.subr.bf16.mxu0 %v2109
  %3924 = vmatpush1.bf16.msra.mxu0 %v2108
  %3925 = vmatprep.subr.bf16.mxu0 %v2105
  %3926 = vmatpush1.bf16.msra.mxu0 %v2104
  %3927 = vmatprep.subr.bf16.mxu0 %v2101
  %3928 = vmatpush1.bf16.msra.mxu0 %v2100
  %3929 = vmatprep.subr.bf16.mxu0 %v2097
  %3930 = vmatpush1.bf16.msra.mxu0 %v2096
  %3931 = vmatprep.subr.bf16.mxu0 %v2093
  %3932 = vmatpush1.bf16.msra.mxu0 %v2092
  %3933 = vmatprep.subr.bf16.mxu0 0
  %3934 = vmatpush2.bf16.msra.mxu0 0
  %3935 = vmatprep.subr.bf16.mxu0 0
  %3936 = vmatpush2.bf16.msra.mxu0 0
  %3937 = vmatprep.subr.bf16.mxu0 0
  %3938 = vmatpush2.bf16.msra.mxu0 0
  %3939 = vmatprep.subr.bf16.mxu0 0
  %3940 = vmatpush2.bf16.msra.mxu0 0
  %3941 = vmatprep.subr.bf16.mxu0 0
  %3942 = vmatpush2.bf16.msra.mxu0 0
  %3943 = vmatprep.subr.bf16.mxu0 0
  %3944 = vmatpush2.bf16.msra.mxu0 0
  %3945 = vmatprep.subr.bf16.mxu0 0
  %3946 = vmatpush2.bf16.msra.mxu0 0
  %3947 = vmatprep.subr.bf16.mxu0 0
  %3948 = vmatpush2.bf16.msra.mxu0 0
  %3949 = vmatprep.mubr.bf16.mxu0 0
  %3950 = vmatmul.mubr.bf16.gmra.mxu0 %v3916
  %v3951 = vpop.f32.mrf.mxu0
  %v3952 = vadd.f32 0.0, %v3951
  %v3953 = vpop.f32.mrf.mxu0
  %v3954 = vadd.f32 0.0, %v3953
  %v3955 = vpop.f32.mrf.mxu0
  %v3956 = vpop.f32.mrf.mxu0
  %3957 = vdwg.mxu0
  %3958 = vmatprep.subr.bf16.mxu0 %v2123
  %3959 = vmatpush1.bf16.msra.mxu0 %v2122
  %3960 = vmatprep.subr.bf16.mxu0 %v2119
  %3961 = vmatpush1.bf16.msra.mxu0 %v2118
  %3962 = vmatprep.subr.bf16.mxu0 %v2115
  %3963 = vmatpush1.bf16.msra.mxu0 %v2114
  %3964 = vmatprep.subr.bf16.mxu0 %v2111
  %3965 = vmatpush1.bf16.msra.mxu0 %v2110
  %3966 = vmatprep.subr.bf16.mxu0 %v2107
  %3967 = vmatpush1.bf16.msra.mxu0 %v2106
  %3968 = vmatprep.subr.bf16.mxu0 %v2103
  %3969 = vmatpush1.bf16.msra.mxu0 %v2102
  %3970 = vmatprep.subr.bf16.mxu0 %v2099
  %3971 = vmatpush1.bf16.msra.mxu0 %v2098
  %3972 = vmatprep.subr.bf16.mxu0 %v2095
  %3973 = vmatpush1.bf16.msra.mxu0 %v2094
  %3974 = vmatprep.subr.bf16.mxu0 0
  %3975 = vmatpush2.bf16.msra.mxu0 0
  %3976 = vmatprep.subr.bf16.mxu0 0
  %3977 = vmatpush2.bf16.msra.mxu0 0
  %3978 = vmatprep.subr.bf16.mxu0 0
  %3979 = vmatpush2.bf16.msra.mxu0 0
  %3980 = vmatprep.subr.bf16.mxu0 0
  %3981 = vmatpush2.bf16.msra.mxu0 0
  %3982 = vmatprep.subr.bf16.mxu0 0
  %3983 = vmatpush2.bf16.msra.mxu0 0
  %3984 = vmatprep.subr.bf16.mxu0 0
  %3985 = vmatpush2.bf16.msra.mxu0 0
  %3986 = vmatprep.subr.bf16.mxu0 0
  %3987 = vmatpush2.bf16.msra.mxu0 0
  %3988 = vmatprep.subr.bf16.mxu0 0
  %3989 = vmatpush2.bf16.msra.mxu0 0
  %3990 = vmatprep.mubr.bf16.mxu0 0
  %3991 = vmatmul.mubr.bf16.gmra.mxu0 %v3916
  %v3992 = vpop.f32.mrf.mxu0
  %v3993 = vadd.f32 0.0, %v3992
  %v3994 = vpop.f32.mrf.mxu0
  %v3995 = vadd.f32 0.0, %v3994
  %v3996 = vpop.f32.mrf.mxu0
  %v3997 = vpop.f32.mrf.mxu0
  %3998 = vdwg.mxu0
  %v3999 = vmul.f32 %v3952, %v3952
  %v4000 = vmul.f32 %v3954, %v3954
  %v4001 = vmul.f32 %v3993, %v3993
  %v4002 = vmul.f32 %v3995, %v3995
  %v4003 = vsel %vm2242, %v3999, 0.0
  %v4004 = vsel %vm2242, %v4000, 0.0
  %v4005 = vadd.f32 %v4003, %v4004
  %v4006 = vsel %vm2242, %v4001, 0.0
  %v4007 = vadd.f32 %v4005, %v4006
  %v4008 = vsel %vm2242, %v4002, 0.0
  %v4009 = vadd.f32 %v4007, %v4008
  %4010 = vadd.xlane.f32.xlu0 %v4009
  %v4011 = vpop.xlane.xlu0 %4010
  %v4012 = vadd.f32 %v4011, 1e-12
  %v4013 = vrsqrt.pop %v4012
  %v4014 = vmul.f32 %v3952, %v4013
  %v4015 = vmul.f32 %v3954, %v4013
  %v4016 = vmul.f32 %v3993, %v4013
  %v4017 = vmul.f32 %v3995, %v4013
  %v4022 = vrot.slane %v4014, 7
  %v4023 = vrot.slane %v4015, 7
  %v4024 = vrot.slane %v4016, 7
  %v4025 = vrot.slane %v4017, 7
  %v4030 = vsel %vm2242, %v2254, %v4022
  %v4031 = vsel %vm2242, %v2255, %v4023
  %v4032 = vsel %vm2242, %v2256, %v4024
  %v4033 = vsel %vm2242, %v2257, %v4025
  %v4038 = vcombine.low %v4030, %v4031
  %v4039 = vcombine.low %v4032, %v4033
  %v4041 = vunpack.c.l.s4 1983009808
  %v4042 = vunpack.c.0.s8 %v4041
  %v4043 = vlaneseq
  %v4044 = vshrl.u32 %v4043, 7
  %v4045 = vsub.s32 %v4042, %v4044
  %v4046 = vrot.slane %v4038, %v4045
  %v4048 = vunpack.c.l.s4 1983009808
  %v4049 = vunpack.c.0.s8 %v4048
  %v4050 = vlaneseq
  %v4051 = vshrl.u32 %v4050, 7
  %v4052 = vsub.s32 %v4049, %v4051
  %v4053 = vrot.slane %v4039, %v4052
  %v4054 = vcombine.low %v4046, %v4053
  %4056 = vst [vmem:[%s6] sm:$0xff] %v4054
  // Predicated region
  $region26: #{id_loss.1} parent=0 // pred_check
    _
  $region27: #{id_loss.1} parent=0 // pred_check_branch
    %4058 = sbr.rel (0) target = $region29
  $region28: #{id_loss.1} parent=0 // pred_region
    _
  $region29: #{id_loss.1} parent=0 // pred_fallthru
    _
  // Predicated region
  $region30: #{id_loss.1} parent=0 // pred_check
    _
  $region31: #{id_loss.1} parent=0 // pred_check_branch
    %4060 = sbr.rel (0) target = $region33
  $region32: #{id_loss.1} parent=0 // pred_region
    _
  $region33: #{id_loss.1} parent=0 // pred_fallthru
    _

</llo_original>
